<compile_context>
chip_gen: v6e
topology: v6e:2x2x1
jax: 0.10.0
libtpu: 0.0.40
codegen_flags: <defaults>
</compile_context>

<pallas_src>
import math
from functools import partial

import jax
import jax.numpy as jnp
from jax.experimental import pallas as pl
from jax.experimental.pallas import tpu as pltpu

CODE_SIZE = 20
IN_DIM = 784
HID_DIM = 400
OUT_DIM = 2 * 784          # fc4 is re-declared as Linear(400, 2*784) in __init__

LANE = 128
SUBLANE = 8


def _round_up(x, m):
    return (x + m - 1) // m * m


# Lane-padded hidden/code dims (zero padding is exact: padded weight rows/cols,
# bias entries and eps entries are zero, and w3's padded rows are zero, so the
# padded z lanes never reach the decoder output).
HID_PAD = _round_up(HID_DIM, LANE)      # 512
CODE_PAD = _round_up(CODE_SIZE, LANE)   # 128


# --------------------------------------------------------------------------- #
# Kernel
# --------------------------------------------------------------------------- #
def rvae_kernel(x_ref, eps_ref,
                w1_ref, b1_ref,
                w2_ref, b2_ref,      # fused fc21|fc22: (HID_PAD, 2*CODE_PAD)
                w3_ref, b3_ref,
                w4_ref, b4_ref,
                out_ref, muvar_ref):
    wdt = w1_ref.dtype  # bf16 (or f32) matmul-input dtype; accumulation is f32

    # encode: 784 -> 512.  x streams in as f32 and is cast on the VPU so the
    # wrapper does not need a separate pad/cast pass over the input.
    h1 = jnp.dot(x_ref[...].astype(wdt), w1_ref[...],
                 preferred_element_type=jnp.float32) + b1_ref[...]
    h1 = jnp.maximum(h1, 0.0)

    # fused fc21 / fc22: 512 -> 256  (mu in lanes [0,128), logvar in [128,256))
    muvar = jnp.dot(h1.astype(wdt), w2_ref[...],
                    preferred_element_type=jnp.float32) + b2_ref[...]
    mu = muvar[:, :CODE_PAD]
    logvar = muvar[:, CODE_PAD:]

    # reparameterize (eps ~ N(0,1) supplied from the host for determinism)
    z = mu + eps_ref[...] * jnp.exp(0.5 * logvar)

    # decode: 128 -> 512 -> 1568
    h3 = jnp.dot(z.astype(wdt), w3_ref[...],
                 preferred_element_type=jnp.float32) + b3_ref[...]
    h3 = jnp.maximum(h3, 0.0)

    logits = jnp.dot(h3.astype(wdt), w4_ref[...],
                     preferred_element_type=jnp.float32) + b4_ref[...]
    # sigmoid = 1 / (1 + exp(-x)); exp and reciprocal both go to the EUP slot.
    out_ref[...] = pl.reciprocal(1.0 + jnp.exp(-logits), approx=True)
    muvar_ref[...] = muvar


# --------------------------------------------------------------------------- #
# Parameter init / packing
# --------------------------------------------------------------------------- #
def init_linear(key, in_f, out_f):
    """PyTorch-style Linear init; returns W as (in, out), b as (1, out)."""
    kw, kb = jax.random.split(key)
    bound = 1.0 / math.sqrt(in_f)
    w = jax.random.uniform(kw, (in_f, out_f), jnp.float32, -bound, bound)
    b = jax.random.uniform(kb, (1, out_f), jnp.float32, -bound, bound)
    return w, b


def init_params(key):
    k1, k21, k22, k3, k4 = jax.random.split(key, 5)
    w1, b1 = init_linear(k1, IN_DIM, HID_DIM)
    w21, b21 = init_linear(k21, HID_DIM, CODE_SIZE)
    w22, b22 = init_linear(k22, HID_DIM, CODE_SIZE)
    w3, b3 = init_linear(k3, CODE_SIZE, HID_DIM)
    w4, b4 = init_linear(k4, HID_DIM, OUT_DIM)
    return (w1, b1, w21, b21, w22, b22, w3, b3, w4, b4)


def _pad2(a, rows, cols):
    return jnp.pad(a, ((0, rows - a.shape[0]), (0, cols - a.shape[1])))


def prepare_params(params, use_bf16=True):
    """Zero-pad hidden/code dims to lane multiples, fuse fc21/fc22, cast to bf16.

    Note: w1 keeps its 784 input rows (multiple of the bf16 sublane packing of
    16) and w4/b4 keep their 1568 output columns (full-dim block in the kernel),
    so neither the input nor the dominant output stream carries lane padding.
    """
    w1, b1, w21, b21, w22, b22, w3, b3, w4, b4 = params
    wdt = jnp.bfloat16 if use_bf16 else jnp.float32
    w2 = jnp.concatenate(
        [_pad2(w21, HID_DIM, CODE_PAD), _pad2(w22, HID_DIM, CODE_PAD)], axis=1)
    b2 = jnp.concatenate(
        [_pad2(b21, 1, CODE_PAD), _pad2(b22, 1, CODE_PAD)], axis=1)
    return (
        _pad2(w1, IN_DIM, HID_PAD).astype(wdt), _pad2(b1, 1, HID_PAD),
        _pad2(w2, HID_PAD, 2 * CODE_PAD).astype(wdt), b2,
        _pad2(w3, CODE_PAD, HID_PAD).astype(wdt), _pad2(b3, 1, HID_PAD),
        _pad2(w4, HID_PAD, OUT_DIM).astype(wdt), _pad2(b4, 1, OUT_DIM),
    )


def _choose_batch_tiling(b, tile_batch):
    """Pick (num_tiles, tile_rows, padded_batch) minimizing batch padding.

    Picks the tile *count* first (so awkward batch sizes don't pad up to a full
    tile), then forces >= 2 tiles when the batch allows so v7x's two
    TensorCores both receive work under dimension_semantics=("parallel",).
    """
    n_tiles = -(-b // tile_batch)
    if n_tiles == 1 and b >= 2 * SUBLANE:
        n_tiles = 2
    tb = _round_up(-(-b // n_tiles), SUBLANE)
    return n_tiles, tb, n_tiles * tb


# --------------------------------------------------------------------------- #
# Host wrapper
# --------------------------------------------------------------------------- #
@partial(jax.jit, static_argnames=("tile_batch",))
def rvae_forward(x_img, eps, packed_params, *, tile_batch=512):
    """x_img: (B, 1, 28, 28) f32.  eps: (B, CODE_SIZE) f32.
    packed_params: output of prepare_params(). Returns (mu_out, mu, logvar).

    tile_batch=512 fits comfortably under a 64 MiB VMEM limit on every
    generation (~26 MiB live); on v5e/v6e (128 MiB physical) tile_batch=1024
    is a valid choice for large batches.
    """
    b = x_img.shape[0]
    n_tiles, tb, b_pad = _choose_batch_tiling(b, tile_batch)

    # x.view(-1, 784): stays f32, no lane padding, no host-side cast.
    x = x_img.reshape(b, IN_DIM).astype(jnp.float32)
    if b_pad != b:
        x = jnp.pad(x, ((0, b_pad - b), (0, 0)))
    eps_p = jnp.pad(eps.astype(jnp.float32),
                    ((0, b_pad - b), (0, CODE_PAD - CODE_SIZE)))

    grid = (n_tiles,)

    # activations: tiled along batch; weights: constant block -> VMEM-resident.
    w_specs = [
        pl.BlockSpec((IN_DIM, HID_PAD), lambda i: (0, 0)),        # w1 (784, 512)
        pl.BlockSpec((1, HID_PAD), lambda i: (0, 0)),             # b1
        pl.BlockSpec((HID_PAD, 2 * CODE_PAD), lambda i: (0, 0)),  # w2 (fused)
        pl.BlockSpec((1, 2 * CODE_PAD), lambda i: (0, 0)),        # b2
        pl.BlockSpec((CODE_PAD, HID_PAD), lambda i: (0, 0)),      # w3
        pl.BlockSpec((1, HID_PAD), lambda i: (0, 0)),             # b3
        pl.BlockSpec((HID_PAD, OUT_DIM), lambda i: (0, 0)),       # w4 (512, 1568)
        pl.BlockSpec((1, OUT_DIM), lambda i: (0, 0)),             # b4
    ]
    in_specs = [
        pl.BlockSpec((tb, IN_DIM), lambda i: (i, 0)),             # x (full 784)
        pl.BlockSpec((tb, CODE_PAD), lambda i: (i, 0)),           # eps
    ] + w_specs
    out_specs = (
        pl.BlockSpec((tb, OUT_DIM), lambda i: (i, 0)),            # mu_out (1568)
        pl.BlockSpec((tb, 2 * CODE_PAD), lambda i: (i, 0)),       # mu|logvar slab
    )
    out_shape = (
        jax.ShapeDtypeStruct((b_pad, OUT_DIM), jnp.float32),
        jax.ShapeDtypeStruct((b_pad, 2 * CODE_PAD), jnp.float32),
    )

    w_bytes = sum(int(p.size) * p.dtype.itemsize for p in packed_params)
    act_bytes = (x.size * x.dtype.itemsize + eps_p.size * 4
                 + b_pad * (OUT_DIM + 2 * CODE_PAD) * 4)
    cost = pl.CostEstimate(
        flops=2 * b_pad * (IN_DIM * HID_PAD + HID_PAD * 2 * CODE_PAD
                           + CODE_PAD * HID_PAD + HID_PAD * OUT_DIM),
        transcendentals=b_pad * (CODE_PAD + 2 * OUT_DIM),
        bytes_accessed=int(w_bytes + act_bytes),
    )

    out_slab, muvar = pl.pallas_call(
        rvae_kernel,
        out_shape=out_shape,
        grid=grid,
        in_specs=in_specs,
        out_specs=out_specs,
        compiler_params=pltpu.CompilerParams(
            dimension_semantics=("parallel",),   # shard batch tiles over v7x TCs
            vmem_limit_bytes=64 << 20,           # ~26 MiB live at tb=512
        ),
        cost_estimate=cost,
    )(x, eps_p, *packed_params)

    # mu_out needs no lane slice (output is exactly 1568 wide); only trim the
    # (usually absent) batch padding.
    mu_out = out_slab if b_pad == b else out_slab[:b]
    mu = muvar[:b, :CODE_SIZE]
    logvar = muvar[:b, CODE_PAD:CODE_PAD + CODE_SIZE]
    return mu_out, mu, logvar


# --------------------------------------------------------------------------- #
# Pure-JAX reference (mirrors the kernel's bf16 matmul inputs / f32 accum)
# --------------------------------------------------------------------------- #
def rvae_forward_ref(x_img, eps, params, use_bf16=True):
    w1, b1, w21, b21, w22, b22, w3, b3, w4, b4 = params
    wdt = jnp.bfloat16 if use_bf16 else jnp.float32

    def dot(a, w):
        return jnp.dot(a.astype(wdt), w.astype(wdt),
                       preferred_element_type=jnp.float32)

    x = x_img.reshape(x_img.shape[0], IN_DIM)
    h1 = jnp.maximum(dot(x, w1) + b1, 0.0)
    mu = dot(h1, w21) + b21
    logvar = dot(h1, w22) + b22
    z = mu + eps * jnp.exp(0.5 * logvar)
    h3 = jnp.maximum(dot(z, w3) + b3, 0.0)
    mu_out = jax.nn.sigmoid(dot(h3, w4) + b4)
    return mu_out, mu, logvar


if __name__ == "__main__":
    key = jax.random.PRNGKey(0)
    k_params, k_x, k_eps = jax.random.split(key, 3)

    B = 8  # small demo batch
    params = init_params(k_params)
    packed = prepare_params(params, use_bf16=True)

    x_img = jax.random.uniform(k_x, (B, 1, 28, 28), jnp.float32)   # FMNIST-like NCHW
    # TODO(synk): torch.randn_like inside reparameterize has no in-kernel
    # equivalent here; eps is drawn on the host and passed in for determinism.
    eps = jax.random.normal(k_eps, (B, CODE_SIZE), jnp.float32)

    mu_out, mu, logvar = rvae_forward(x_img, eps, packed)
    jax.block_until_ready((mu_out, mu, logvar))

    # sanity check vs pure-JAX reference (bf16 matmuls, f32 accumulation)
    ref_mu_out, ref_mu, ref_logvar = rvae_forward_ref(x_img, eps, params)
    assert mu_out.shape == (B, OUT_DIM)
    assert mu.shape == (B, CODE_SIZE) and logvar.shape == (B, CODE_SIZE)
    assert jnp.allclose(mu_out, ref_mu_out, atol=1e-2), float(
        jnp.max(jnp.abs(mu_out - ref_mu_out)))
    assert jnp.allclose(mu, ref_mu, atol=1e-2), float(
        jnp.max(jnp.abs(mu - ref_mu)))
    assert jnp.allclose(logvar, ref_logvar, atol=1e-2), float(
        jnp.max(jnp.abs(logvar - ref_logvar)))

    print("KERNEL_OK")
</pallas_src>

<mosaic_0001>
module attributes {stable_mosaic.version = 11 : i64} {
  func.func @rvae_kernel(%arg0: i32, %arg1: memref<8x784xf32, #tpu.memory_space<vmem>>, %arg2: memref<8x128xf32, #tpu.memory_space<vmem>>, %arg3: memref<784x512xbf16, #tpu.memory_space<vmem>>, %arg4: memref<1x512xf32, #tpu.memory_space<vmem>>, %arg5: memref<512x256xbf16, #tpu.memory_space<vmem>>, %arg6: memref<1x256xf32, #tpu.memory_space<vmem>>, %arg7: memref<128x512xbf16, #tpu.memory_space<vmem>>, %arg8: memref<1x512xf32, #tpu.memory_space<vmem>>, %arg9: memref<512x1568xbf16, #tpu.memory_space<vmem>>, %arg10: memref<1x1568xf32, #tpu.memory_space<vmem>>, %arg11: memref<8x1568xf32, #tpu.memory_space<vmem>>, %arg12: memref<8x256xf32, #tpu.memory_space<vmem>>) attributes {dimension_semantics = [#tpu.dimension_semantics<parallel>], iteration_bounds = array<i64: 1>, scalar_prefetch = 0 : i64, scratch_operands = 0 : i64, tpu.core_type = #tpu.core_type<tc>, window_params = [{transform_indices = @transform_0, window_bounds = array<i64: 8, 784>}, {transform_indices = @transform_1, window_bounds = array<i64: 8, 128>}, {pipeline_mode = #tpu.pipeline_mode<synchronous>, transform_indices = @transform_2, window_bounds = array<i64: 784, 512>}, {pipeline_mode = #tpu.pipeline_mode<synchronous>, transform_indices = @transform_3, window_bounds = array<i64: 1, 512>}, {pipeline_mode = #tpu.pipeline_mode<synchronous>, transform_indices = @transform_4, window_bounds = array<i64: 512, 256>}, {pipeline_mode = #tpu.pipeline_mode<synchronous>, transform_indices = @transform_5, window_bounds = array<i64: 1, 256>}, {pipeline_mode = #tpu.pipeline_mode<synchronous>, transform_indices = @transform_6, window_bounds = array<i64: 128, 512>}, {pipeline_mode = #tpu.pipeline_mode<synchronous>, transform_indices = @transform_7, window_bounds = array<i64: 1, 512>}, {pipeline_mode = #tpu.pipeline_mode<synchronous>, transform_indices = @transform_8, window_bounds = array<i64: 512, 1568>}, {pipeline_mode = #tpu.pipeline_mode<synchronous>, transform_indices = @transform_9, window_bounds = array<i64: 1, 1568>}, {transform_indices = @transform_10, window_bounds = array<i64: 8, 1568>}, {transform_indices = @transform_11, window_bounds = array<i64: 8, 256>}]} {
    %c0 = arith.constant 0 : index
    %c0_0 = arith.constant 0 : index
    %0 = vector.load %arg1[%c0, %c0_0] : memref<8x784xf32, #tpu.memory_space<vmem>>, vector<8x784xf32>
    %1 = arith.truncf %0 : vector<8x784xf32> to vector<8x784xbf16>
    %c0_1 = arith.constant 0 : index
    %c0_2 = arith.constant 0 : index
    %2 = vector.load %arg3[%c0_1, %c0_2] : memref<784x512xbf16, #tpu.memory_space<vmem>>, vector<784x512xbf16>
    %cst = arith.constant dense<0.000000e+00> : vector<8x512xf32>
    %3 = tpu.matmul %1, %2, %cst {dimension_numbers = #tpu.dot_dimension_numbers<[1], [0], [0], [1], [0, 0, 1, 1], [], []>} : vector<8x784xbf16>, vector<784x512xbf16>, vector<8x512xf32> -> vector<8x512xf32>
    %c0_3 = arith.constant 0 : index
    %c0_4 = arith.constant 0 : index
    %4 = vector.load %arg4[%c0_3, %c0_4] : memref<1x512xf32, #tpu.memory_space<vmem>>, vector<1x512xf32>
    %5 = vector.broadcast %4 : vector<1x512xf32> to vector<8x512xf32>
    %6 = arith.addf %3, %5 : vector<8x512xf32>
    %cst_5 = arith.constant 0.000000e+00 : f32
    %7 = vector.broadcast %cst_5 : f32 to vector<8x512xf32>
    %8 = arith.maximumf %6, %7 : vector<8x512xf32>
    %9 = arith.truncf %8 : vector<8x512xf32> to vector<8x512xbf16>
    %c0_6 = arith.constant 0 : index
    %c0_7 = arith.constant 0 : index
    %10 = vector.load %arg5[%c0_6, %c0_7] : memref<512x256xbf16, #tpu.memory_space<vmem>>, vector<512x256xbf16>
    %cst_8 = arith.constant dense<0.000000e+00> : vector<8x256xf32>
    %11 = tpu.matmul %9, %10, %cst_8 {dimension_numbers = #tpu.dot_dimension_numbers<[1], [0], [0], [1], [0, 0, 1, 1], [], []>} : vector<8x512xbf16>, vector<512x256xbf16>, vector<8x256xf32> -> vector<8x256xf32>
    %c0_9 = arith.constant 0 : index
    %c0_10 = arith.constant 0 : index
    %12 = vector.load %arg6[%c0_9, %c0_10] : memref<1x256xf32, #tpu.memory_space<vmem>>, vector<1x256xf32>
    %13 = vector.broadcast %12 : vector<1x256xf32> to vector<8x256xf32>
    %14 = arith.addf %11, %13 : vector<8x256xf32>
    %15 = vector.extract_strided_slice %14 {offsets = [0, 0], sizes = [8, 128], strides = [1, 1]} : vector<8x256xf32> to vector<8x128xf32>
    %16 = vector.extract_strided_slice %14 {offsets = [0, 128], sizes = [8, 128], strides = [1, 1]} : vector<8x256xf32> to vector<8x128xf32>
    %c0_11 = arith.constant 0 : index
    %c0_12 = arith.constant 0 : index
    %17 = vector.load %arg2[%c0_11, %c0_12] : memref<8x128xf32, #tpu.memory_space<vmem>>, vector<8x128xf32>
    %cst_13 = arith.constant 5.000000e-01 : f32
    %18 = vector.broadcast %cst_13 : f32 to vector<8x128xf32>
    %19 = arith.mulf %18, %16 : vector<8x128xf32>
    %20 = math.exp %19 : vector<8x128xf32>
    %21 = arith.mulf %17, %20 : vector<8x128xf32>
    %22 = arith.addf %15, %21 : vector<8x128xf32>
    %23 = arith.truncf %22 : vector<8x128xf32> to vector<8x128xbf16>
    %c0_14 = arith.constant 0 : index
    %c0_15 = arith.constant 0 : index
    %24 = vector.load %arg7[%c0_14, %c0_15] : memref<128x512xbf16, #tpu.memory_space<vmem>>, vector<128x512xbf16>
    %cst_16 = arith.constant dense<0.000000e+00> : vector<8x512xf32>
    %25 = tpu.matmul %23, %24, %cst_16 {dimension_numbers = #tpu.dot_dimension_numbers<[1], [0], [0], [1], [0, 0, 1, 1], [], []>} : vector<8x128xbf16>, vector<128x512xbf16>, vector<8x512xf32> -> vector<8x512xf32>
    %c0_17 = arith.constant 0 : index
    %c0_18 = arith.constant 0 : index
    %26 = vector.load %arg8[%c0_17, %c0_18] : memref<1x512xf32, #tpu.memory_space<vmem>>, vector<1x512xf32>
    %27 = vector.broadcast %26 : vector<1x512xf32> to vector<8x512xf32>
    %28 = arith.addf %25, %27 : vector<8x512xf32>
    %cst_19 = arith.constant 0.000000e+00 : f32
    %29 = vector.broadcast %cst_19 : f32 to vector<8x512xf32>
    %30 = arith.maximumf %28, %29 : vector<8x512xf32>
    %31 = arith.truncf %30 : vector<8x512xf32> to vector<8x512xbf16>
    %c0_20 = arith.constant 0 : index
    %c0_21 = arith.constant 0 : index
    %32 = vector.load %arg9[%c0_20, %c0_21] : memref<512x1568xbf16, #tpu.memory_space<vmem>>, vector<512x1568xbf16>
    %cst_22 = arith.constant dense<0.000000e+00> : vector<8x1568xf32>
    %33 = tpu.matmul %31, %32, %cst_22 {dimension_numbers = #tpu.dot_dimension_numbers<[1], [0], [0], [1], [0, 0, 1, 1], [], []>} : vector<8x512xbf16>, vector<512x1568xbf16>, vector<8x1568xf32> -> vector<8x1568xf32>
    %c0_23 = arith.constant 0 : index
    %c0_24 = arith.constant 0 : index
    %34 = vector.load %arg10[%c0_23, %c0_24] : memref<1x1568xf32, #tpu.memory_space<vmem>>, vector<1x1568xf32>
    %35 = vector.broadcast %34 : vector<1x1568xf32> to vector<8x1568xf32>
    %36 = arith.addf %33, %35 : vector<8x1568xf32>
    %cst_25 = arith.constant 0.000000e+00 : f32
    %37 = vector.broadcast %cst_25 : f32 to vector<8x1568xf32>
    %38 = arith.subf %37, %36 : vector<8x1568xf32>
    %39 = math.exp %38 : vector<8x1568xf32>
    %cst_26 = arith.constant 1.000000e+00 : f32
    %40 = vector.broadcast %cst_26 : f32 to vector<8x1568xf32>
    %41 = arith.addf %40, %39 : vector<8x1568xf32>
    %42 = tpu.reciprocal %41 {approx = true} : vector<8x1568xf32> -> vector<8x1568xf32>
    %c0_27 = arith.constant 0 : index
    %c0_28 = arith.constant 0 : index
    %43 = vector.load %arg11[%c0_27, %c0_28] : memref<8x1568xf32, #tpu.memory_space<vmem>>, vector<8x1568xf32>
    tpu.vector_store %arg11[%c0_27, %c0_28], %42 {strides = array<i32>} : memref<8x1568xf32, #tpu.memory_space<vmem>>, vector<8x1568xf32>,
    %c0_29 = arith.constant 0 : index
    %c0_30 = arith.constant 0 : index
    %44 = vector.load %arg12[%c0_29, %c0_30] : memref<8x256xf32, #tpu.memory_space<vmem>>, vector<8x256xf32>
    tpu.vector_store %arg12[%c0_29, %c0_30], %14 {strides = array<i32>} : memref<8x256xf32, #tpu.memory_space<vmem>>, vector<8x256xf32>,
    return
  }
  func.func @transform_0(%arg0: i32) -> (i32, i32) {
    %c0_i32 = arith.constant 0 : i32
    %c0_i32_0 = arith.constant 0 : i32
    return %arg0, %c0_i32 : i32, i32
  }
  func.func @transform_1(%arg0: i32) -> (i32, i32) {
    %c0_i32 = arith.constant 0 : i32
    %c0_i32_0 = arith.constant 0 : i32
    return %arg0, %c0_i32 : i32, i32
  }
  func.func @transform_2(%arg0: i32) -> (i32, i32) {
    %c0_i32 = arith.constant 0 : i32
    %c0_i32_0 = arith.constant 0 : i32
    %c0_i32_1 = arith.constant 0 : i32
    return %c0_i32, %c0_i32_0 : i32, i32
  }
  func.func @transform_3(%arg0: i32) -> (i32, i32) {
    %c0_i32 = arith.constant 0 : i32
    %c0_i32_0 = arith.constant 0 : i32
    %c0_i32_1 = arith.constant 0 : i32
    return %c0_i32, %c0_i32_0 : i32, i32
  }
  func.func @transform_4(%arg0: i32) -> (i32, i32) {
    %c0_i32 = arith.constant 0 : i32
    %c0_i32_0 = arith.constant 0 : i32
    %c0_i32_1 = arith.constant 0 : i32
    return %c0_i32, %c0_i32_0 : i32, i32
  }
  func.func @transform_5(%arg0: i32) -> (i32, i32) {
    %c0_i32 = arith.constant 0 : i32
    %c0_i32_0 = arith.constant 0 : i32
    %c0_i32_1 = arith.constant 0 : i32
    return %c0_i32, %c0_i32_0 : i32, i32
  }
  func.func @transform_6(%arg0: i32) -> (i32, i32) {
    %c0_i32 = arith.constant 0 : i32
    %c0_i32_0 = arith.constant 0 : i32
    %c0_i32_1 = arith.constant 0 : i32
    return %c0_i32, %c0_i32_0 : i32, i32
  }
  func.func @transform_7(%arg0: i32) -> (i32, i32) {
    %c0_i32 = arith.constant 0 : i32
    %c0_i32_0 = arith.constant 0 : i32
    %c0_i32_1 = arith.constant 0 : i32
    return %c0_i32, %c0_i32_0 : i32, i32
  }
  func.func @transform_8(%arg0: i32) -> (i32, i32) {
    %c0_i32 = arith.constant 0 : i32
    %c0_i32_0 = arith.constant 0 : i32
    %c0_i32_1 = arith.constant 0 : i32
    return %c0_i32, %c0_i32_0 : i32, i32
  }
  func.func @transform_9(%arg0: i32) -> (i32, i32) {
    %c0_i32 = arith.constant 0 : i32
    %c0_i32_0 = arith.constant 0 : i32
    %c0_i32_1 = arith.constant 0 : i32
    return %c0_i32, %c0_i32_0 : i32, i32
  }
  func.func @transform_10(%arg0: i32) -> (i32, i32) {
    %c0_i32 = arith.constant 0 : i32
    %c0_i32_0 = arith.constant 0 : i32
    return %arg0, %c0_i32 : i32, i32
  }
  func.func @transform_11(%arg0: i32) -> (i32, i32) {
    %c0_i32 = arith.constant 0 : i32
    %c0_i32_0 = arith.constant 0 : i32
    return %arg0, %c0_i32 : i32, i32
  }
}

</mosaic_0001>

<llo_original>
// kernel: rvae_forward.1
$region0: #{rvae_forward.1}
  #allocation0 [shape = 'u32[]', space=smem, size = 0x4, offset = 0x4, fixed_abs, tag = 'smem constant byte address 0x4 - core index']
  #allocation1 [shape = 'u32[144,128]{1,0:T(1,128)}', space=vmem, size = 0x12000, scoped, tag = 'internal scratch']
  %s0 = inlined_call_operand.vmem [shape: f32[8,784], index: 0, kind: input, shape index: {}]
  %s1 = inlined_call_operand.vmem [shape: f32[8,128], index: 1, kind: input, shape index: {}]
  %s2 = inlined_call_operand.vmem [shape: bf16[784,512], index: 2, kind: input, shape index: {}]
  %s3 = inlined_call_operand.vmem [shape: f32[1,512], index: 3, kind: input, shape index: {}]
  %s4 = inlined_call_operand.vmem [shape: bf16[512,256], index: 4, kind: input, shape index: {}]
  %s5 = inlined_call_operand.vmem [shape: f32[1,256], index: 5, kind: input, shape index: {}]
  %s6 = inlined_call_operand.vmem [shape: bf16[128,512], index: 6, kind: input, shape index: {}]
  %s7 = inlined_call_operand.vmem [shape: f32[1,512], index: 7, kind: input, shape index: {}]
  %s8 = inlined_call_operand.vmem [shape: bf16[512,1568], index: 8, kind: input, shape index: {}]
  %s9 = inlined_call_operand.vmem [shape: f32[1,1568], index: 9, kind: input, shape index: {}]
  %s10 = inlined_call_operand.hbm [shape: f32[8,1568], index: 10, kind: output, shape index: {0}]
  %s11 = inlined_call_operand.vmem [shape: f32[8,256], index: 11, kind: output, shape index: {1}]
  %12 = xla_tuple %s10, %s11
  %s13 = sld [smem:[#allocation0]]
  $region58: #{rvae_forward.1} parent=0
    _
  %s15 = ssub.s32 1, %s13
  %s16 = scalar_select 0, %s15, %s13
  $region1: #{rvae_forward.1} parent=0
    #allocation2 [shape = 'u8[53248]{0}', space=vmem, size = 0xd000, scoped, tag = 'output window, operand 0, single buffered']
    #allocation3 [shape = 's32[1]{0}', space=sflag, size = 0x4, scoped, tag = 'scoped memory for rvae_forward.1']
    %17 = vsyncpa [#allocation3], 0
    // Predicated region
    $region2: #{rvae_forward.1} parent=1 // pred_check
      _
    $region3: #{rvae_forward.1} parent=1 // pred_check_branch
      %19 = sbr.rel (0) target = $region5
    $region4: #{rvae_forward.1} parent=1 // pred_region
      _
    $region5: #{rvae_forward.1} parent=1 // pred_fallthru
      _
    // Predicated region
    $region6: #{rvae_forward.1} parent=1 // pred_check
      _
    $region7: #{rvae_forward.1} parent=1 // pred_check_branch
      %21 = sbr.rel (0) target = $region9
    $region8: #{rvae_forward.1} parent=1 // pred_region
      _
    $region9: #{rvae_forward.1} parent=1 // pred_fallthru
      _
    // Predicated region
    $region10: #{rvae_forward.1} parent=1 // pred_check
      _
    $region11: #{rvae_forward.1} parent=1 // pred_check_branch
      %23 = sbr.rel (0) target = $region13
    $region12: #{rvae_forward.1} parent=1 // pred_region
      _
    $region13: #{rvae_forward.1} parent=1 // pred_fallthru
      _
    // Predicated region
    $region14: #{rvae_forward.1} parent=1 // pred_check
      _
    $region15: #{rvae_forward.1} parent=1 // pred_check_branch
      %25 = sbr.rel (0) target = $region17
    $region16: #{rvae_forward.1} parent=1 // pred_region
      _
    $region17: #{rvae_forward.1} parent=1 // pred_fallthru
      _
    // Predicated region
    $region18: #{rvae_forward.1} parent=1 // pred_check
      _
    $region19: #{rvae_forward.1} parent=1 // pred_check_branch
      %27 = sbr.rel (0) target = $region21
    $region20: #{rvae_forward.1} parent=1 // pred_region
      _
    $region21: #{rvae_forward.1} parent=1 // pred_fallthru
      _
    // Predicated region
    $region22: #{rvae_forward.1} parent=1 // pred_check
      _
    $region23: #{rvae_forward.1} parent=1 // pred_check_branch
      %29 = sbr.rel (0) target = $region25
    $region24: #{rvae_forward.1} parent=1 // pred_region
      _
    $region25: #{rvae_forward.1} parent=1 // pred_fallthru
      _
    // Predicated region
    $region26: #{rvae_forward.1} parent=1 // pred_check
      _
    $region27: #{rvae_forward.1} parent=1 // pred_check_branch
      %31 = sbr.rel (0) target = $region29
    $region28: #{rvae_forward.1} parent=1 // pred_region
      _
    $region29: #{rvae_forward.1} parent=1 // pred_fallthru
      _
    // Predicated region
    $region30: #{rvae_forward.1} parent=1 // pred_check
      _
    $region31: #{rvae_forward.1} parent=1 // pred_check_branch
      %33 = sbr.rel (0) target = $region33
    $region32: #{rvae_forward.1} parent=1 // pred_region
      _
    $region33: #{rvae_forward.1} parent=1 // pred_fallthru
      _
    // Predicated region
    $region34: #{rvae_forward.1} parent=1 // pred_check
      _
    $region35: #{rvae_forward.1} parent=1 // pred_check_branch
      %35 = sbr.rel (0) target = $region37
    $region36: #{rvae_forward.1} parent=1 // pred_region
      _
    $region37: #{rvae_forward.1} parent=1 // pred_fallthru
      _
    // Predicated region
    $region38: #{rvae_forward.1} parent=1 // pred_check
      _
    $region39: #{rvae_forward.1} parent=1 // pred_check_branch
      %37 = sbr.rel (0) target = $region41
    $region40: #{rvae_forward.1} parent=1 // pred_region
      _
    $region41: #{rvae_forward.1} parent=1 // pred_fallthru
      _
    %v39 = vld [vmem:[%s0] sm:$0xff]
    %v40 = vld [vmem:[%s0 + $0x8] sm:$0xff]
    %v41 = vld [vmem:[%s0 + $0x10] sm:$0xff]
    %v42 = vld [vmem:[%s0 + $0x18] sm:$0xff]
    %v43 = vld [vmem:[%s0 + $0x20] sm:$0xff]
    %v44 = vld [vmem:[%s0 + $0x28] sm:$0xff]
    %v45 = vld [vmem:[%s0 + $0x30] sm:$0xff]
    %v46 = vpack.c.bf16 %v39, %v39
    %v47 = vpack.c.bf16 %v40, %v40
    %v48 = vpack.c.bf16 %v41, %v41
    %v49 = vpack.c.bf16 %v42, %v42
    %v50 = vpack.c.bf16 %v43, %v43
    %v51 = vpack.c.bf16 %v44, %v44
    %v52 = vpack.c.bf16 %v45, %v45
    %v53 = vld [vmem:[%s2] sm:$0xff]
    %v54 = vld [vmem:[%s2 + $0x8] sm:$0xff]
    %v55 = vld [vmem:[%s2 + $0x10] sm:$0xff]
    %v56 = vld [vmem:[%s2 + $0x18] sm:$0xff]
    %v57 = vld [vmem:[%s2 + $0x20] sm:$0xff]
    %v58 = vld [vmem:[%s2 + $0x28] sm:$0xff]
    %v59 = vld [vmem:[%s2 + $0x30] sm:$0xff]
    %v60 = vld [vmem:[%s2 + $0x38] sm:$0xff]
    %v61 = vld [vmem:[%s2 + $0x40] sm:$0xff]
    %v62 = vld [vmem:[%s2 + $0x48] sm:$0xff]
    %v63 = vld [vmem:[%s2 + $0x50] sm:$0xff]
    %v64 = vld [vmem:[%s2 + $0x58] sm:$0xff]
    %v65 = vld [vmem:[%s2 + $0x60] sm:$0xff]
    %v66 = vld [vmem:[%s2 + $0x68] sm:$0xff]
    %v67 = vld [vmem:[%s2 + $0x70] sm:$0xff]
    %v68 = vld [vmem:[%s2 + $0x78] sm:$0xff]
    %v69 = vld [vmem:[%s2 + $0x80] sm:$0xff]
    %v70 = vld [vmem:[%s2 + $0x88] sm:$0xff]
    %v71 = vld [vmem:[%s2 + $0x90] sm:$0xff]
    %v72 = vld [vmem:[%s2 + $0x98] sm:$0xff]
    %v73 = vld [vmem:[%s2 + $0xa0] sm:$0xff]
    %v74 = vld [vmem:[%s2 + $0xa8] sm:$0xff]
    %v75 = vld [vmem:[%s2 + $0xb0] sm:$0xff]
    %v76 = vld [vmem:[%s2 + $0xb8] sm:$0xff]
    %v77 = vld [vmem:[%s2 + $0xc0] sm:$0xff]
    %v78 = vld [vmem:[%s2 + $0xc8] sm:$0xff]
    %v79 = vld [vmem:[%s2 + $0xd0] sm:$0xff]
    %v80 = vld [vmem:[%s2 + $0xd8] sm:$0xff]
    %v81 = vld [vmem:[%s2 + $0xe0] sm:$0xff]
    %v82 = vld [vmem:[%s2 + $0xe8] sm:$0xff]
    %v83 = vld [vmem:[%s2 + $0xf0] sm:$0xff]
    %v84 = vld [vmem:[%s2 + $0xf8] sm:$0xff]
    %v85 = vld [vmem:[%s2 + $0x100] sm:$0xff]
    %v86 = vld [vmem:[%s2 + $0x108] sm:$0xff]
    %v87 = vld [vmem:[%s2 + $0x110] sm:$0xff]
    %v88 = vld [vmem:[%s2 + $0x118] sm:$0xff]
    %v89 = vld [vmem:[%s2 + $0x120] sm:$0xff]
    %v90 = vld [vmem:[%s2 + $0x128] sm:$0xff]
    %v91 = vld [vmem:[%s2 + $0x130] sm:$0xff]
    %v92 = vld [vmem:[%s2 + $0x138] sm:$0xff]
    %v93 = vld [vmem:[%s2 + $0x140] sm:$0xff]
    %v94 = vld [vmem:[%s2 + $0x148] sm:$0xff]
    %v95 = vld [vmem:[%s2 + $0x150] sm:$0xff]
    %v96 = vld [vmem:[%s2 + $0x158] sm:$0xff]
    %v97 = vld [vmem:[%s2 + $0x160] sm:$0xff]
    %v98 = vld [vmem:[%s2 + $0x168] sm:$0xff]
    %v99 = vld [vmem:[%s2 + $0x170] sm:$0xff]
    %v100 = vld [vmem:[%s2 + $0x178] sm:$0xff]
    %v101 = vld [vmem:[%s2 + $0x180] sm:$0xff]
    %v102 = vld [vmem:[%s2 + $0x188] sm:$0xff]
    %v103 = vld [vmem:[%s2 + $0x190] sm:$0xff]
    %v104 = vld [vmem:[%s2 + $0x198] sm:$0xff]
    %v105 = vld [vmem:[%s2 + $0x1a0] sm:$0xff]
    %v106 = vld [vmem:[%s2 + $0x1a8] sm:$0xff]
    %v107 = vld [vmem:[%s2 + $0x1b0] sm:$0xff]
    %v108 = vld [vmem:[%s2 + $0x1b8] sm:$0xff]
    %v109 = vld [vmem:[%s2 + $0x1c0] sm:$0xff]
    %v110 = vld [vmem:[%s2 + $0x1c8] sm:$0xff]
    %v111 = vld [vmem:[%s2 + $0x1d0] sm:$0xff]
    %v112 = vld [vmem:[%s2 + $0x1d8] sm:$0xff]
    %v113 = vld [vmem:[%s2 + $0x1e0] sm:$0xff]
    %v114 = vld [vmem:[%s2 + $0x1e8] sm:$0xff]
    %v115 = vld [vmem:[%s2 + $0x1f0] sm:$0xff]
    %v116 = vld [vmem:[%s2 + $0x1f8] sm:$0xff]
    %v117 = vld [vmem:[%s2 + $0x200] sm:$0xff]
    %v118 = vld [vmem:[%s2 + $0x208] sm:$0xff]
    %v119 = vld [vmem:[%s2 + $0x210] sm:$0xff]
    %v120 = vld [vmem:[%s2 + $0x218] sm:$0xff]
    %v121 = vld [vmem:[%s2 + $0x220] sm:$0xff]
    %v122 = vld [vmem:[%s2 + $0x228] sm:$0xff]
    %v123 = vld [vmem:[%s2 + $0x230] sm:$0xff]
    %v124 = vld [vmem:[%s2 + $0x238] sm:$0xff]
    %v125 = vld [vmem:[%s2 + $0x240] sm:$0xff]
    %v126 = vld [vmem:[%s2 + $0x248] sm:$0xff]
    %v127 = vld [vmem:[%s2 + $0x250] sm:$0xff]
    %v128 = vld [vmem:[%s2 + $0x258] sm:$0xff]
    %v129 = vld [vmem:[%s2 + $0x260] sm:$0xff]
    %v130 = vld [vmem:[%s2 + $0x268] sm:$0xff]
    %v131 = vld [vmem:[%s2 + $0x270] sm:$0xff]
    %v132 = vld [vmem:[%s2 + $0x278] sm:$0xff]
    %v133 = vld [vmem:[%s2 + $0x280] sm:$0xff]
    %v134 = vld [vmem:[%s2 + $0x288] sm:$0xff]
    %v135 = vld [vmem:[%s2 + $0x290] sm:$0xff]
    %v136 = vld [vmem:[%s2 + $0x298] sm:$0xff]
    %v137 = vld [vmem:[%s2 + $0x2a0] sm:$0xff]
    %v138 = vld [vmem:[%s2 + $0x2a8] sm:$0xff]
    %v139 = vld [vmem:[%s2 + $0x2b0] sm:$0xff]
    %v140 = vld [vmem:[%s2 + $0x2b8] sm:$0xff]
    %v141 = vld [vmem:[%s2 + $0x2c0] sm:$0xff]
    %v142 = vld [vmem:[%s2 + $0x2c8] sm:$0xff]
    %v143 = vld [vmem:[%s2 + $0x2d0] sm:$0xff]
    %v144 = vld [vmem:[%s2 + $0x2d8] sm:$0xff]
    %v145 = vld [vmem:[%s2 + $0x2e0] sm:$0xff]
    %v146 = vld [vmem:[%s2 + $0x2e8] sm:$0xff]
    %v147 = vld [vmem:[%s2 + $0x2f0] sm:$0xff]
    %v148 = vld [vmem:[%s2 + $0x2f8] sm:$0xff]
    %v149 = vld [vmem:[%s2 + $0x300] sm:$0xff]
    %v150 = vld [vmem:[%s2 + $0x308] sm:$0xff]
    %v151 = vld [vmem:[%s2 + $0x310] sm:$0xff]
    %v152 = vld [vmem:[%s2 + $0x318] sm:$0xff]
    %v153 = vld [vmem:[%s2 + $0x320] sm:$0xff]
    %v154 = vld [vmem:[%s2 + $0x328] sm:$0xff]
    %v155 = vld [vmem:[%s2 + $0x330] sm:$0xff]
    %v156 = vld [vmem:[%s2 + $0x338] sm:$0xff]
    %v157 = vld [vmem:[%s2 + $0x340] sm:$0xff]
    %v158 = vld [vmem:[%s2 + $0x348] sm:$0xff]
    %v159 = vld [vmem:[%s2 + $0x350] sm:$0xff]
    %v160 = vld [vmem:[%s2 + $0x358] sm:$0xff]
    %v161 = vld [vmem:[%s2 + $0x360] sm:$0xff]
    %v162 = vld [vmem:[%s2 + $0x368] sm:$0xff]
    %v163 = vld [vmem:[%s2 + $0x370] sm:$0xff]
    %v164 = vld [vmem:[%s2 + $0x378] sm:$0xff]
    %v165 = vld [vmem:[%s2 + $0x380] sm:$0xff]
    %v166 = vld [vmem:[%s2 + $0x388] sm:$0xff]
    %v167 = vld [vmem:[%s2 + $0x390] sm:$0xff]
    %v168 = vld [vmem:[%s2 + $0x398] sm:$0xff]
    %v169 = vld [vmem:[%s2 + $0x3a0] sm:$0xff]
    %v170 = vld [vmem:[%s2 + $0x3a8] sm:$0xff]
    %v171 = vld [vmem:[%s2 + $0x3b0] sm:$0xff]
    %v172 = vld [vmem:[%s2 + $0x3b8] sm:$0xff]
    %v173 = vld [vmem:[%s2 + $0x3c0] sm:$0xff]
    %v174 = vld [vmem:[%s2 + $0x3c8] sm:$0xff]
    %v175 = vld [vmem:[%s2 + $0x3d0] sm:$0xff]
    %v176 = vld [vmem:[%s2 + $0x3d8] sm:$0xff]
    %v177 = vld [vmem:[%s2 + $0x3e0] sm:$0xff]
    %v178 = vld [vmem:[%s2 + $0x3e8] sm:$0xff]
    %v179 = vld [vmem:[%s2 + $0x3f0] sm:$0xff]
    %v180 = vld [vmem:[%s2 + $0x3f8] sm:$0xff]
    %v181 = vld [vmem:[%s2 + $0x400] sm:$0xff]
    %v182 = vld [vmem:[%s2 + $0x408] sm:$0xff]
    %v183 = vld [vmem:[%s2 + $0x410] sm:$0xff]
    %v184 = vld [vmem:[%s2 + $0x418] sm:$0xff]
    %v185 = vld [vmem:[%s2 + $0x420] sm:$0xff]
    %v186 = vld [vmem:[%s2 + $0x428] sm:$0xff]
    %v187 = vld [vmem:[%s2 + $0x430] sm:$0xff]
    %v188 = vld [vmem:[%s2 + $0x438] sm:$0xff]
    %v189 = vld [vmem:[%s2 + $0x440] sm:$0xff]
    %v190 = vld [vmem:[%s2 + $0x448] sm:$0xff]
    %v191 = vld [vmem:[%s2 + $0x450] sm:$0xff]
    %v192 = vld [vmem:[%s2 + $0x458] sm:$0xff]
    %v193 = vld [vmem:[%s2 + $0x460] sm:$0xff]
    %v194 = vld [vmem:[%s2 + $0x468] sm:$0xff]
    %v195 = vld [vmem:[%s2 + $0x470] sm:$0xff]
    %v196 = vld [vmem:[%s2 + $0x478] sm:$0xff]
    %v197 = vld [vmem:[%s2 + $0x480] sm:$0xff]
    %v198 = vld [vmem:[%s2 + $0x488] sm:$0xff]
    %v199 = vld [vmem:[%s2 + $0x490] sm:$0xff]
    %v200 = vld [vmem:[%s2 + $0x498] sm:$0xff]
    %v201 = vld [vmem:[%s2 + $0x4a0] sm:$0xff]
    %v202 = vld [vmem:[%s2 + $0x4a8] sm:$0xff]
    %v203 = vld [vmem:[%s2 + $0x4b0] sm:$0xff]
    %v204 = vld [vmem:[%s2 + $0x4b8] sm:$0xff]
    %v205 = vld [vmem:[%s2 + $0x4c0] sm:$0xff]
    %v206 = vld [vmem:[%s2 + $0x4c8] sm:$0xff]
    %v207 = vld [vmem:[%s2 + $0x4d0] sm:$0xff]
    %v208 = vld [vmem:[%s2 + $0x4d8] sm:$0xff]
    %v209 = vld [vmem:[%s2 + $0x4e0] sm:$0xff]
    %v210 = vld [vmem:[%s2 + $0x4e8] sm:$0xff]
    %v211 = vld [vmem:[%s2 + $0x4f0] sm:$0xff]
    %v212 = vld [vmem:[%s2 + $0x4f8] sm:$0xff]
    %v213 = vld [vmem:[%s2 + $0x500] sm:$0xff]
    %v214 = vld [vmem:[%s2 + $0x508] sm:$0xff]
    %v215 = vld [vmem:[%s2 + $0x510] sm:$0xff]
    %v216 = vld [vmem:[%s2 + $0x518] sm:$0xff]
    %v217 = vld [vmem:[%s2 + $0x520] sm:$0xff]
    %v218 = vld [vmem:[%s2 + $0x528] sm:$0xff]
    %v219 = vld [vmem:[%s2 + $0x530] sm:$0xff]
    %v220 = vld [vmem:[%s2 + $0x538] sm:$0xff]
    %v221 = vld [vmem:[%s2 + $0x540] sm:$0xff]
    %v222 = vld [vmem:[%s2 + $0x548] sm:$0xff]
    %v223 = vld [vmem:[%s2 + $0x550] sm:$0xff]
    %v224 = vld [vmem:[%s2 + $0x558] sm:$0xff]
    %v225 = vld [vmem:[%s2 + $0x560] sm:$0xff]
    %v226 = vld [vmem:[%s2 + $0x568] sm:$0xff]
    %v227 = vld [vmem:[%s2 + $0x570] sm:$0xff]
    %v228 = vld [vmem:[%s2 + $0x578] sm:$0xff]
    %v229 = vld [vmem:[%s2 + $0x580] sm:$0xff]
    %v230 = vld [vmem:[%s2 + $0x588] sm:$0xff]
    %v231 = vld [vmem:[%s2 + $0x590] sm:$0xff]
    %v232 = vld [vmem:[%s2 + $0x598] sm:$0xff]
    %v233 = vld [vmem:[%s2 + $0x5a0] sm:$0xff]
    %v234 = vld [vmem:[%s2 + $0x5a8] sm:$0xff]
    %v235 = vld [vmem:[%s2 + $0x5b0] sm:$0xff]
    %v236 = vld [vmem:[%s2 + $0x5b8] sm:$0xff]
    %v237 = vld [vmem:[%s2 + $0x5c0] sm:$0xff]
    %v238 = vld [vmem:[%s2 + $0x5c8] sm:$0xff]
    %v239 = vld [vmem:[%s2 + $0x5d0] sm:$0xff]
    %v240 = vld [vmem:[%s2 + $0x5d8] sm:$0xff]
    %v241 = vld [vmem:[%s2 + $0x5e0] sm:$0xff]
    %v242 = vld [vmem:[%s2 + $0x5e8] sm:$0xff]
    %v243 = vld [vmem:[%s2 + $0x5f0] sm:$0xff]
    %v244 = vld [vmem:[%s2 + $0x5f8] sm:$0xff]
    %v245 = vld [vmem:[%s2 + $0x600] sm:$0xff]
    %v246 = vld [vmem:[%s2 + $0x608] sm:$0xff]
    %v247 = vld [vmem:[%s2 + $0x610] sm:$0xff]
    %v248 = vld [vmem:[%s2 + $0x618] sm:$0xff]
    %v249 = vld [vmem:[%s3] sm:$0xf]
    %v251 = vlaneseq
    %v252 = vshrl.u32 %v251, 7
    %v253 = vsub.s32 0, %v252
    %v254 = vrot.slane %v249, %v253
    %v255 = vlaneseq
    %v256 = vshrl.u32 %v255, 7
    %v257 = vsub.s32 1, %v256
    %v258 = vrot.slane %v249, %v257
    %v259 = vlaneseq
    %v260 = vshrl.u32 %v259, 7
    %v261 = vsub.s32 2, %v260
    %v262 = vrot.slane %v249, %v261
    %v263 = vlaneseq
    %v264 = vshrl.u32 %v263, 7
    %v265 = vsub.s32 3, %v264
    %v266 = vrot.slane %v249, %v265
    %v467 = vunpack.c.l.b16 %v53
    %v468 = vunpack.c.h.b16 %v53
    %v469 = vunpack.c.l.b16 %v54
    %v470 = vunpack.c.h.b16 %v54
    %v471 = vunpack.c.l.b16 %v55
    %v472 = vunpack.c.h.b16 %v55
    %v473 = vunpack.c.l.b16 %v56
    %v474 = vunpack.c.h.b16 %v56
    %v475 = vunpack.c.l.b16 %v57
    %v476 = vunpack.c.h.b16 %v57
    %v477 = vunpack.c.l.b16 %v58
    %v478 = vunpack.c.h.b16 %v58
    %v479 = vunpack.c.l.b16 %v59
    %v480 = vunpack.c.h.b16 %v59
    %v481 = vunpack.c.l.b16 %v60
    %v482 = vunpack.c.h.b16 %v60
    %v483 = vunpack.c.l.b16 %v61
    %v484 = vunpack.c.h.b16 %v61
    %v485 = vunpack.c.l.b16 %v62
    %v486 = vunpack.c.h.b16 %v62
    %v487 = vunpack.c.l.b16 %v63
    %v488 = vunpack.c.h.b16 %v63
    %v489 = vunpack.c.l.b16 %v64
    %v490 = vunpack.c.h.b16 %v64
    %v491 = vunpack.c.l.b16 %v65
    %v492 = vunpack.c.h.b16 %v65
    %v493 = vunpack.c.l.b16 %v66
    %v494 = vunpack.c.h.b16 %v66
    %v495 = vunpack.c.l.b16 %v67
    %v496 = vunpack.c.h.b16 %v67
    %v497 = vunpack.c.l.b16 %v68
    %v498 = vunpack.c.h.b16 %v68
    %v499 = vunpack.c.l.b16 %v69
    %v500 = vunpack.c.h.b16 %v69
    %v501 = vunpack.c.l.b16 %v70
    %v502 = vunpack.c.h.b16 %v70
    %v503 = vunpack.c.l.b16 %v71
    %v504 = vunpack.c.h.b16 %v71
    %v505 = vunpack.c.l.b16 %v72
    %v506 = vunpack.c.h.b16 %v72
    %v507 = vunpack.c.l.b16 %v73
    %v508 = vunpack.c.h.b16 %v73
    %v509 = vunpack.c.l.b16 %v74
    %v510 = vunpack.c.h.b16 %v74
    %v511 = vunpack.c.l.b16 %v75
    %v512 = vunpack.c.h.b16 %v75
    %v513 = vunpack.c.l.b16 %v76
    %v514 = vunpack.c.h.b16 %v76
    %v515 = vunpack.c.l.b16 %v77
    %v516 = vunpack.c.h.b16 %v77
    %v517 = vunpack.c.l.b16 %v78
    %v518 = vunpack.c.h.b16 %v78
    %v519 = vunpack.c.l.b16 %v79
    %v520 = vunpack.c.h.b16 %v79
    %v521 = vunpack.c.l.b16 %v80
    %v522 = vunpack.c.h.b16 %v80
    %v523 = vunpack.c.l.b16 %v81
    %v524 = vunpack.c.h.b16 %v81
    %v525 = vunpack.c.l.b16 %v82
    %v526 = vunpack.c.h.b16 %v82
    %v527 = vunpack.c.l.b16 %v83
    %v528 = vunpack.c.h.b16 %v83
    %v529 = vunpack.c.l.b16 %v84
    %v530 = vunpack.c.h.b16 %v84
    %v531 = vunpack.c.l.b16 %v85
    %v532 = vunpack.c.h.b16 %v85
    %v533 = vunpack.c.l.b16 %v86
    %v534 = vunpack.c.h.b16 %v86
    %v535 = vunpack.c.l.b16 %v87
    %v536 = vunpack.c.h.b16 %v87
    %v537 = vunpack.c.l.b16 %v88
    %v538 = vunpack.c.h.b16 %v88
    %v539 = vunpack.c.l.b16 %v89
    %v540 = vunpack.c.h.b16 %v89
    %v541 = vunpack.c.l.b16 %v90
    %v542 = vunpack.c.h.b16 %v90
    %v543 = vunpack.c.l.b16 %v91
    %v544 = vunpack.c.h.b16 %v91
    %v545 = vunpack.c.l.b16 %v92
    %v546 = vunpack.c.h.b16 %v92
    %v547 = vunpack.c.l.b16 %v93
    %v548 = vunpack.c.h.b16 %v93
    %v549 = vunpack.c.l.b16 %v94
    %v550 = vunpack.c.h.b16 %v94
    %v551 = vunpack.c.l.b16 %v95
    %v552 = vunpack.c.h.b16 %v95
    %v553 = vunpack.c.l.b16 %v96
    %v554 = vunpack.c.h.b16 %v96
    %v555 = vunpack.c.l.b16 %v97
    %v556 = vunpack.c.h.b16 %v97
    %v557 = vunpack.c.l.b16 %v98
    %v558 = vunpack.c.h.b16 %v98
    %v559 = vunpack.c.l.b16 %v99
    %v560 = vunpack.c.h.b16 %v99
    %v561 = vunpack.c.l.b16 %v100
    %v562 = vunpack.c.h.b16 %v100
    %v563 = vunpack.c.l.b16 %v101
    %v564 = vunpack.c.h.b16 %v101
    %v565 = vunpack.c.l.b16 %v102
    %v566 = vunpack.c.h.b16 %v102
    %v567 = vunpack.c.l.b16 %v103
    %v568 = vunpack.c.h.b16 %v103
    %v569 = vunpack.c.l.b16 %v104
    %v570 = vunpack.c.h.b16 %v104
    %v571 = vunpack.c.l.b16 %v105
    %v572 = vunpack.c.h.b16 %v105
    %v573 = vunpack.c.l.b16 %v106
    %v574 = vunpack.c.h.b16 %v106
    %v575 = vunpack.c.l.b16 %v107
    %v576 = vunpack.c.h.b16 %v107
    %v577 = vunpack.c.l.b16 %v108
    %v578 = vunpack.c.h.b16 %v108
    %v579 = vunpack.c.l.b16 %v109
    %v580 = vunpack.c.h.b16 %v109
    %v581 = vunpack.c.l.b16 %v110
    %v582 = vunpack.c.h.b16 %v110
    %v583 = vunpack.c.l.b16 %v111
    %v584 = vunpack.c.h.b16 %v111
    %v585 = vunpack.c.l.b16 %v112
    %v586 = vunpack.c.h.b16 %v112
    %v587 = vunpack.c.l.b16 %v113
    %v588 = vunpack.c.h.b16 %v113
    %v589 = vunpack.c.l.b16 %v114
    %v590 = vunpack.c.h.b16 %v114
    %v591 = vunpack.c.l.b16 %v115
    %v592 = vunpack.c.h.b16 %v115
    %v593 = vunpack.c.l.b16 %v116
    %v594 = vunpack.c.h.b16 %v116
    %v595 = vunpack.c.l.b16 %v117
    %v596 = vunpack.c.h.b16 %v117
    %v597 = vunpack.c.l.b16 %v118
    %v598 = vunpack.c.h.b16 %v118
    %v599 = vunpack.c.l.b16 %v119
    %v600 = vunpack.c.h.b16 %v119
    %v601 = vunpack.c.l.b16 %v120
    %v602 = vunpack.c.h.b16 %v120
    %v603 = vunpack.c.l.b16 %v121
    %v604 = vunpack.c.h.b16 %v121
    %v605 = vunpack.c.l.b16 %v122
    %v606 = vunpack.c.h.b16 %v122
    %v607 = vunpack.c.l.b16 %v123
    %v608 = vunpack.c.h.b16 %v123
    %v609 = vunpack.c.l.b16 %v124
    %v610 = vunpack.c.h.b16 %v124
    %v611 = vunpack.c.l.b16 %v125
    %v612 = vunpack.c.h.b16 %v125
    %v613 = vunpack.c.l.b16 %v126
    %v614 = vunpack.c.h.b16 %v126
    %v615 = vunpack.c.l.b16 %v127
    %v616 = vunpack.c.h.b16 %v127
    %v617 = vunpack.c.l.b16 %v128
    %v618 = vunpack.c.h.b16 %v128
    %v619 = vunpack.c.l.b16 %v129
    %v620 = vunpack.c.h.b16 %v129
    %v621 = vunpack.c.l.b16 %v130
    %v622 = vunpack.c.h.b16 %v130
    %v623 = vunpack.c.l.b16 %v131
    %v624 = vunpack.c.h.b16 %v131
    %v625 = vunpack.c.l.b16 %v132
    %v626 = vunpack.c.h.b16 %v132
    %v627 = vunpack.c.l.b16 %v133
    %v628 = vunpack.c.h.b16 %v133
    %v629 = vunpack.c.l.b16 %v134
    %v630 = vunpack.c.h.b16 %v134
    %v631 = vunpack.c.l.b16 %v135
    %v632 = vunpack.c.h.b16 %v135
    %v633 = vunpack.c.l.b16 %v136
    %v634 = vunpack.c.h.b16 %v136
    %v635 = vunpack.c.l.b16 %v137
    %v636 = vunpack.c.h.b16 %v137
    %v637 = vunpack.c.l.b16 %v138
    %v638 = vunpack.c.h.b16 %v138
    %v639 = vunpack.c.l.b16 %v139
    %v640 = vunpack.c.h.b16 %v139
    %v641 = vunpack.c.l.b16 %v140
    %v642 = vunpack.c.h.b16 %v140
    %v643 = vunpack.c.l.b16 %v141
    %v644 = vunpack.c.h.b16 %v141
    %v645 = vunpack.c.l.b16 %v142
    %v646 = vunpack.c.h.b16 %v142
    %v647 = vunpack.c.l.b16 %v143
    %v648 = vunpack.c.h.b16 %v143
    %v649 = vunpack.c.l.b16 %v144
    %v650 = vunpack.c.h.b16 %v144
    %v651 = vunpack.c.l.b16 %v145
    %v652 = vunpack.c.h.b16 %v145
    %v653 = vunpack.c.l.b16 %v146
    %v654 = vunpack.c.h.b16 %v146
    %v655 = vunpack.c.l.b16 %v147
    %v656 = vunpack.c.h.b16 %v147
    %v657 = vunpack.c.l.b16 %v148
    %v658 = vunpack.c.h.b16 %v148
    %v659 = vunpack.c.l.b16 %v149
    %v660 = vunpack.c.h.b16 %v149
    %v661 = vunpack.c.l.b16 %v150
    %v662 = vunpack.c.h.b16 %v150
    %v663 = vunpack.c.l.b16 %v151
    %v664 = vunpack.c.h.b16 %v151
    %v665 = vunpack.c.l.b16 %v152
    %v666 = vunpack.c.h.b16 %v152
    %v667 = vunpack.c.l.b16 %v153
    %v668 = vunpack.c.h.b16 %v153
    %v669 = vunpack.c.l.b16 %v154
    %v670 = vunpack.c.h.b16 %v154
    %v671 = vunpack.c.l.b16 %v155
    %v672 = vunpack.c.h.b16 %v155
    %v673 = vunpack.c.l.b16 %v156
    %v674 = vunpack.c.h.b16 %v156
    %v675 = vunpack.c.l.b16 %v157
    %v676 = vunpack.c.h.b16 %v157
    %v677 = vunpack.c.l.b16 %v158
    %v678 = vunpack.c.h.b16 %v158
    %v679 = vunpack.c.l.b16 %v159
    %v680 = vunpack.c.h.b16 %v159
    %v681 = vunpack.c.l.b16 %v160
    %v682 = vunpack.c.h.b16 %v160
    %v683 = vunpack.c.l.b16 %v161
    %v684 = vunpack.c.h.b16 %v161
    %v685 = vunpack.c.l.b16 %v162
    %v686 = vunpack.c.h.b16 %v162
    %v687 = vunpack.c.l.b16 %v163
    %v688 = vunpack.c.h.b16 %v163
    %v689 = vunpack.c.l.b16 %v164
    %v690 = vunpack.c.h.b16 %v164
    %v691 = vunpack.c.l.b16 %v165
    %v692 = vunpack.c.h.b16 %v165
    %v693 = vunpack.c.l.b16 %v166
    %v694 = vunpack.c.h.b16 %v166
    %v695 = vunpack.c.l.b16 %v167
    %v696 = vunpack.c.h.b16 %v167
    %v697 = vunpack.c.l.b16 %v168
    %v698 = vunpack.c.h.b16 %v168
    %v699 = vunpack.c.l.b16 %v169
    %v700 = vunpack.c.h.b16 %v169
    %v701 = vunpack.c.l.b16 %v170
    %v702 = vunpack.c.h.b16 %v170
    %v703 = vunpack.c.l.b16 %v171
    %v704 = vunpack.c.h.b16 %v171
    %v705 = vunpack.c.l.b16 %v172
    %v706 = vunpack.c.h.b16 %v172
    %v707 = vunpack.c.l.b16 %v173
    %v708 = vunpack.c.h.b16 %v173
    %v709 = vunpack.c.l.b16 %v174
    %v710 = vunpack.c.h.b16 %v174
    %v711 = vunpack.c.l.b16 %v175
    %v712 = vunpack.c.h.b16 %v175
    %v713 = vunpack.c.l.b16 %v176
    %v714 = vunpack.c.h.b16 %v176
    %v715 = vunpack.c.l.b16 %v177
    %v716 = vunpack.c.h.b16 %v177
    %v717 = vunpack.c.l.b16 %v178
    %v718 = vunpack.c.h.b16 %v178
    %v719 = vunpack.c.l.b16 %v179
    %v720 = vunpack.c.h.b16 %v179
    %v721 = vunpack.c.l.b16 %v180
    %v722 = vunpack.c.h.b16 %v180
    %v723 = vunpack.c.l.b16 %v181
    %v724 = vunpack.c.h.b16 %v181
    %v725 = vunpack.c.l.b16 %v182
    %v726 = vunpack.c.h.b16 %v182
    %v727 = vunpack.c.l.b16 %v183
    %v728 = vunpack.c.h.b16 %v183
    %v729 = vunpack.c.l.b16 %v184
    %v730 = vunpack.c.h.b16 %v184
    %v731 = vunpack.c.l.b16 %v185
    %v732 = vunpack.c.h.b16 %v185
    %v733 = vunpack.c.l.b16 %v186
    %v734 = vunpack.c.h.b16 %v186
    %v735 = vunpack.c.l.b16 %v187
    %v736 = vunpack.c.h.b16 %v187
    %v737 = vunpack.c.l.b16 %v188
    %v738 = vunpack.c.h.b16 %v188
    %v739 = vunpack.c.l.b16 %v189
    %v740 = vunpack.c.h.b16 %v189
    %v741 = vunpack.c.l.b16 %v190
    %v742 = vunpack.c.h.b16 %v190
    %v743 = vunpack.c.l.b16 %v191
    %v744 = vunpack.c.h.b16 %v191
    %v745 = vunpack.c.l.b16 %v192
    %v746 = vunpack.c.h.b16 %v192
    %v747 = vunpack.c.l.b16 %v193
    %v748 = vunpack.c.h.b16 %v193
    %v749 = vunpack.c.l.b16 %v194
    %v750 = vunpack.c.h.b16 %v194
    %v751 = vunpack.c.l.b16 %v195
    %v752 = vunpack.c.h.b16 %v195
    %v753 = vunpack.c.l.b16 %v196
    %v754 = vunpack.c.h.b16 %v196
    %v755 = vunpack.c.l.b16 %v197
    %v756 = vunpack.c.h.b16 %v197
    %v757 = vunpack.c.l.b16 %v198
    %v758 = vunpack.c.h.b16 %v198
    %v759 = vunpack.c.l.b16 %v199
    %v760 = vunpack.c.h.b16 %v199
    %v761 = vunpack.c.l.b16 %v200
    %v762 = vunpack.c.h.b16 %v200
    %v763 = vunpack.c.l.b16 %v201
    %v764 = vunpack.c.h.b16 %v201
    %v765 = vunpack.c.l.b16 %v202
    %v766 = vunpack.c.h.b16 %v202
    %v767 = vunpack.c.l.b16 %v203
    %v768 = vunpack.c.h.b16 %v203
    %v769 = vunpack.c.l.b16 %v204
    %v770 = vunpack.c.h.b16 %v204
    %v771 = vunpack.c.l.b16 %v205
    %v772 = vunpack.c.h.b16 %v205
    %v773 = vunpack.c.l.b16 %v206
    %v774 = vunpack.c.h.b16 %v206
    %v775 = vunpack.c.l.b16 %v207
    %v776 = vunpack.c.h.b16 %v207
    %v777 = vunpack.c.l.b16 %v208
    %v778 = vunpack.c.h.b16 %v208
    %v779 = vunpack.c.l.b16 %v209
    %v780 = vunpack.c.h.b16 %v209
    %v781 = vunpack.c.l.b16 %v210
    %v782 = vunpack.c.h.b16 %v210
    %v783 = vunpack.c.l.b16 %v211
    %v784 = vunpack.c.h.b16 %v211
    %v785 = vunpack.c.l.b16 %v212
    %v786 = vunpack.c.h.b16 %v212
    %v787 = vunpack.c.l.b16 %v213
    %v788 = vunpack.c.h.b16 %v213
    %v789 = vunpack.c.l.b16 %v214
    %v790 = vunpack.c.h.b16 %v214
    %v791 = vunpack.c.l.b16 %v215
    %v792 = vunpack.c.h.b16 %v215
    %v793 = vunpack.c.l.b16 %v216
    %v794 = vunpack.c.h.b16 %v216
    %v795 = vunpack.c.l.b16 %v217
    %v796 = vunpack.c.h.b16 %v217
    %v797 = vunpack.c.l.b16 %v218
    %v798 = vunpack.c.h.b16 %v218
    %v799 = vunpack.c.l.b16 %v219
    %v800 = vunpack.c.h.b16 %v219
    %v801 = vunpack.c.l.b16 %v220
    %v802 = vunpack.c.h.b16 %v220
    %v803 = vunpack.c.l.b16 %v221
    %v804 = vunpack.c.h.b16 %v221
    %v805 = vunpack.c.l.b16 %v222
    %v806 = vunpack.c.h.b16 %v222
    %v807 = vunpack.c.l.b16 %v223
    %v808 = vunpack.c.h.b16 %v223
    %v809 = vunpack.c.l.b16 %v224
    %v810 = vunpack.c.h.b16 %v224
    %v811 = vunpack.c.l.b16 %v225
    %v812 = vunpack.c.h.b16 %v225
    %v813 = vunpack.c.l.b16 %v226
    %v814 = vunpack.c.h.b16 %v226
    %v815 = vunpack.c.l.b16 %v227
    %v816 = vunpack.c.h.b16 %v227
    %v817 = vunpack.c.l.b16 %v228
    %v818 = vunpack.c.h.b16 %v228
    %v819 = vunpack.c.l.b16 %v229
    %v820 = vunpack.c.h.b16 %v229
    %v821 = vunpack.c.l.b16 %v230
    %v822 = vunpack.c.h.b16 %v230
    %v823 = vunpack.c.l.b16 %v231
    %v824 = vunpack.c.h.b16 %v231
    %v825 = vunpack.c.l.b16 %v232
    %v826 = vunpack.c.h.b16 %v232
    %v827 = vunpack.c.l.b16 %v233
    %v828 = vunpack.c.h.b16 %v233
    %v829 = vunpack.c.l.b16 %v234
    %v830 = vunpack.c.h.b16 %v234
    %v831 = vunpack.c.l.b16 %v235
    %v832 = vunpack.c.h.b16 %v235
    %v833 = vunpack.c.l.b16 %v236
    %v834 = vunpack.c.h.b16 %v236
    %v835 = vunpack.c.l.b16 %v237
    %v836 = vunpack.c.h.b16 %v237
    %v837 = vunpack.c.l.b16 %v238
    %v838 = vunpack.c.h.b16 %v238
    %v839 = vunpack.c.l.b16 %v239
    %v840 = vunpack.c.h.b16 %v239
    %v841 = vunpack.c.l.b16 %v240
    %v842 = vunpack.c.h.b16 %v240
    %v843 = vunpack.c.l.b16 %v241
    %v844 = vunpack.c.h.b16 %v241
    %v845 = vunpack.c.l.b16 %v242
    %v846 = vunpack.c.h.b16 %v242
    %v847 = vunpack.c.l.b16 %v243
    %v848 = vunpack.c.h.b16 %v243
    %v849 = vunpack.c.l.b16 %v244
    %v850 = vunpack.c.h.b16 %v244
    %v851 = vunpack.c.l.b16 %v245
    %v852 = vunpack.c.h.b16 %v245
    %v853 = vunpack.c.l.b16 %v246
    %v854 = vunpack.c.h.b16 %v246
    %v855 = vunpack.c.l.b16 %v247
    %v856 = vunpack.c.h.b16 %v247
    %v857 = vunpack.c.l.b16 %v248
    %v858 = vunpack.c.h.b16 %v248
    %v859 = vpack.c.b16 %v471, %v467
    %v860 = vpack.c.b16 %v472, %v468
    %v861 = vpack.c.b16 %v473, %v469
    %v862 = vpack.c.b16 %v474, %v470
    %v863 = vpack.c.b16 %v479, %v475
    %v864 = vpack.c.b16 %v480, %v476
    %v865 = vpack.c.b16 %v481, %v477
    %v866 = vpack.c.b16 %v482, %v478
    %v867 = vpack.c.b16 %v487, %v483
    %v868 = vpack.c.b16 %v488, %v484
    %v869 = vpack.c.b16 %v489, %v485
    %v870 = vpack.c.b16 %v490, %v486
    %v871 = vpack.c.b16 %v495, %v491
    %v872 = vpack.c.b16 %v496, %v492
    %v873 = vpack.c.b16 %v497, %v493
    %v874 = vpack.c.b16 %v498, %v494
    %v875 = vpack.c.b16 %v503, %v499
    %v876 = vpack.c.b16 %v504, %v500
    %v877 = vpack.c.b16 %v505, %v501
    %v878 = vpack.c.b16 %v506, %v502
    %v879 = vpack.c.b16 %v511, %v507
    %v880 = vpack.c.b16 %v512, %v508
    %v881 = vpack.c.b16 %v513, %v509
    %v882 = vpack.c.b16 %v514, %v510
    %v883 = vpack.c.b16 %v519, %v515
    %v884 = vpack.c.b16 %v520, %v516
    %v885 = vpack.c.b16 %v521, %v517
    %v886 = vpack.c.b16 %v522, %v518
    %v887 = vpack.c.b16 %v527, %v523
    %v888 = vpack.c.b16 %v528, %v524
    %v889 = vpack.c.b16 %v529, %v525
    %v890 = vpack.c.b16 %v530, %v526
    %v891 = vpack.c.b16 %v535, %v531
    %v892 = vpack.c.b16 %v536, %v532
    %v893 = vpack.c.b16 %v537, %v533
    %v894 = vpack.c.b16 %v538, %v534
    %v895 = vpack.c.b16 %v543, %v539
    %v896 = vpack.c.b16 %v544, %v540
    %v897 = vpack.c.b16 %v545, %v541
    %v898 = vpack.c.b16 %v546, %v542
    %v899 = vpack.c.b16 %v551, %v547
    %v900 = vpack.c.b16 %v552, %v548
    %v901 = vpack.c.b16 %v553, %v549
    %v902 = vpack.c.b16 %v554, %v550
    %v903 = vpack.c.b16 %v559, %v555
    %v904 = vpack.c.b16 %v560, %v556
    %v905 = vpack.c.b16 %v561, %v557
    %v906 = vpack.c.b16 %v562, %v558
    %v907 = vpack.c.b16 %v567, %v563
    %v908 = vpack.c.b16 %v568, %v564
    %v909 = vpack.c.b16 %v569, %v565
    %v910 = vpack.c.b16 %v570, %v566
    %v911 = vpack.c.b16 %v575, %v571
    %v912 = vpack.c.b16 %v576, %v572
    %v913 = vpack.c.b16 %v577, %v573
    %v914 = vpack.c.b16 %v578, %v574
    %v915 = vpack.c.b16 %v583, %v579
    %v916 = vpack.c.b16 %v584, %v580
    %v917 = vpack.c.b16 %v585, %v581
    %v918 = vpack.c.b16 %v586, %v582
    %v919 = vpack.c.b16 %v591, %v587
    %v920 = vpack.c.b16 %v592, %v588
    %v921 = vpack.c.b16 %v593, %v589
    %v922 = vpack.c.b16 %v594, %v590
    %v923 = vpack.c.b16 %v599, %v595
    %v924 = vpack.c.b16 %v600, %v596
    %v925 = vpack.c.b16 %v601, %v597
    %v926 = vpack.c.b16 %v602, %v598
    %v927 = vpack.c.b16 %v607, %v603
    %v928 = vpack.c.b16 %v608, %v604
    %v929 = vpack.c.b16 %v609, %v605
    %v930 = vpack.c.b16 %v610, %v606
    %v931 = vpack.c.b16 %v615, %v611
    %v932 = vpack.c.b16 %v616, %v612
    %v933 = vpack.c.b16 %v617, %v613
    %v934 = vpack.c.b16 %v618, %v614
    %v935 = vpack.c.b16 %v623, %v619
    %v936 = vpack.c.b16 %v624, %v620
    %v937 = vpack.c.b16 %v625, %v621
    %v938 = vpack.c.b16 %v626, %v622
    %v939 = vpack.c.b16 %v631, %v627
    %v940 = vpack.c.b16 %v632, %v628
    %v941 = vpack.c.b16 %v633, %v629
    %v942 = vpack.c.b16 %v634, %v630
    %v943 = vpack.c.b16 %v639, %v635
    %v944 = vpack.c.b16 %v640, %v636
    %v945 = vpack.c.b16 %v641, %v637
    %v946 = vpack.c.b16 %v642, %v638
    %v947 = vpack.c.b16 %v647, %v643
    %v948 = vpack.c.b16 %v648, %v644
    %v949 = vpack.c.b16 %v649, %v645
    %v950 = vpack.c.b16 %v650, %v646
    %v951 = vpack.c.b16 %v655, %v651
    %v952 = vpack.c.b16 %v656, %v652
    %v953 = vpack.c.b16 %v657, %v653
    %v954 = vpack.c.b16 %v658, %v654
    %v955 = vpack.c.b16 %v663, %v659
    %v956 = vpack.c.b16 %v664, %v660
    %v957 = vpack.c.b16 %v665, %v661
    %v958 = vpack.c.b16 %v666, %v662
    %v959 = vpack.c.b16 %v671, %v667
    %v960 = vpack.c.b16 %v672, %v668
    %v961 = vpack.c.b16 %v673, %v669
    %v962 = vpack.c.b16 %v674, %v670
    %v963 = vpack.c.b16 %v679, %v675
    %v964 = vpack.c.b16 %v680, %v676
    %v965 = vpack.c.b16 %v681, %v677
    %v966 = vpack.c.b16 %v682, %v678
    %v967 = vpack.c.b16 %v687, %v683
    %v968 = vpack.c.b16 %v688, %v684
    %v969 = vpack.c.b16 %v689, %v685
    %v970 = vpack.c.b16 %v690, %v686
    %v971 = vpack.c.b16 %v695, %v691
    %v972 = vpack.c.b16 %v696, %v692
    %v973 = vpack.c.b16 %v697, %v693
    %v974 = vpack.c.b16 %v698, %v694
    %v975 = vpack.c.b16 %v703, %v699
    %v976 = vpack.c.b16 %v704, %v700
    %v977 = vpack.c.b16 %v705, %v701
    %v978 = vpack.c.b16 %v706, %v702
    %v979 = vpack.c.b16 %v711, %v707
    %v980 = vpack.c.b16 %v712, %v708
    %v981 = vpack.c.b16 %v713, %v709
    %v982 = vpack.c.b16 %v714, %v710
    %v983 = vpack.c.b16 %v719, %v715
    %v984 = vpack.c.b16 %v720, %v716
    %v985 = vpack.c.b16 %v721, %v717
    %v986 = vpack.c.b16 %v722, %v718
    %v987 = vpack.c.b16 %v727, %v723
    %v988 = vpack.c.b16 %v728, %v724
    %v989 = vpack.c.b16 %v729, %v725
    %v990 = vpack.c.b16 %v730, %v726
    %v991 = vpack.c.b16 %v735, %v731
    %v992 = vpack.c.b16 %v736, %v732
    %v993 = vpack.c.b16 %v737, %v733
    %v994 = vpack.c.b16 %v738, %v734
    %v995 = vpack.c.b16 %v743, %v739
    %v996 = vpack.c.b16 %v744, %v740
    %v997 = vpack.c.b16 %v745, %v741
    %v998 = vpack.c.b16 %v746, %v742
    %v999 = vpack.c.b16 %v751, %v747
    %v1000 = vpack.c.b16 %v752, %v748
    %v1001 = vpack.c.b16 %v753, %v749
    %v1002 = vpack.c.b16 %v754, %v750
    %v1003 = vpack.c.b16 %v759, %v755
    %v1004 = vpack.c.b16 %v760, %v756
    %v1005 = vpack.c.b16 %v761, %v757
    %v1006 = vpack.c.b16 %v762, %v758
    %v1007 = vpack.c.b16 %v767, %v763
    %v1008 = vpack.c.b16 %v768, %v764
    %v1009 = vpack.c.b16 %v769, %v765
    %v1010 = vpack.c.b16 %v770, %v766
    %v1011 = vpack.c.b16 %v775, %v771
    %v1012 = vpack.c.b16 %v776, %v772
    %v1013 = vpack.c.b16 %v777, %v773
    %v1014 = vpack.c.b16 %v778, %v774
    %v1015 = vpack.c.b16 %v783, %v779
    %v1016 = vpack.c.b16 %v784, %v780
    %v1017 = vpack.c.b16 %v785, %v781
    %v1018 = vpack.c.b16 %v786, %v782
    %v1019 = vpack.c.b16 %v791, %v787
    %v1020 = vpack.c.b16 %v792, %v788
    %v1021 = vpack.c.b16 %v793, %v789
    %v1022 = vpack.c.b16 %v794, %v790
    %v1023 = vpack.c.b16 %v799, %v795
    %v1024 = vpack.c.b16 %v800, %v796
    %v1025 = vpack.c.b16 %v801, %v797
    %v1026 = vpack.c.b16 %v802, %v798
    %v1027 = vpack.c.b16 %v807, %v803
    %v1028 = vpack.c.b16 %v808, %v804
    %v1029 = vpack.c.b16 %v809, %v805
    %v1030 = vpack.c.b16 %v810, %v806
    %v1031 = vpack.c.b16 %v815, %v811
    %v1032 = vpack.c.b16 %v816, %v812
    %v1033 = vpack.c.b16 %v817, %v813
    %v1034 = vpack.c.b16 %v818, %v814
    %v1035 = vpack.c.b16 %v823, %v819
    %v1036 = vpack.c.b16 %v824, %v820
    %v1037 = vpack.c.b16 %v825, %v821
    %v1038 = vpack.c.b16 %v826, %v822
    %v1039 = vpack.c.b16 %v831, %v827
    %v1040 = vpack.c.b16 %v832, %v828
    %v1041 = vpack.c.b16 %v833, %v829
    %v1042 = vpack.c.b16 %v834, %v830
    %v1043 = vpack.c.b16 %v839, %v835
    %v1044 = vpack.c.b16 %v840, %v836
    %v1045 = vpack.c.b16 %v841, %v837
    %v1046 = vpack.c.b16 %v842, %v838
    %v1047 = vpack.c.b16 %v847, %v843
    %v1048 = vpack.c.b16 %v848, %v844
    %v1049 = vpack.c.b16 %v849, %v845
    %v1050 = vpack.c.b16 %v850, %v846
    %v1051 = vpack.c.b16 %v855, %v851
    %v1052 = vpack.c.b16 %v856, %v852
    %v1053 = vpack.c.b16 %v857, %v853
    %v1054 = vpack.c.b16 %v858, %v854
    %vm1251 = vcmask 130048
    %v1253 = vsel %vm1251, %v52, 0
    %1255 = vmatprep.subr.bf16.mxu0 %v888
    %1256 = vmatpush1.bf16.msra.mxu0 %v887
    %1257 = vmatprep.subr.bf16.mxu0 %v884
    %1258 = vmatpush1.bf16.msra.mxu0 %v883
    %1259 = vmatprep.subr.bf16.mxu0 %v880
    %1260 = vmatpush1.bf16.msra.mxu0 %v879
    %1261 = vmatprep.subr.bf16.mxu0 %v876
    %1262 = vmatpush1.bf16.msra.mxu0 %v875
    %1263 = vmatprep.subr.bf16.mxu0 %v872
    %1264 = vmatpush1.bf16.msra.mxu0 %v871
    %1265 = vmatprep.subr.bf16.mxu0 %v868
    %1266 = vmatpush1.bf16.msra.mxu0 %v867
    %1267 = vmatprep.subr.bf16.mxu0 %v864
    %1268 = vmatpush1.bf16.msra.mxu0 %v863
    %1269 = vmatprep.subr.bf16.mxu0 %v860
    %1270 = vmatpush1.bf16.msra.mxu0 %v859
    %1271 = vmatprep.subr.bf16.mxu0 %v920
    %1272 = vmatpush2.bf16.msra.mxu0 %v919
    %1273 = vmatprep.subr.bf16.mxu0 %v916
    %1274 = vmatpush2.bf16.msra.mxu0 %v915
    %1275 = vmatprep.subr.bf16.mxu0 %v912
    %1276 = vmatpush2.bf16.msra.mxu0 %v911
    %1277 = vmatprep.subr.bf16.mxu0 %v908
    %1278 = vmatpush2.bf16.msra.mxu0 %v907
    %1279 = vmatprep.subr.bf16.mxu0 %v904
    %1280 = vmatpush2.bf16.msra.mxu0 %v903
    %1281 = vmatprep.subr.bf16.mxu0 %v900
    %1282 = vmatpush2.bf16.msra.mxu0 %v899
    %1283 = vmatprep.subr.bf16.mxu0 %v896
    %1284 = vmatpush2.bf16.msra.mxu0 %v895
    %1285 = vmatprep.subr.bf16.mxu0 %v892
    %1286 = vmatpush2.bf16.msra.mxu0 %v891
    %1287 = vmatprep.mubr.bf16.mxu0 %v47
    %1288 = vmatmul.mubr.bf16.gmra.mxu0 %v46
    %v1289 = vpop.f32.mrf.mxu0
    %v1290 = vadd.f32 %v254, %v1289
    %v1291 = vpop.f32.mrf.mxu0
    %v1292 = vadd.f32 %v258, %v1291
    %v1293 = vpop.f32.mrf.mxu0
    %v1294 = vpop.f32.mrf.mxu0
    %1295 = vdwg.mxu0
    %1296 = vmatprep.subr.bf16.mxu0 %v952
    %1297 = vmatpush1.bf16.msra.mxu0 %v951
    %1298 = vmatprep.subr.bf16.mxu0 %v948
    %1299 = vmatpush1.bf16.msra.mxu0 %v947
    %1300 = vmatprep.subr.bf16.mxu0 %v944
    %1301 = vmatpush1.bf16.msra.mxu0 %v943
    %1302 = vmatprep.subr.bf16.mxu0 %v940
    %1303 = vmatpush1.bf16.msra.mxu0 %v939
    %1304 = vmatprep.subr.bf16.mxu0 %v936
    %1305 = vmatpush1.bf16.msra.mxu0 %v935
    %1306 = vmatprep.subr.bf16.mxu0 %v932
    %1307 = vmatpush1.bf16.msra.mxu0 %v931
    %1308 = vmatprep.subr.bf16.mxu0 %v928
    %1309 = vmatpush1.bf16.msra.mxu0 %v927
    %1310 = vmatprep.subr.bf16.mxu0 %v924
    %1311 = vmatpush1.bf16.msra.mxu0 %v923
    %1312 = vmatprep.subr.bf16.mxu0 %v984
    %1313 = vmatpush2.bf16.msra.mxu0 %v983
    %1314 = vmatprep.subr.bf16.mxu0 %v980
    %1315 = vmatpush2.bf16.msra.mxu0 %v979
    %1316 = vmatprep.subr.bf16.mxu0 %v976
    %1317 = vmatpush2.bf16.msra.mxu0 %v975
    %1318 = vmatprep.subr.bf16.mxu0 %v972
    %1319 = vmatpush2.bf16.msra.mxu0 %v971
    %1320 = vmatprep.subr.bf16.mxu0 %v968
    %1321 = vmatpush2.bf16.msra.mxu0 %v967
    %1322 = vmatprep.subr.bf16.mxu0 %v964
    %1323 = vmatpush2.bf16.msra.mxu0 %v963
    %1324 = vmatprep.subr.bf16.mxu0 %v960
    %1325 = vmatpush2.bf16.msra.mxu0 %v959
    %1326 = vmatprep.subr.bf16.mxu0 %v956
    %1327 = vmatpush2.bf16.msra.mxu0 %v955
    %1328 = vmatprep.mubr.bf16.mxu0 %v49
    %1329 = vmatmul.mubr.bf16.gmra.mxu0 %v48
    %v1330 = vpop.f32.mrf.mxu0
    %v1331 = vadd.f32 %v1290, %v1330
    %v1332 = vpop.f32.mrf.mxu0
    %v1333 = vadd.f32 %v1292, %v1332
    %v1334 = vpop.f32.mrf.mxu0
    %v1335 = vpop.f32.mrf.mxu0
    %1336 = vdwg.mxu0
    %1337 = vmatprep.subr.bf16.mxu0 %v1016
    %1338 = vmatpush1.bf16.msra.mxu0 %v1015
    %1339 = vmatprep.subr.bf16.mxu0 %v1012
    %1340 = vmatpush1.bf16.msra.mxu0 %v1011
    %1341 = vmatprep.subr.bf16.mxu0 %v1008
    %1342 = vmatpush1.bf16.msra.mxu0 %v1007
    %1343 = vmatprep.subr.bf16.mxu0 %v1004
    %1344 = vmatpush1.bf16.msra.mxu0 %v1003
    %1345 = vmatprep.subr.bf16.mxu0 %v1000
    %1346 = vmatpush1.bf16.msra.mxu0 %v999
    %1347 = vmatprep.subr.bf16.mxu0 %v996
    %1348 = vmatpush1.bf16.msra.mxu0 %v995
    %1349 = vmatprep.subr.bf16.mxu0 %v992
    %1350 = vmatpush1.bf16.msra.mxu0 %v991
    %1351 = vmatprep.subr.bf16.mxu0 %v988
    %1352 = vmatpush1.bf16.msra.mxu0 %v987
    %1353 = vmatprep.subr.bf16.mxu0 %v1048
    %1354 = vmatpush2.bf16.msra.mxu0 %v1047
    %1355 = vmatprep.subr.bf16.mxu0 %v1044
    %1356 = vmatpush2.bf16.msra.mxu0 %v1043
    %1357 = vmatprep.subr.bf16.mxu0 %v1040
    %1358 = vmatpush2.bf16.msra.mxu0 %v1039
    %1359 = vmatprep.subr.bf16.mxu0 %v1036
    %1360 = vmatpush2.bf16.msra.mxu0 %v1035
    %1361 = vmatprep.subr.bf16.mxu0 %v1032
    %1362 = vmatpush2.bf16.msra.mxu0 %v1031
    %1363 = vmatprep.subr.bf16.mxu0 %v1028
    %1364 = vmatpush2.bf16.msra.mxu0 %v1027
    %1365 = vmatprep.subr.bf16.mxu0 %v1024
    %1366 = vmatpush2.bf16.msra.mxu0 %v1023
    %1367 = vmatprep.subr.bf16.mxu0 %v1020
    %1368 = vmatpush2.bf16.msra.mxu0 %v1019
    %1369 = vmatprep.mubr.bf16.mxu0 %v51
    %1370 = vmatmul.mubr.bf16.gmra.mxu0 %v50
    %v1371 = vpop.f32.mrf.mxu0
    %v1372 = vadd.f32 %v1331, %v1371
    %v1373 = vpop.f32.mrf.mxu0
    %v1374 = vadd.f32 %v1333, %v1373
    %v1375 = vpop.f32.mrf.mxu0
    %v1376 = vpop.f32.mrf.mxu0
    %1377 = vdwg.mxu0
    %1378 = vmatprep.subr.bf16.mxu0 0
    %1379 = vmatpush1.bf16.msra.mxu0 0
    %1380 = vmatprep.subr.bf16.mxu0 0
    %1381 = vmatpush1.bf16.msra.mxu0 0
    %1382 = vmatprep.subr.bf16.mxu0 0
    %1383 = vmatpush1.bf16.msra.mxu0 0
    %1384 = vmatprep.subr.bf16.mxu0 0
    %1385 = vmatpush1.bf16.msra.mxu0 0
    %1386 = vmatprep.subr.bf16.mxu0 0
    %1387 = vmatpush1.bf16.msra.mxu0 0
    %1388 = vmatprep.subr.bf16.mxu0 0
    %1389 = vmatpush1.bf16.msra.mxu0 0
    %1390 = vmatprep.subr.bf16.mxu0 0
    %1391 = vmatpush1.bf16.msra.mxu0 0
    %1392 = vmatprep.subr.bf16.mxu0 %v1052
    %1393 = vmatpush1.bf16.msra.mxu0 %v1051
    %1394 = vmatprep.subr.bf16.mxu0 0
    %1395 = vmatpush2.bf16.msra.mxu0 0
    %1396 = vmatprep.subr.bf16.mxu0 0
    %1397 = vmatpush2.bf16.msra.mxu0 0
    %1398 = vmatprep.subr.bf16.mxu0 0
    %1399 = vmatpush2.bf16.msra.mxu0 0
    %1400 = vmatprep.subr.bf16.mxu0 0
    %1401 = vmatpush2.bf16.msra.mxu0 0
    %1402 = vmatprep.subr.bf16.mxu0 0
    %1403 = vmatpush2.bf16.msra.mxu0 0
    %1404 = vmatprep.subr.bf16.mxu0 0
    %1405 = vmatpush2.bf16.msra.mxu0 0
    %1406 = vmatprep.subr.bf16.mxu0 0
    %1407 = vmatpush2.bf16.msra.mxu0 0
    %1408 = vmatprep.subr.bf16.mxu0 0
    %1409 = vmatpush2.bf16.msra.mxu0 0
    %1410 = vmatprep.mubr.bf16.mxu0 0
    %1411 = vmatmul.mubr.bf16.gmra.mxu0 %v1253
    %v1412 = vpop.f32.mrf.mxu0
    %v1413 = vadd.f32 %v1372, %v1412
    %v1414 = vpop.f32.mrf.mxu0
    %v1415 = vadd.f32 %v1374, %v1414
    %v1416 = vpop.f32.mrf.mxu0
    %v1417 = vpop.f32.mrf.mxu0
    %1418 = vdwg.mxu0
    %1419 = vmatprep.subr.bf16.mxu0 %v890
    %1420 = vmatpush1.bf16.msra.mxu0 %v889
    %1421 = vmatprep.subr.bf16.mxu0 %v886
    %1422 = vmatpush1.bf16.msra.mxu0 %v885
    %1423 = vmatprep.subr.bf16.mxu0 %v882
    %1424 = vmatpush1.bf16.msra.mxu0 %v881
    %1425 = vmatprep.subr.bf16.mxu0 %v878
    %1426 = vmatpush1.bf16.msra.mxu0 %v877
    %1427 = vmatprep.subr.bf16.mxu0 %v874
    %1428 = vmatpush1.bf16.msra.mxu0 %v873
    %1429 = vmatprep.subr.bf16.mxu0 %v870
    %1430 = vmatpush1.bf16.msra.mxu0 %v869
    %1431 = vmatprep.subr.bf16.mxu0 %v866
    %1432 = vmatpush1.bf16.msra.mxu0 %v865
    %1433 = vmatprep.subr.bf16.mxu0 %v862
    %1434 = vmatpush1.bf16.msra.mxu0 %v861
    %1435 = vmatprep.subr.bf16.mxu0 %v922
    %1436 = vmatpush2.bf16.msra.mxu0 %v921
    %1437 = vmatprep.subr.bf16.mxu0 %v918
    %1438 = vmatpush2.bf16.msra.mxu0 %v917
    %1439 = vmatprep.subr.bf16.mxu0 %v914
    %1440 = vmatpush2.bf16.msra.mxu0 %v913
    %1441 = vmatprep.subr.bf16.mxu0 %v910
    %1442 = vmatpush2.bf16.msra.mxu0 %v909
    %1443 = vmatprep.subr.bf16.mxu0 %v906
    %1444 = vmatpush2.bf16.msra.mxu0 %v905
    %1445 = vmatprep.subr.bf16.mxu0 %v902
    %1446 = vmatpush2.bf16.msra.mxu0 %v901
    %1447 = vmatprep.subr.bf16.mxu0 %v898
    %1448 = vmatpush2.bf16.msra.mxu0 %v897
    %1449 = vmatprep.subr.bf16.mxu0 %v894
    %1450 = vmatpush2.bf16.msra.mxu0 %v893
    %1451 = vmatprep.mubr.bf16.mxu0 %v47
    %1452 = vmatmul.mubr.bf16.gmra.mxu0 %v46
    %v1453 = vpop.f32.mrf.mxu0
    %v1454 = vadd.f32 %v262, %v1453
    %v1455 = vpop.f32.mrf.mxu0
    %v1456 = vadd.f32 %v266, %v1455
    %v1457 = vpop.f32.mrf.mxu0
    %v1458 = vpop.f32.mrf.mxu0
    %1459 = vdwg.mxu0
    %1460 = vmatprep.subr.bf16.mxu0 %v954
    %1461 = vmatpush1.bf16.msra.mxu0 %v953
    %1462 = vmatprep.subr.bf16.mxu0 %v950
    %1463 = vmatpush1.bf16.msra.mxu0 %v949
    %1464 = vmatprep.subr.bf16.mxu0 %v946
    %1465 = vmatpush1.bf16.msra.mxu0 %v945
    %1466 = vmatprep.subr.bf16.mxu0 %v942
    %1467 = vmatpush1.bf16.msra.mxu0 %v941
    %1468 = vmatprep.subr.bf16.mxu0 %v938
    %1469 = vmatpush1.bf16.msra.mxu0 %v937
    %1470 = vmatprep.subr.bf16.mxu0 %v934
    %1471 = vmatpush1.bf16.msra.mxu0 %v933
    %1472 = vmatprep.subr.bf16.mxu0 %v930
    %1473 = vmatpush1.bf16.msra.mxu0 %v929
    %1474 = vmatprep.subr.bf16.mxu0 %v926
    %1475 = vmatpush1.bf16.msra.mxu0 %v925
    %1476 = vmatprep.subr.bf16.mxu0 %v986
    %1477 = vmatpush2.bf16.msra.mxu0 %v985
    %1478 = vmatprep.subr.bf16.mxu0 %v982
    %1479 = vmatpush2.bf16.msra.mxu0 %v981
    %1480 = vmatprep.subr.bf16.mxu0 %v978
    %1481 = vmatpush2.bf16.msra.mxu0 %v977
    %1482 = vmatprep.subr.bf16.mxu0 %v974
    %1483 = vmatpush2.bf16.msra.mxu0 %v973
    %1484 = vmatprep.subr.bf16.mxu0 %v970
    %1485 = vmatpush2.bf16.msra.mxu0 %v969
    %1486 = vmatprep.subr.bf16.mxu0 %v966
    %1487 = vmatpush2.bf16.msra.mxu0 %v965
    %1488 = vmatprep.subr.bf16.mxu0 %v962
    %1489 = vmatpush2.bf16.msra.mxu0 %v961
    %1490 = vmatprep.subr.bf16.mxu0 %v958
    %1491 = vmatpush2.bf16.msra.mxu0 %v957
    %1492 = vmatprep.mubr.bf16.mxu0 %v49
    %1493 = vmatmul.mubr.bf16.gmra.mxu0 %v48
    %v1494 = vpop.f32.mrf.mxu0
    %v1495 = vadd.f32 %v1454, %v1494
    %v1496 = vpop.f32.mrf.mxu0
    %v1497 = vadd.f32 %v1456, %v1496
    %v1498 = vpop.f32.mrf.mxu0
    %v1499 = vpop.f32.mrf.mxu0
    %1500 = vdwg.mxu0
    %1501 = vmatprep.subr.bf16.mxu0 %v1018
    %1502 = vmatpush1.bf16.msra.mxu0 %v1017
    %1503 = vmatprep.subr.bf16.mxu0 %v1014
    %1504 = vmatpush1.bf16.msra.mxu0 %v1013
    %1505 = vmatprep.subr.bf16.mxu0 %v1010
    %1506 = vmatpush1.bf16.msra.mxu0 %v1009
    %1507 = vmatprep.subr.bf16.mxu0 %v1006
    %1508 = vmatpush1.bf16.msra.mxu0 %v1005
    %1509 = vmatprep.subr.bf16.mxu0 %v1002
    %1510 = vmatpush1.bf16.msra.mxu0 %v1001
    %1511 = vmatprep.subr.bf16.mxu0 %v998
    %1512 = vmatpush1.bf16.msra.mxu0 %v997
    %1513 = vmatprep.subr.bf16.mxu0 %v994
    %1514 = vmatpush1.bf16.msra.mxu0 %v993
    %1515 = vmatprep.subr.bf16.mxu0 %v990
    %1516 = vmatpush1.bf16.msra.mxu0 %v989
    %1517 = vmatprep.subr.bf16.mxu0 %v1050
    %1518 = vmatpush2.bf16.msra.mxu0 %v1049
    %1519 = vmatprep.subr.bf16.mxu0 %v1046
    %1520 = vmatpush2.bf16.msra.mxu0 %v1045
    %1521 = vmatprep.subr.bf16.mxu0 %v1042
    %1522 = vmatpush2.bf16.msra.mxu0 %v1041
    %1523 = vmatprep.subr.bf16.mxu0 %v1038
    %1524 = vmatpush2.bf16.msra.mxu0 %v1037
    %1525 = vmatprep.subr.bf16.mxu0 %v1034
    %1526 = vmatpush2.bf16.msra.mxu0 %v1033
    %1527 = vmatprep.subr.bf16.mxu0 %v1030
    %1528 = vmatpush2.bf16.msra.mxu0 %v1029
    %1529 = vmatprep.subr.bf16.mxu0 %v1026
    %1530 = vmatpush2.bf16.msra.mxu0 %v1025
    %1531 = vmatprep.subr.bf16.mxu0 %v1022
    %1532 = vmatpush2.bf16.msra.mxu0 %v1021
    %1533 = vmatprep.mubr.bf16.mxu0 %v51
    %1534 = vmatmul.mubr.bf16.gmra.mxu0 %v50
    %v1535 = vpop.f32.mrf.mxu0
    %v1536 = vadd.f32 %v1495, %v1535
    %v1537 = vpop.f32.mrf.mxu0
    %v1538 = vadd.f32 %v1497, %v1537
    %v1539 = vpop.f32.mrf.mxu0
    %v1540 = vpop.f32.mrf.mxu0
    %1541 = vdwg.mxu0
    %1542 = vmatprep.subr.bf16.mxu0 0
    %1543 = vmatpush1.bf16.msra.mxu0 0
    %1544 = vmatprep.subr.bf16.mxu0 0
    %1545 = vmatpush1.bf16.msra.mxu0 0
    %1546 = vmatprep.subr.bf16.mxu0 0
    %1547 = vmatpush1.bf16.msra.mxu0 0
    %1548 = vmatprep.subr.bf16.mxu0 0
    %1549 = vmatpush1.bf16.msra.mxu0 0
    %1550 = vmatprep.subr.bf16.mxu0 0
    %1551 = vmatpush1.bf16.msra.mxu0 0
    %1552 = vmatprep.subr.bf16.mxu0 0
    %1553 = vmatpush1.bf16.msra.mxu0 0
    %1554 = vmatprep.subr.bf16.mxu0 0
    %1555 = vmatpush1.bf16.msra.mxu0 0
    %1556 = vmatprep.subr.bf16.mxu0 %v1054
    %1557 = vmatpush1.bf16.msra.mxu0 %v1053
    %1558 = vmatprep.subr.bf16.mxu0 0
    %1559 = vmatpush2.bf16.msra.mxu0 0
    %1560 = vmatprep.subr.bf16.mxu0 0
    %1561 = vmatpush2.bf16.msra.mxu0 0
    %1562 = vmatprep.subr.bf16.mxu0 0
    %1563 = vmatpush2.bf16.msra.mxu0 0
    %1564 = vmatprep.subr.bf16.mxu0 0
    %1565 = vmatpush2.bf16.msra.mxu0 0
    %1566 = vmatprep.subr.bf16.mxu0 0
    %1567 = vmatpush2.bf16.msra.mxu0 0
    %1568 = vmatprep.subr.bf16.mxu0 0
    %1569 = vmatpush2.bf16.msra.mxu0 0
    %1570 = vmatprep.subr.bf16.mxu0 0
    %1571 = vmatpush2.bf16.msra.mxu0 0
    %1572 = vmatprep.subr.bf16.mxu0 0
    %1573 = vmatpush2.bf16.msra.mxu0 0
    %1574 = vmatprep.mubr.bf16.mxu0 0
    %1575 = vmatmul.mubr.bf16.gmra.mxu0 %v1253
    %v1576 = vpop.f32.mrf.mxu0
    %v1577 = vadd.f32 %v1536, %v1576
    %v1578 = vpop.f32.mrf.mxu0
    %v1579 = vadd.f32 %v1538, %v1578
    %v1580 = vpop.f32.mrf.mxu0
    %v1581 = vpop.f32.mrf.mxu0
    %1582 = vdwg.mxu0
    %v1583 = vmax.f32 %v1413, 0.0
    %v1584 = vmax.f32 %v1415, 0.0
    %v1585 = vmax.f32 %v1577, 0.0
    %v1586 = vmax.f32 %v1579, 0.0
    %v1587 = vpack.c.bf16 %v1583, %v1583
    %v1588 = vpack.c.bf16 %v1584, %v1584
    %v1589 = vpack.c.bf16 %v1585, %v1585
    %v1590 = vpack.c.bf16 %v1586, %v1586
    %v1591 = vld [vmem:[%s4] sm:$0xff]
    %v1592 = vld [vmem:[%s4 + $0x8] sm:$0xff]
    %v1593 = vld [vmem:[%s4 + $0x10] sm:$0xff]
    %v1594 = vld [vmem:[%s4 + $0x18] sm:$0xff]
    %v1595 = vld [vmem:[%s4 + $0x20] sm:$0xff]
    %v1596 = vld [vmem:[%s4 + $0x28] sm:$0xff]
    %v1597 = vld [vmem:[%s4 + $0x30] sm:$0xff]
    %v1598 = vld [vmem:[%s4 + $0x38] sm:$0xff]
    %v1599 = vld [vmem:[%s4 + $0x40] sm:$0xff]
    %v1600 = vld [vmem:[%s4 + $0x48] sm:$0xff]
    %v1601 = vld [vmem:[%s4 + $0x50] sm:$0xff]
    %v1602 = vld [vmem:[%s4 + $0x58] sm:$0xff]
    %v1603 = vld [vmem:[%s4 + $0x60] sm:$0xff]
    %v1604 = vld [vmem:[%s4 + $0x68] sm:$0xff]
    %v1605 = vld [vmem:[%s4 + $0x70] sm:$0xff]
    %v1606 = vld [vmem:[%s4 + $0x78] sm:$0xff]
    %v1607 = vld [vmem:[%s4 + $0x80] sm:$0xff]
    %v1608 = vld [vmem:[%s4 + $0x88] sm:$0xff]
    %v1609 = vld [vmem:[%s4 + $0x90] sm:$0xff]
    %v1610 = vld [vmem:[%s4 + $0x98] sm:$0xff]
    %v1611 = vld [vmem:[%s4 + $0xa0] sm:$0xff]
    %v1612 = vld [vmem:[%s4 + $0xa8] sm:$0xff]
    %v1613 = vld [vmem:[%s4 + $0xb0] sm:$0xff]
    %v1614 = vld [vmem:[%s4 + $0xb8] sm:$0xff]
    %v1615 = vld [vmem:[%s4 + $0xc0] sm:$0xff]
    %v1616 = vld [vmem:[%s4 + $0xc8] sm:$0xff]
    %v1617 = vld [vmem:[%s4 + $0xd0] sm:$0xff]
    %v1618 = vld [vmem:[%s4 + $0xd8] sm:$0xff]
    %v1619 = vld [vmem:[%s4 + $0xe0] sm:$0xff]
    %v1620 = vld [vmem:[%s4 + $0xe8] sm:$0xff]
    %v1621 = vld [vmem:[%s4 + $0xf0] sm:$0xff]
    %v1622 = vld [vmem:[%s4 + $0xf8] sm:$0xff]
    %v1623 = vld [vmem:[%s4 + $0x100] sm:$0xff]
    %v1624 = vld [vmem:[%s4 + $0x108] sm:$0xff]
    %v1625 = vld [vmem:[%s4 + $0x110] sm:$0xff]
    %v1626 = vld [vmem:[%s4 + $0x118] sm:$0xff]
    %v1627 = vld [vmem:[%s4 + $0x120] sm:$0xff]
    %v1628 = vld [vmem:[%s4 + $0x128] sm:$0xff]
    %v1629 = vld [vmem:[%s4 + $0x130] sm:$0xff]
    %v1630 = vld [vmem:[%s4 + $0x138] sm:$0xff]
    %v1631 = vld [vmem:[%s4 + $0x140] sm:$0xff]
    %v1632 = vld [vmem:[%s4 + $0x148] sm:$0xff]
    %v1633 = vld [vmem:[%s4 + $0x150] sm:$0xff]
    %v1634 = vld [vmem:[%s4 + $0x158] sm:$0xff]
    %v1635 = vld [vmem:[%s4 + $0x160] sm:$0xff]
    %v1636 = vld [vmem:[%s4 + $0x168] sm:$0xff]
    %v1637 = vld [vmem:[%s4 + $0x170] sm:$0xff]
    %v1638 = vld [vmem:[%s4 + $0x178] sm:$0xff]
    %v1639 = vld [vmem:[%s4 + $0x180] sm:$0xff]
    %v1640 = vld [vmem:[%s4 + $0x188] sm:$0xff]
    %v1641 = vld [vmem:[%s4 + $0x190] sm:$0xff]
    %v1642 = vld [vmem:[%s4 + $0x198] sm:$0xff]
    %v1643 = vld [vmem:[%s4 + $0x1a0] sm:$0xff]
    %v1644 = vld [vmem:[%s4 + $0x1a8] sm:$0xff]
    %v1645 = vld [vmem:[%s4 + $0x1b0] sm:$0xff]
    %v1646 = vld [vmem:[%s4 + $0x1b8] sm:$0xff]
    %v1647 = vld [vmem:[%s4 + $0x1c0] sm:$0xff]
    %v1648 = vld [vmem:[%s4 + $0x1c8] sm:$0xff]
    %v1649 = vld [vmem:[%s4 + $0x1d0] sm:$0xff]
    %v1650 = vld [vmem:[%s4 + $0x1d8] sm:$0xff]
    %v1651 = vld [vmem:[%s4 + $0x1e0] sm:$0xff]
    %v1652 = vld [vmem:[%s4 + $0x1e8] sm:$0xff]
    %v1653 = vld [vmem:[%s4 + $0x1f0] sm:$0xff]
    %v1654 = vld [vmem:[%s4 + $0x1f8] sm:$0xff]
    %v1655 = vld [vmem:[%s5] sm:$0x3]
    %v1657 = vlaneseq
    %v1658 = vshrl.u32 %v1657, 7
    %v1659 = vsub.s32 0, %v1658
    %v1660 = vrot.slane %v1655, %v1659
    %v1661 = vlaneseq
    %v1662 = vshrl.u32 %v1661, 7
    %v1663 = vsub.s32 1, %v1662
    %v1664 = vrot.slane %v1655, %v1663
    %v1731 = vunpack.c.l.b16 %v1591
    %v1732 = vunpack.c.h.b16 %v1591
    %v1733 = vunpack.c.l.b16 %v1592
    %v1734 = vunpack.c.h.b16 %v1592
    %v1735 = vunpack.c.l.b16 %v1593
    %v1736 = vunpack.c.h.b16 %v1593
    %v1737 = vunpack.c.l.b16 %v1594
    %v1738 = vunpack.c.h.b16 %v1594
    %v1739 = vunpack.c.l.b16 %v1595
    %v1740 = vunpack.c.h.b16 %v1595
    %v1741 = vunpack.c.l.b16 %v1596
    %v1742 = vunpack.c.h.b16 %v1596
    %v1743 = vunpack.c.l.b16 %v1597
    %v1744 = vunpack.c.h.b16 %v1597
    %v1745 = vunpack.c.l.b16 %v1598
    %v1746 = vunpack.c.h.b16 %v1598
    %v1747 = vunpack.c.l.b16 %v1599
    %v1748 = vunpack.c.h.b16 %v1599
    %v1749 = vunpack.c.l.b16 %v1600
    %v1750 = vunpack.c.h.b16 %v1600
    %v1751 = vunpack.c.l.b16 %v1601
    %v1752 = vunpack.c.h.b16 %v1601
    %v1753 = vunpack.c.l.b16 %v1602
    %v1754 = vunpack.c.h.b16 %v1602
    %v1755 = vunpack.c.l.b16 %v1603
    %v1756 = vunpack.c.h.b16 %v1603
    %v1757 = vunpack.c.l.b16 %v1604
    %v1758 = vunpack.c.h.b16 %v1604
    %v1759 = vunpack.c.l.b16 %v1605
    %v1760 = vunpack.c.h.b16 %v1605
    %v1761 = vunpack.c.l.b16 %v1606
    %v1762 = vunpack.c.h.b16 %v1606
    %v1763 = vunpack.c.l.b16 %v1607
    %v1764 = vunpack.c.h.b16 %v1607
    %v1765 = vunpack.c.l.b16 %v1608
    %v1766 = vunpack.c.h.b16 %v1608
    %v1767 = vunpack.c.l.b16 %v1609
    %v1768 = vunpack.c.h.b16 %v1609
    %v1769 = vunpack.c.l.b16 %v1610
    %v1770 = vunpack.c.h.b16 %v1610
    %v1771 = vunpack.c.l.b16 %v1611
    %v1772 = vunpack.c.h.b16 %v1611
    %v1773 = vunpack.c.l.b16 %v1612
    %v1774 = vunpack.c.h.b16 %v1612
    %v1775 = vunpack.c.l.b16 %v1613
    %v1776 = vunpack.c.h.b16 %v1613
    %v1777 = vunpack.c.l.b16 %v1614
    %v1778 = vunpack.c.h.b16 %v1614
    %v1779 = vunpack.c.l.b16 %v1615
    %v1780 = vunpack.c.h.b16 %v1615
    %v1781 = vunpack.c.l.b16 %v1616
    %v1782 = vunpack.c.h.b16 %v1616
    %v1783 = vunpack.c.l.b16 %v1617
    %v1784 = vunpack.c.h.b16 %v1617
    %v1785 = vunpack.c.l.b16 %v1618
    %v1786 = vunpack.c.h.b16 %v1618
    %v1787 = vunpack.c.l.b16 %v1619
    %v1788 = vunpack.c.h.b16 %v1619
    %v1789 = vunpack.c.l.b16 %v1620
    %v1790 = vunpack.c.h.b16 %v1620
    %v1791 = vunpack.c.l.b16 %v1621
    %v1792 = vunpack.c.h.b16 %v1621
    %v1793 = vunpack.c.l.b16 %v1622
    %v1794 = vunpack.c.h.b16 %v1622
    %v1795 = vunpack.c.l.b16 %v1623
    %v1796 = vunpack.c.h.b16 %v1623
    %v1797 = vunpack.c.l.b16 %v1624
    %v1798 = vunpack.c.h.b16 %v1624
    %v1799 = vunpack.c.l.b16 %v1625
    %v1800 = vunpack.c.h.b16 %v1625
    %v1801 = vunpack.c.l.b16 %v1626
    %v1802 = vunpack.c.h.b16 %v1626
    %v1803 = vunpack.c.l.b16 %v1627
    %v1804 = vunpack.c.h.b16 %v1627
    %v1805 = vunpack.c.l.b16 %v1628
    %v1806 = vunpack.c.h.b16 %v1628
    %v1807 = vunpack.c.l.b16 %v1629
    %v1808 = vunpack.c.h.b16 %v1629
    %v1809 = vunpack.c.l.b16 %v1630
    %v1810 = vunpack.c.h.b16 %v1630
    %v1811 = vunpack.c.l.b16 %v1631
    %v1812 = vunpack.c.h.b16 %v1631
    %v1813 = vunpack.c.l.b16 %v1632
    %v1814 = vunpack.c.h.b16 %v1632
    %v1815 = vunpack.c.l.b16 %v1633
    %v1816 = vunpack.c.h.b16 %v1633
    %v1817 = vunpack.c.l.b16 %v1634
    %v1818 = vunpack.c.h.b16 %v1634
    %v1819 = vunpack.c.l.b16 %v1635
    %v1820 = vunpack.c.h.b16 %v1635
    %v1821 = vunpack.c.l.b16 %v1636
    %v1822 = vunpack.c.h.b16 %v1636
    %v1823 = vunpack.c.l.b16 %v1637
    %v1824 = vunpack.c.h.b16 %v1637
    %v1825 = vunpack.c.l.b16 %v1638
    %v1826 = vunpack.c.h.b16 %v1638
    %v1827 = vunpack.c.l.b16 %v1639
    %v1828 = vunpack.c.h.b16 %v1639
    %v1829 = vunpack.c.l.b16 %v1640
    %v1830 = vunpack.c.h.b16 %v1640
    %v1831 = vunpack.c.l.b16 %v1641
    %v1832 = vunpack.c.h.b16 %v1641
    %v1833 = vunpack.c.l.b16 %v1642
    %v1834 = vunpack.c.h.b16 %v1642
    %v1835 = vunpack.c.l.b16 %v1643
    %v1836 = vunpack.c.h.b16 %v1643
    %v1837 = vunpack.c.l.b16 %v1644
    %v1838 = vunpack.c.h.b16 %v1644
    %v1839 = vunpack.c.l.b16 %v1645
    %v1840 = vunpack.c.h.b16 %v1645
    %v1841 = vunpack.c.l.b16 %v1646
    %v1842 = vunpack.c.h.b16 %v1646
    %v1843 = vunpack.c.l.b16 %v1647
    %v1844 = vunpack.c.h.b16 %v1647
    %v1845 = vunpack.c.l.b16 %v1648
    %v1846 = vunpack.c.h.b16 %v1648
    %v1847 = vunpack.c.l.b16 %v1649
    %v1848 = vunpack.c.h.b16 %v1649
    %v1849 = vunpack.c.l.b16 %v1650
    %v1850 = vunpack.c.h.b16 %v1650
    %v1851 = vunpack.c.l.b16 %v1651
    %v1852 = vunpack.c.h.b16 %v1651
    %v1853 = vunpack.c.l.b16 %v1652
    %v1854 = vunpack.c.h.b16 %v1652
    %v1855 = vunpack.c.l.b16 %v1653
    %v1856 = vunpack.c.h.b16 %v1653
    %v1857 = vunpack.c.l.b16 %v1654
    %v1858 = vunpack.c.h.b16 %v1654
    %v1859 = vpack.c.b16 %v1733, %v1731
    %v1860 = vpack.c.b16 %v1734, %v1732
    %v1861 = vpack.c.b16 %v1737, %v1735
    %v1862 = vpack.c.b16 %v1738, %v1736
    %v1863 = vpack.c.b16 %v1741, %v1739
    %v1864 = vpack.c.b16 %v1742, %v1740
    %v1865 = vpack.c.b16 %v1745, %v1743
    %v1866 = vpack.c.b16 %v1746, %v1744
    %v1867 = vpack.c.b16 %v1749, %v1747
    %v1868 = vpack.c.b16 %v1750, %v1748
    %v1869 = vpack.c.b16 %v1753, %v1751
    %v1870 = vpack.c.b16 %v1754, %v1752
    %v1871 = vpack.c.b16 %v1757, %v1755
    %v1872 = vpack.c.b16 %v1758, %v1756
    %v1873 = vpack.c.b16 %v1761, %v1759
    %v1874 = vpack.c.b16 %v1762, %v1760
    %v1875 = vpack.c.b16 %v1765, %v1763
    %v1876 = vpack.c.b16 %v1766, %v1764
    %v1877 = vpack.c.b16 %v1769, %v1767
    %v1878 = vpack.c.b16 %v1770, %v1768
    %v1879 = vpack.c.b16 %v1773, %v1771
    %v1880 = vpack.c.b16 %v1774, %v1772
    %v1881 = vpack.c.b16 %v1777, %v1775
    %v1882 = vpack.c.b16 %v1778, %v1776
    %v1883 = vpack.c.b16 %v1781, %v1779
    %v1884 = vpack.c.b16 %v1782, %v1780
    %v1885 = vpack.c.b16 %v1785, %v1783
    %v1886 = vpack.c.b16 %v1786, %v1784
    %v1887 = vpack.c.b16 %v1789, %v1787
    %v1888 = vpack.c.b16 %v1790, %v1788
    %v1889 = vpack.c.b16 %v1793, %v1791
    %v1890 = vpack.c.b16 %v1794, %v1792
    %v1891 = vpack.c.b16 %v1797, %v1795
    %v1892 = vpack.c.b16 %v1798, %v1796
    %v1893 = vpack.c.b16 %v1801, %v1799
    %v1894 = vpack.c.b16 %v1802, %v1800
    %v1895 = vpack.c.b16 %v1805, %v1803
    %v1896 = vpack.c.b16 %v1806, %v1804
    %v1897 = vpack.c.b16 %v1809, %v1807
    %v1898 = vpack.c.b16 %v1810, %v1808
    %v1899 = vpack.c.b16 %v1813, %v1811
    %v1900 = vpack.c.b16 %v1814, %v1812
    %v1901 = vpack.c.b16 %v1817, %v1815
    %v1902 = vpack.c.b16 %v1818, %v1816
    %v1903 = vpack.c.b16 %v1821, %v1819
    %v1904 = vpack.c.b16 %v1822, %v1820
    %v1905 = vpack.c.b16 %v1825, %v1823
    %v1906 = vpack.c.b16 %v1826, %v1824
    %v1907 = vpack.c.b16 %v1829, %v1827
    %v1908 = vpack.c.b16 %v1830, %v1828
    %v1909 = vpack.c.b16 %v1833, %v1831
    %v1910 = vpack.c.b16 %v1834, %v1832
    %v1911 = vpack.c.b16 %v1837, %v1835
    %v1912 = vpack.c.b16 %v1838, %v1836
    %v1913 = vpack.c.b16 %v1841, %v1839
    %v1914 = vpack.c.b16 %v1842, %v1840
    %v1915 = vpack.c.b16 %v1845, %v1843
    %v1916 = vpack.c.b16 %v1846, %v1844
    %v1917 = vpack.c.b16 %v1849, %v1847
    %v1918 = vpack.c.b16 %v1850, %v1848
    %v1919 = vpack.c.b16 %v1853, %v1851
    %v1920 = vpack.c.b16 %v1854, %v1852
    %v1921 = vpack.c.b16 %v1857, %v1855
    %v1922 = vpack.c.b16 %v1858, %v1856
    %1987 = vmatprep.subr.bf16.mxu0 %v1874
    %1988 = vmatpush1.bf16.msra.mxu0 %v1873
    %1989 = vmatprep.subr.bf16.mxu0 %v1872
    %1990 = vmatpush1.bf16.msra.mxu0 %v1871
    %1991 = vmatprep.subr.bf16.mxu0 %v1870
    %1992 = vmatpush1.bf16.msra.mxu0 %v1869
    %1993 = vmatprep.subr.bf16.mxu0 %v1868
    %1994 = vmatpush1.bf16.msra.mxu0 %v1867
    %1995 = vmatprep.subr.bf16.mxu0 %v1866
    %1996 = vmatpush1.bf16.msra.mxu0 %v1865
    %1997 = vmatprep.subr.bf16.mxu0 %v1864
    %1998 = vmatpush1.bf16.msra.mxu0 %v1863
    %1999 = vmatprep.subr.bf16.mxu0 %v1862
    %2000 = vmatpush1.bf16.msra.mxu0 %v1861
    %2001 = vmatprep.subr.bf16.mxu0 %v1860
    %2002 = vmatpush1.bf16.msra.mxu0 %v1859
    %2003 = vmatprep.subr.bf16.mxu0 %v1890
    %2004 = vmatpush2.bf16.msra.mxu0 %v1889
    %2005 = vmatprep.subr.bf16.mxu0 %v1888
    %2006 = vmatpush2.bf16.msra.mxu0 %v1887
    %2007 = vmatprep.subr.bf16.mxu0 %v1886
    %2008 = vmatpush2.bf16.msra.mxu0 %v1885
    %2009 = vmatprep.subr.bf16.mxu0 %v1884
    %2010 = vmatpush2.bf16.msra.mxu0 %v1883
    %2011 = vmatprep.subr.bf16.mxu0 %v1882
    %2012 = vmatpush2.bf16.msra.mxu0 %v1881
    %2013 = vmatprep.subr.bf16.mxu0 %v1880
    %2014 = vmatpush2.bf16.msra.mxu0 %v1879
    %2015 = vmatprep.subr.bf16.mxu0 %v1878
    %2016 = vmatpush2.bf16.msra.mxu0 %v1877
    %2017 = vmatprep.subr.bf16.mxu0 %v1876
    %2018 = vmatpush2.bf16.msra.mxu0 %v1875
    %2019 = vmatprep.mubr.bf16.mxu0 %v1588
    %2020 = vmatmul.mubr.bf16.gmra.mxu0 %v1587
    %v2021 = vpop.f32.mrf.mxu0
    %v2022 = vadd.f32 %v1660, %v2021
    %v2023 = vpop.f32.mrf.mxu0
    %v2024 = vadd.f32 %v1664, %v2023
    %v2025 = vpop.f32.mrf.mxu0
    %v2026 = vpop.f32.mrf.mxu0
    %2027 = vdwg.mxu0
    %2028 = vmatprep.subr.bf16.mxu0 %v1906
    %2029 = vmatpush1.bf16.msra.mxu0 %v1905
    %2030 = vmatprep.subr.bf16.mxu0 %v1904
    %2031 = vmatpush1.bf16.msra.mxu0 %v1903
    %2032 = vmatprep.subr.bf16.mxu0 %v1902
    %2033 = vmatpush1.bf16.msra.mxu0 %v1901
    %2034 = vmatprep.subr.bf16.mxu0 %v1900
    %2035 = vmatpush1.bf16.msra.mxu0 %v1899
    %2036 = vmatprep.subr.bf16.mxu0 %v1898
    %2037 = vmatpush1.bf16.msra.mxu0 %v1897
    %2038 = vmatprep.subr.bf16.mxu0 %v1896
    %2039 = vmatpush1.bf16.msra.mxu0 %v1895
    %2040 = vmatprep.subr.bf16.mxu0 %v1894
    %2041 = vmatpush1.bf16.msra.mxu0 %v1893
    %2042 = vmatprep.subr.bf16.mxu0 %v1892
    %2043 = vmatpush1.bf16.msra.mxu0 %v1891
    %2044 = vmatprep.subr.bf16.mxu0 %v1922
    %2045 = vmatpush2.bf16.msra.mxu0 %v1921
    %2046 = vmatprep.subr.bf16.mxu0 %v1920
    %2047 = vmatpush2.bf16.msra.mxu0 %v1919
    %2048 = vmatprep.subr.bf16.mxu0 %v1918
    %2049 = vmatpush2.bf16.msra.mxu0 %v1917
    %2050 = vmatprep.subr.bf16.mxu0 %v1916
    %2051 = vmatpush2.bf16.msra.mxu0 %v1915
    %2052 = vmatprep.subr.bf16.mxu0 %v1914
    %2053 = vmatpush2.bf16.msra.mxu0 %v1913
    %2054 = vmatprep.subr.bf16.mxu0 %v1912
    %2055 = vmatpush2.bf16.msra.mxu0 %v1911
    %2056 = vmatprep.subr.bf16.mxu0 %v1910
    %2057 = vmatpush2.bf16.msra.mxu0 %v1909
    %2058 = vmatprep.subr.bf16.mxu0 %v1908
    %2059 = vmatpush2.bf16.msra.mxu0 %v1907
    %2060 = vmatprep.mubr.bf16.mxu0 %v1590
    %2061 = vmatmul.mubr.bf16.gmra.mxu0 %v1589
    %v2062 = vpop.f32.mrf.mxu0
    %v2063 = vadd.f32 %v2022, %v2062
    %v2064 = vpop.f32.mrf.mxu0
    %v2065 = vadd.f32 %v2024, %v2064
    %v2066 = vpop.f32.mrf.mxu0
    %v2067 = vpop.f32.mrf.mxu0
    %2068 = vdwg.mxu0
    %v2069 = vld [vmem:[%s1] sm:$0xff]
    %v2070 = vmul.f32 %v2065, 0.5
    %v2071 = vmul.f32 %v2070, 1.442695
    %v2072 = vpow.pop %v2071
    %v2073 = vmul.f32 %v2069, %v2072
    %v2074 = vadd.f32 %v2063, %v2073
    %v2075 = vpack.c.bf16 %v2074, %v2074
    %v2076 = vld [vmem:[%s6] sm:$0xff]
    %v2077 = vld [vmem:[%s6 + $0x8] sm:$0xff]
    %v2078 = vld [vmem:[%s6 + $0x10] sm:$0xff]
    %v2079 = vld [vmem:[%s6 + $0x18] sm:$0xff]
    %v2080 = vld [vmem:[%s6 + $0x20] sm:$0xff]
    %v2081 = vld [vmem:[%s6 + $0x28] sm:$0xff]
    %v2082 = vld [vmem:[%s6 + $0x30] sm:$0xff]
    %v2083 = vld [vmem:[%s6 + $0x38] sm:$0xff]
    %v2084 = vld [vmem:[%s6 + $0x40] sm:$0xff]
    %v2085 = vld [vmem:[%s6 + $0x48] sm:$0xff]
    %v2086 = vld [vmem:[%s6 + $0x50] sm:$0xff]
    %v2087 = vld [vmem:[%s6 + $0x58] sm:$0xff]
    %v2088 = vld [vmem:[%s6 + $0x60] sm:$0xff]
    %v2089 = vld [vmem:[%s6 + $0x68] sm:$0xff]
    %v2090 = vld [vmem:[%s6 + $0x70] sm:$0xff]
    %v2091 = vld [vmem:[%s6 + $0x78] sm:$0xff]
    %v2092 = vld [vmem:[%s6 + $0x80] sm:$0xff]
    %v2093 = vld [vmem:[%s6 + $0x88] sm:$0xff]
    %v2094 = vld [vmem:[%s6 + $0x90] sm:$0xff]
    %v2095 = vld [vmem:[%s6 + $0x98] sm:$0xff]
    %v2096 = vld [vmem:[%s6 + $0xa0] sm:$0xff]
    %v2097 = vld [vmem:[%s6 + $0xa8] sm:$0xff]
    %v2098 = vld [vmem:[%s6 + $0xb0] sm:$0xff]
    %v2099 = vld [vmem:[%s6 + $0xb8] sm:$0xff]
    %v2100 = vld [vmem:[%s6 + $0xc0] sm:$0xff]
    %v2101 = vld [vmem:[%s6 + $0xc8] sm:$0xff]
    %v2102 = vld [vmem:[%s6 + $0xd0] sm:$0xff]
    %v2103 = vld [vmem:[%s6 + $0xd8] sm:$0xff]
    %v2104 = vld [vmem:[%s6 + $0xe0] sm:$0xff]
    %v2105 = vld [vmem:[%s6 + $0xe8] sm:$0xff]
    %v2106 = vld [vmem:[%s6 + $0xf0] sm:$0xff]
    %v2107 = vld [vmem:[%s6 + $0xf8] sm:$0xff]
    %v2108 = vld [vmem:[%s7] sm:$0xf]
    %v2110 = vlaneseq
    %v2111 = vshrl.u32 %v2110, 7
    %v2112 = vsub.s32 0, %v2111
    %v2113 = vrot.slane %v2108, %v2112
    %v2114 = vlaneseq
    %v2115 = vshrl.u32 %v2114, 7
    %v2116 = vsub.s32 1, %v2115
    %v2117 = vrot.slane %v2108, %v2116
    %v2118 = vlaneseq
    %v2119 = vshrl.u32 %v2118, 7
    %v2120 = vsub.s32 2, %v2119
    %v2121 = vrot.slane %v2108, %v2120
    %v2122 = vlaneseq
    %v2123 = vshrl.u32 %v2122, 7
    %v2124 = vsub.s32 3, %v2123
    %v2125 = vrot.slane %v2108, %v2124
    %v2162 = vunpack.c.l.b16 %v2076
    %v2163 = vunpack.c.h.b16 %v2076
    %v2164 = vunpack.c.l.b16 %v2077
    %v2165 = vunpack.c.h.b16 %v2077
    %v2166 = vunpack.c.l.b16 %v2078
    %v2167 = vunpack.c.h.b16 %v2078
    %v2168 = vunpack.c.l.b16 %v2079
    %v2169 = vunpack.c.h.b16 %v2079
    %v2170 = vunpack.c.l.b16 %v2080
    %v2171 = vunpack.c.h.b16 %v2080
    %v2172 = vunpack.c.l.b16 %v2081
    %v2173 = vunpack.c.h.b16 %v2081
    %v2174 = vunpack.c.l.b16 %v2082
    %v2175 = vunpack.c.h.b16 %v2082
    %v2176 = vunpack.c.l.b16 %v2083
    %v2177 = vunpack.c.h.b16 %v2083
    %v2178 = vunpack.c.l.b16 %v2084
    %v2179 = vunpack.c.h.b16 %v2084
    %v2180 = vunpack.c.l.b16 %v2085
    %v2181 = vunpack.c.h.b16 %v2085
    %v2182 = vunpack.c.l.b16 %v2086
    %v2183 = vunpack.c.h.b16 %v2086
    %v2184 = vunpack.c.l.b16 %v2087
    %v2185 = vunpack.c.h.b16 %v2087
    %v2186 = vunpack.c.l.b16 %v2088
    %v2187 = vunpack.c.h.b16 %v2088
    %v2188 = vunpack.c.l.b16 %v2089
    %v2189 = vunpack.c.h.b16 %v2089
    %v2190 = vunpack.c.l.b16 %v2090
    %v2191 = vunpack.c.h.b16 %v2090
    %v2192 = vunpack.c.l.b16 %v2091
    %v2193 = vunpack.c.h.b16 %v2091
    %v2194 = vunpack.c.l.b16 %v2092
    %v2195 = vunpack.c.h.b16 %v2092
    %v2196 = vunpack.c.l.b16 %v2093
    %v2197 = vunpack.c.h.b16 %v2093
    %v2198 = vunpack.c.l.b16 %v2094
    %v2199 = vunpack.c.h.b16 %v2094
    %v2200 = vunpack.c.l.b16 %v2095
    %v2201 = vunpack.c.h.b16 %v2095
    %v2202 = vunpack.c.l.b16 %v2096
    %v2203 = vunpack.c.h.b16 %v2096
    %v2204 = vunpack.c.l.b16 %v2097
    %v2205 = vunpack.c.h.b16 %v2097
    %v2206 = vunpack.c.l.b16 %v2098
    %v2207 = vunpack.c.h.b16 %v2098
    %v2208 = vunpack.c.l.b16 %v2099
    %v2209 = vunpack.c.h.b16 %v2099
    %v2210 = vunpack.c.l.b16 %v2100
    %v2211 = vunpack.c.h.b16 %v2100
    %v2212 = vunpack.c.l.b16 %v2101
    %v2213 = vunpack.c.h.b16 %v2101
    %v2214 = vunpack.c.l.b16 %v2102
    %v2215 = vunpack.c.h.b16 %v2102
    %v2216 = vunpack.c.l.b16 %v2103
    %v2217 = vunpack.c.h.b16 %v2103
    %v2218 = vunpack.c.l.b16 %v2104
    %v2219 = vunpack.c.h.b16 %v2104
    %v2220 = vunpack.c.l.b16 %v2105
    %v2221 = vunpack.c.h.b16 %v2105
    %v2222 = vunpack.c.l.b16 %v2106
    %v2223 = vunpack.c.h.b16 %v2106
    %v2224 = vunpack.c.l.b16 %v2107
    %v2225 = vunpack.c.h.b16 %v2107
    %v2226 = vpack.c.b16 %v2166, %v2162
    %v2227 = vpack.c.b16 %v2167, %v2163
    %v2228 = vpack.c.b16 %v2168, %v2164
    %v2229 = vpack.c.b16 %v2169, %v2165
    %v2230 = vpack.c.b16 %v2174, %v2170
    %v2231 = vpack.c.b16 %v2175, %v2171
    %v2232 = vpack.c.b16 %v2176, %v2172
    %v2233 = vpack.c.b16 %v2177, %v2173
    %v2234 = vpack.c.b16 %v2182, %v2178
    %v2235 = vpack.c.b16 %v2183, %v2179
    %v2236 = vpack.c.b16 %v2184, %v2180
    %v2237 = vpack.c.b16 %v2185, %v2181
    %v2238 = vpack.c.b16 %v2190, %v2186
    %v2239 = vpack.c.b16 %v2191, %v2187
    %v2240 = vpack.c.b16 %v2192, %v2188
    %v2241 = vpack.c.b16 %v2193, %v2189
    %v2242 = vpack.c.b16 %v2198, %v2194
    %v2243 = vpack.c.b16 %v2199, %v2195
    %v2244 = vpack.c.b16 %v2200, %v2196
    %v2245 = vpack.c.b16 %v2201, %v2197
    %v2246 = vpack.c.b16 %v2206, %v2202
    %v2247 = vpack.c.b16 %v2207, %v2203
    %v2248 = vpack.c.b16 %v2208, %v2204
    %v2249 = vpack.c.b16 %v2209, %v2205
    %v2250 = vpack.c.b16 %v2214, %v2210
    %v2251 = vpack.c.b16 %v2215, %v2211
    %v2252 = vpack.c.b16 %v2216, %v2212
    %v2253 = vpack.c.b16 %v2217, %v2213
    %v2254 = vpack.c.b16 %v2222, %v2218
    %v2255 = vpack.c.b16 %v2223, %v2219
    %v2256 = vpack.c.b16 %v2224, %v2220
    %v2257 = vpack.c.b16 %v2225, %v2221
    %2290 = vmatprep.subr.bf16.mxu0 %v2255
    %2291 = vmatpush1.bf16.msra.mxu0 %v2254
    %2292 = vmatprep.subr.bf16.mxu0 %v2251
    %2293 = vmatpush1.bf16.msra.mxu0 %v2250
    %2294 = vmatprep.subr.bf16.mxu0 %v2247
    %2295 = vmatpush1.bf16.msra.mxu0 %v2246
    %2296 = vmatprep.subr.bf16.mxu0 %v2243
    %2297 = vmatpush1.bf16.msra.mxu0 %v2242
    %2298 = vmatprep.subr.bf16.mxu0 %v2239
    %2299 = vmatpush1.bf16.msra.mxu0 %v2238
    %2300 = vmatprep.subr.bf16.mxu0 %v2235
    %2301 = vmatpush1.bf16.msra.mxu0 %v2234
    %2302 = vmatprep.subr.bf16.mxu0 %v2231
    %2303 = vmatpush1.bf16.msra.mxu0 %v2230
    %2304 = vmatprep.subr.bf16.mxu0 %v2227
    %2305 = vmatpush1.bf16.msra.mxu0 %v2226
    %2306 = vmatprep.subr.bf16.mxu0 0
    %2307 = vmatpush2.bf16.msra.mxu0 0
    %2308 = vmatprep.subr.bf16.mxu0 0
    %2309 = vmatpush2.bf16.msra.mxu0 0
    %2310 = vmatprep.subr.bf16.mxu0 0
    %2311 = vmatpush2.bf16.msra.mxu0 0
    %2312 = vmatprep.subr.bf16.mxu0 0
    %2313 = vmatpush2.bf16.msra.mxu0 0
    %2314 = vmatprep.subr.bf16.mxu0 0
    %2315 = vmatpush2.bf16.msra.mxu0 0
    %2316 = vmatprep.subr.bf16.mxu0 0
    %2317 = vmatpush2.bf16.msra.mxu0 0
    %2318 = vmatprep.subr.bf16.mxu0 0
    %2319 = vmatpush2.bf16.msra.mxu0 0
    %2320 = vmatprep.subr.bf16.mxu0 0
    %2321 = vmatpush2.bf16.msra.mxu0 0
    %2322 = vmatprep.mubr.bf16.mxu0 0
    %2323 = vmatmul.mubr.bf16.gmra.mxu0 %v2075
    %v2324 = vpop.f32.mrf.mxu0
    %v2325 = vadd.f32 %v2113, %v2324
    %v2326 = vpop.f32.mrf.mxu0
    %v2327 = vadd.f32 %v2117, %v2326
    %v2328 = vpop.f32.mrf.mxu0
    %v2329 = vpop.f32.mrf.mxu0
    %2330 = vdwg.mxu0
    %2331 = vmatprep.subr.bf16.mxu0 %v2257
    %2332 = vmatpush1.bf16.msra.mxu0 %v2256
    %2333 = vmatprep.subr.bf16.mxu0 %v2253
    %2334 = vmatpush1.bf16.msra.mxu0 %v2252
    %2335 = vmatprep.subr.bf16.mxu0 %v2249
    %2336 = vmatpush1.bf16.msra.mxu0 %v2248
    %2337 = vmatprep.subr.bf16.mxu0 %v2245
    %2338 = vmatpush1.bf16.msra.mxu0 %v2244
    %2339 = vmatprep.subr.bf16.mxu0 %v2241
    %2340 = vmatpush1.bf16.msra.mxu0 %v2240
    %2341 = vmatprep.subr.bf16.mxu0 %v2237
    %2342 = vmatpush1.bf16.msra.mxu0 %v2236
    %2343 = vmatprep.subr.bf16.mxu0 %v2233
    %2344 = vmatpush1.bf16.msra.mxu0 %v2232
    %2345 = vmatprep.subr.bf16.mxu0 %v2229
    %2346 = vmatpush1.bf16.msra.mxu0 %v2228
    %2347 = vmatprep.subr.bf16.mxu0 0
    %2348 = vmatpush2.bf16.msra.mxu0 0
    %2349 = vmatprep.subr.bf16.mxu0 0
    %2350 = vmatpush2.bf16.msra.mxu0 0
    %2351 = vmatprep.subr.bf16.mxu0 0
    %2352 = vmatpush2.bf16.msra.mxu0 0
    %2353 = vmatprep.subr.bf16.mxu0 0
    %2354 = vmatpush2.bf16.msra.mxu0 0
    %2355 = vmatprep.subr.bf16.mxu0 0
    %2356 = vmatpush2.bf16.msra.mxu0 0
    %2357 = vmatprep.subr.bf16.mxu0 0
    %2358 = vmatpush2.bf16.msra.mxu0 0
    %2359 = vmatprep.subr.bf16.mxu0 0
    %2360 = vmatpush2.bf16.msra.mxu0 0
    %2361 = vmatprep.subr.bf16.mxu0 0
    %2362 = vmatpush2.bf16.msra.mxu0 0
    %2363 = vmatprep.mubr.bf16.mxu0 0
    %2364 = vmatmul.mubr.bf16.gmra.mxu0 %v2075
    %v2365 = vpop.f32.mrf.mxu0
    %v2366 = vadd.f32 %v2121, %v2365
    %v2367 = vpop.f32.mrf.mxu0
    %v2368 = vadd.f32 %v2125, %v2367
    %v2369 = vpop.f32.mrf.mxu0
    %v2370 = vpop.f32.mrf.mxu0
    %2371 = vdwg.mxu0
    %v2372 = vmax.f32 %v2325, 0.0
    %v2373 = vmax.f32 %v2327, 0.0
    %v2374 = vmax.f32 %v2366, 0.0
    %v2375 = vmax.f32 %v2368, 0.0
    %v2376 = vpack.c.bf16 %v2372, %v2372
    %v2377 = vpack.c.bf16 %v2373, %v2373
    %v2378 = vpack.c.bf16 %v2374, %v2374
    %v2379 = vpack.c.bf16 %v2375, %v2375
    %v2380 = vld [vmem:[%s8] sm:$0xff]
    %v2381 = vld [vmem:[%s8 + $0x8] sm:$0xff]
    %v2382 = vld [vmem:[%s8 + $0x10] sm:$0xff]
    %v2383 = vld [vmem:[%s8 + $0x18] sm:$0xff]
    %v2384 = vld [vmem:[%s8 + $0x20] sm:$0xff]
    %v2385 = vld [vmem:[%s8 + $0x28] sm:$0xff]
    %v2386 = vld [vmem:[%s8 + $0x30] sm:$0xf]
    %v2387 = vld [vmem:[%s8 + $0x34] sm:$0xff]
    %v2388 = vld [vmem:[%s8 + $0x3c] sm:$0xff]
    %v2389 = vld [vmem:[%s8 + $0x44] sm:$0xff]
    %v2390 = vld [vmem:[%s8 + $0x4c] sm:$0xff]
    %v2391 = vld [vmem:[%s8 + $0x54] sm:$0xff]
    %v2392 = vld [vmem:[%s8 + $0x5c] sm:$0xff]
    %v2393 = vld [vmem:[%s8 + $0x64] sm:$0xf]
    %v2394 = vld [vmem:[%s8 + $0x68] sm:$0xff]
    %v2395 = vld [vmem:[%s8 + $0x70] sm:$0xff]
    %v2396 = vld [vmem:[%s8 + $0x78] sm:$0xff]
    %v2397 = vld [vmem:[%s8 + $0x80] sm:$0xff]
    %v2398 = vld [vmem:[%s8 + $0x88] sm:$0xff]
    %v2399 = vld [vmem:[%s8 + $0x90] sm:$0xff]
    %v2400 = vld [vmem:[%s8 + $0x98] sm:$0xf]
    %v2401 = vld [vmem:[%s8 + $0x9c] sm:$0xff]
    %v2402 = vld [vmem:[%s8 + $0xa4] sm:$0xff]
    %v2403 = vld [vmem:[%s8 + $0xac] sm:$0xff]
    %v2404 = vld [vmem:[%s8 + $0xb4] sm:$0xff]
    %v2405 = vld [vmem:[%s8 + $0xbc] sm:$0xff]
    %v2406 = vld [vmem:[%s8 + $0xc4] sm:$0xff]
    %v2407 = vld [vmem:[%s8 + $0xcc] sm:$0xf]
    %v2408 = vld [vmem:[%s8 + $0xd0] sm:$0xff]
    %v2409 = vld [vmem:[%s8 + $0xd8] sm:$0xff]
    %v2410 = vld [vmem:[%s8 + $0xe0] sm:$0xff]
    %v2411 = vld [vmem:[%s8 + $0xe8] sm:$0xff]
    %v2412 = vld [vmem:[%s8 + $0xf0] sm:$0xff]
    %v2413 = vld [vmem:[%s8 + $0xf8] sm:$0xff]
    %v2414 = vld [vmem:[%s8 + $0x100] sm:$0xf]
    %v2415 = vld [vmem:[%s8 + $0x104] sm:$0xff]
    %v2416 = vld [vmem:[%s8 + $0x10c] sm:$0xff]
    %v2417 = vld [vmem:[%s8 + $0x114] sm:$0xff]
    %v2418 = vld [vmem:[%s8 + $0x11c] sm:$0xff]
    %v2419 = vld [vmem:[%s8 + $0x124] sm:$0xff]
    %v2420 = vld [vmem:[%s8 + $0x12c] sm:$0xff]
    %v2421 = vld [vmem:[%s8 + $0x134] sm:$0xf]
    %v2422 = vld [vmem:[%s8 + $0x138] sm:$0xff]
    %v2423 = vld [vmem:[%s8 + $0x140] sm:$0xff]
    %v2424 = vld [vmem:[%s8 + $0x148] sm:$0xff]
    %v2425 = vld [vmem:[%s8 + $0x150] sm:$0xff]
    %v2426 = vld [vmem:[%s8 + $0x158] sm:$0xff]
    %v2427 = vld [vmem:[%s8 + $0x160] sm:$0xff]
    %v2428 = vld [vmem:[%s8 + $0x168] sm:$0xf]
    %v2429 = vld [vmem:[%s8 + $0x16c] sm:$0xff]
    %v2430 = vld [vmem:[%s8 + $0x174] sm:$0xff]
    %v2431 = vld [vmem:[%s8 + $0x17c] sm:$0xff]
    %v2432 = vld [vmem:[%s8 + $0x184] sm:$0xff]
    %v2433 = vld [vmem:[%s8 + $0x18c] sm:$0xff]
    %v2434 = vld [vmem:[%s8 + $0x194] sm:$0xff]
    %v2435 = vld [vmem:[%s8 + $0x19c] sm:$0xf]
    %v2436 = vld [vmem:[%s8 + $0x1a0] sm:$0xff]
    %v2437 = vld [vmem:[%s8 + $0x1a8] sm:$0xff]
    %v2438 = vld [vmem:[%s8 + $0x1b0] sm:$0xff]
    %v2439 = vld [vmem:[%s8 + $0x1b8] sm:$0xff]
    %v2440 = vld [vmem:[%s8 + $0x1c0] sm:$0xff]
    %v2441 = vld [vmem:[%s8 + $0x1c8] sm:$0xff]
    %v2442 = vld [vmem:[%s8 + $0x1d0] sm:$0xf]
    %v2443 = vld [vmem:[%s8 + $0x1d4] sm:$0xff]
    %v2444 = vld [vmem:[%s8 + $0x1dc] sm:$0xff]
    %v2445 = vld [vmem:[%s8 + $0x1e4] sm:$0xff]
    %v2446 = vld [vmem:[%s8 + $0x1ec] sm:$0xff]
    %v2447 = vld [vmem:[%s8 + $0x1f4] sm:$0xff]
    %v2448 = vld [vmem:[%s8 + $0x1fc] sm:$0xff]
    %v2449 = vld [vmem:[%s8 + $0x204] sm:$0xf]
    %v2450 = vld [vmem:[%s8 + $0x208] sm:$0xff]
    %v2451 = vld [vmem:[%s8 + $0x210] sm:$0xff]
    %v2452 = vld [vmem:[%s8 + $0x218] sm:$0xff]
    %v2453 = vld [vmem:[%s8 + $0x220] sm:$0xff]
    %v2454 = vld [vmem:[%s8 + $0x228] sm:$0xff]
    %v2455 = vld [vmem:[%s8 + $0x230] sm:$0xff]
    %v2456 = vld [vmem:[%s8 + $0x238] sm:$0xf]
    %v2457 = vld [vmem:[%s8 + $0x23c] sm:$0xff]
    %v2458 = vld [vmem:[%s8 + $0x244] sm:$0xff]
    %v2459 = vld [vmem:[%s8 + $0x24c] sm:$0xff]
    %v2460 = vld [vmem:[%s8 + $0x254] sm:$0xff]
    %v2461 = vld [vmem:[%s8 + $0x25c] sm:$0xff]
    %v2462 = vld [vmem:[%s8 + $0x264] sm:$0xff]
    %v2463 = vld [vmem:[%s8 + $0x26c] sm:$0xf]
    %v2464 = vld [vmem:[%s8 + $0x270] sm:$0xff]
    %v2465 = vld [vmem:[%s8 + $0x278] sm:$0xff]
    %v2466 = vld [vmem:[%s8 + $0x280] sm:$0xff]
    %v2467 = vld [vmem:[%s8 + $0x288] sm:$0xff]
    %v2468 = vld [vmem:[%s8 + $0x290] sm:$0xff]
    %v2469 = vld [vmem:[%s8 + $0x298] sm:$0xff]
    %v2470 = vld [vmem:[%s8 + $0x2a0] sm:$0xf]
    %v2471 = vld [vmem:[%s8 + $0x2a4] sm:$0xff]
    %v2472 = vld [vmem:[%s8 + $0x2ac] sm:$0xff]
    %v2473 = vld [vmem:[%s8 + $0x2b4] sm:$0xff]
    %v2474 = vld [vmem:[%s8 + $0x2bc] sm:$0xff]
    %v2475 = vld [vmem:[%s8 + $0x2c4] sm:$0xff]
    %v2476 = vld [vmem:[%s8 + $0x2cc] sm:$0xff]
    %v2477 = vld [vmem:[%s8 + $0x2d4] sm:$0xf]
    %v2478 = vld [vmem:[%s8 + $0x2d8] sm:$0xff]
    %v2479 = vld [vmem:[%s8 + $0x2e0] sm:$0xff]
    %v2480 = vld [vmem:[%s8 + $0x2e8] sm:$0xff]
    %v2481 = vld [vmem:[%s8 + $0x2f0] sm:$0xff]
    %v2482 = vld [vmem:[%s8 + $0x2f8] sm:$0xff]
    %v2483 = vld [vmem:[%s8 + $0x300] sm:$0xff]
    %v2484 = vld [vmem:[%s8 + $0x308] sm:$0xf]
    %v2485 = vld [vmem:[%s8 + $0x30c] sm:$0xff]
    %v2486 = vld [vmem:[%s8 + $0x314] sm:$0xff]
    %v2487 = vld [vmem:[%s8 + $0x31c] sm:$0xff]
    %v2488 = vld [vmem:[%s8 + $0x324] sm:$0xff]
    %v2489 = vld [vmem:[%s8 + $0x32c] sm:$0xff]
    %v2490 = vld [vmem:[%s8 + $0x334] sm:$0xff]
    %v2491 = vld [vmem:[%s8 + $0x33c] sm:$0xf]
    %v2492 = vld [vmem:[%s8 + $0x340] sm:$0xff]
    %v2493 = vld [vmem:[%s8 + $0x348] sm:$0xff]
    %v2494 = vld [vmem:[%s8 + $0x350] sm:$0xff]
    %v2495 = vld [vmem:[%s8 + $0x358] sm:$0xff]
    %v2496 = vld [vmem:[%s8 + $0x360] sm:$0xff]
    %v2497 = vld [vmem:[%s8 + $0x368] sm:$0xff]
    %v2498 = vld [vmem:[%s8 + $0x370] sm:$0xf]
    %v2499 = vld [vmem:[%s8 + $0x374] sm:$0xff]
    %v2500 = vld [vmem:[%s8 + $0x37c] sm:$0xff]
    %v2501 = vld [vmem:[%s8 + $0x384] sm:$0xff]
    %v2502 = vld [vmem:[%s8 + $0x38c] sm:$0xff]
    %v2503 = vld [vmem:[%s8 + $0x394] sm:$0xff]
    %v2504 = vld [vmem:[%s8 + $0x39c] sm:$0xff]
    %v2505 = vld [vmem:[%s8 + $0x3a4] sm:$0xf]
    %v2506 = vld [vmem:[%s8 + $0x3a8] sm:$0xff]
    %v2507 = vld [vmem:[%s8 + $0x3b0] sm:$0xff]
    %v2508 = vld [vmem:[%s8 + $0x3b8] sm:$0xff]
    %v2509 = vld [vmem:[%s8 + $0x3c0] sm:$0xff]
    %v2510 = vld [vmem:[%s8 + $0x3c8] sm:$0xff]
    %v2511 = vld [vmem:[%s8 + $0x3d0] sm:$0xff]
    %v2512 = vld [vmem:[%s8 + $0x3d8] sm:$0xf]
    %v2513 = vld [vmem:[%s8 + $0x3dc] sm:$0xff]
    %v2514 = vld [vmem:[%s8 + $0x3e4] sm:$0xff]
    %v2515 = vld [vmem:[%s8 + $0x3ec] sm:$0xff]
    %v2516 = vld [vmem:[%s8 + $0x3f4] sm:$0xff]
    %v2517 = vld [vmem:[%s8 + $0x3fc] sm:$0xff]
    %v2518 = vld [vmem:[%s8 + $0x404] sm:$0xff]
    %v2519 = vld [vmem:[%s8 + $0x40c] sm:$0xf]
    %v2520 = vld [vmem:[%s8 + $0x410] sm:$0xff]
    %v2521 = vld [vmem:[%s8 + $0x418] sm:$0xff]
    %v2522 = vld [vmem:[%s8 + $0x420] sm:$0xff]
    %v2523 = vld [vmem:[%s8 + $0x428] sm:$0xff]
    %v2524 = vld [vmem:[%s8 + $0x430] sm:$0xff]
    %v2525 = vld [vmem:[%s8 + $0x438] sm:$0xff]
    %v2526 = vld [vmem:[%s8 + $0x440] sm:$0xf]
    %v2527 = vld [vmem:[%s8 + $0x444] sm:$0xff]
    %v2528 = vld [vmem:[%s8 + $0x44c] sm:$0xff]
    %v2529 = vld [vmem:[%s8 + $0x454] sm:$0xff]
    %v2530 = vld [vmem:[%s8 + $0x45c] sm:$0xff]
    %v2531 = vld [vmem:[%s8 + $0x464] sm:$0xff]
    %v2532 = vld [vmem:[%s8 + $0x46c] sm:$0xff]
    %v2533 = vld [vmem:[%s8 + $0x474] sm:$0xf]
    %v2534 = vld [vmem:[%s8 + $0x478] sm:$0xff]
    %v2535 = vld [vmem:[%s8 + $0x480] sm:$0xff]
    %v2536 = vld [vmem:[%s8 + $0x488] sm:$0xff]
    %v2537 = vld [vmem:[%s8 + $0x490] sm:$0xff]
    %v2538 = vld [vmem:[%s8 + $0x498] sm:$0xff]
    %v2539 = vld [vmem:[%s8 + $0x4a0] sm:$0xff]
    %v2540 = vld [vmem:[%s8 + $0x4a8] sm:$0xf]
    %v2541 = vld [vmem:[%s8 + $0x4ac] sm:$0xff]
    %v2542 = vld [vmem:[%s8 + $0x4b4] sm:$0xff]
    %v2543 = vld [vmem:[%s8 + $0x4bc] sm:$0xff]
    %v2544 = vld [vmem:[%s8 + $0x4c4] sm:$0xff]
    %v2545 = vld [vmem:[%s8 + $0x4cc] sm:$0xff]
    %v2546 = vld [vmem:[%s8 + $0x4d4] sm:$0xff]
    %v2547 = vld [vmem:[%s8 + $0x4dc] sm:$0xf]
    %v2548 = vld [vmem:[%s8 + $0x4e0] sm:$0xff]
    %v2549 = vld [vmem:[%s8 + $0x4e8] sm:$0xff]
    %v2550 = vld [vmem:[%s8 + $0x4f0] sm:$0xff]
    %v2551 = vld [vmem:[%s8 + $0x4f8] sm:$0xff]
    %v2552 = vld [vmem:[%s8 + $0x500] sm:$0xff]
    %v2553 = vld [vmem:[%s8 + $0x508] sm:$0xff]
    %v2554 = vld [vmem:[%s8 + $0x510] sm:$0xf]
    %v2555 = vld [vmem:[%s8 + $0x514] sm:$0xff]
    %v2556 = vld [vmem:[%s8 + $0x51c] sm:$0xff]
    %v2557 = vld [vmem:[%s8 + $0x524] sm:$0xff]
    %v2558 = vld [vmem:[%s8 + $0x52c] sm:$0xff]
    %v2559 = vld [vmem:[%s8 + $0x534] sm:$0xff]
    %v2560 = vld [vmem:[%s8 + $0x53c] sm:$0xff]
    %v2561 = vld [vmem:[%s8 + $0x544] sm:$0xf]
    %v2562 = vld [vmem:[%s8 + $0x548] sm:$0xff]
    %v2563 = vld [vmem:[%s8 + $0x550] sm:$0xff]
    %v2564 = vld [vmem:[%s8 + $0x558] sm:$0xff]
    %v2565 = vld [vmem:[%s8 + $0x560] sm:$0xff]
    %v2566 = vld [vmem:[%s8 + $0x568] sm:$0xff]
    %v2567 = vld [vmem:[%s8 + $0x570] sm:$0xff]
    %v2568 = vld [vmem:[%s8 + $0x578] sm:$0xf]
    %v2569 = vld [vmem:[%s8 + $0x57c] sm:$0xff]
    %v2570 = vld [vmem:[%s8 + $0x584] sm:$0xff]
    %v2571 = vld [vmem:[%s8 + $0x58c] sm:$0xff]
    %v2572 = vld [vmem:[%s8 + $0x594] sm:$0xff]
    %v2573 = vld [vmem:[%s8 + $0x59c] sm:$0xff]
    %v2574 = vld [vmem:[%s8 + $0x5a4] sm:$0xff]
    %v2575 = vld [vmem:[%s8 + $0x5ac] sm:$0xf]
    %v2576 = vld [vmem:[%s8 + $0x5b0] sm:$0xff]
    %v2577 = vld [vmem:[%s8 + $0x5b8] sm:$0xff]
    %v2578 = vld [vmem:[%s8 + $0x5c0] sm:$0xff]
    %v2579 = vld [vmem:[%s8 + $0x5c8] sm:$0xff]
    %v2580 = vld [vmem:[%s8 + $0x5d0] sm:$0xff]
    %v2581 = vld [vmem:[%s8 + $0x5d8] sm:$0xff]
    %v2582 = vld [vmem:[%s8 + $0x5e0] sm:$0xf]
    %v2583 = vld [vmem:[%s8 + $0x5e4] sm:$0xff]
    %v2584 = vld [vmem:[%s8 + $0x5ec] sm:$0xff]
    %v2585 = vld [vmem:[%s8 + $0x5f4] sm:$0xff]
    %v2586 = vld [vmem:[%s8 + $0x5fc] sm:$0xff]
    %v2587 = vld [vmem:[%s8 + $0x604] sm:$0xff]
    %v2588 = vld [vmem:[%s8 + $0x60c] sm:$0xff]
    %v2589 = vld [vmem:[%s8 + $0x614] sm:$0xf]
    %v2590 = vld [vmem:[%s8 + $0x618] sm:$0xff]
    %v2591 = vld [vmem:[%s8 + $0x620] sm:$0xff]
    %v2592 = vld [vmem:[%s8 + $0x628] sm:$0xff]
    %v2593 = vld [vmem:[%s8 + $0x630] sm:$0xff]
    %v2594 = vld [vmem:[%s8 + $0x638] sm:$0xff]
    %v2595 = vld [vmem:[%s8 + $0x640] sm:$0xff]
    %v2596 = vld [vmem:[%s8 + $0x648] sm:$0xf]
    %v2597 = vld [vmem:[%s8 + $0x64c] sm:$0xff]
    %v2598 = vld [vmem:[%s8 + $0x654] sm:$0xff]
    %v2599 = vld [vmem:[%s8 + $0x65c] sm:$0xff]
    %v2600 = vld [vmem:[%s8 + $0x664] sm:$0xff]
    %v2601 = vld [vmem:[%s8 + $0x66c] sm:$0xff]
    %v2602 = vld [vmem:[%s8 + $0x674] sm:$0xff]
    %v2603 = vld [vmem:[%s8 + $0x67c] sm:$0xf]
    %v2604 = vld [vmem:[%s8 + $0x680] sm:$0xff]
    %v2605 = vld [vmem:[%s8 + $0x688] sm:$0xff]
    %v2606 = vld [vmem:[%s8 + $0x690] sm:$0xff]
    %v2607 = vld [vmem:[%s8 + $0x698] sm:$0xff]
    %v2608 = vld [vmem:[%s8 + $0x6a0] sm:$0xff]
    %v2609 = vld [vmem:[%s8 + $0x6a8] sm:$0xff]
    %v2610 = vld [vmem:[%s8 + $0x6b0] sm:$0xf]
    %v2611 = vld [vmem:[%s8 + $0x6b4] sm:$0xff]
    %v2612 = vld [vmem:[%s8 + $0x6bc] sm:$0xff]
    %v2613 = vld [vmem:[%s8 + $0x6c4] sm:$0xff]
    %v2614 = vld [vmem:[%s8 + $0x6cc] sm:$0xff]
    %v2615 = vld [vmem:[%s8 + $0x6d4] sm:$0xff]
    %v2616 = vld [vmem:[%s8 + $0x6dc] sm:$0xff]
    %v2617 = vld [vmem:[%s8 + $0x6e4] sm:$0xf]
    %v2618 = vld [vmem:[%s8 + $0x6e8] sm:$0xff]
    %v2619 = vld [vmem:[%s8 + $0x6f0] sm:$0xff]
    %v2620 = vld [vmem:[%s8 + $0x6f8] sm:$0xff]
    %v2621 = vld [vmem:[%s8 + $0x700] sm:$0xff]
    %v2622 = vld [vmem:[%s8 + $0x708] sm:$0xff]
    %v2623 = vld [vmem:[%s8 + $0x710] sm:$0xff]
    %v2624 = vld [vmem:[%s8 + $0x718] sm:$0xf]
    %v2625 = vld [vmem:[%s8 + $0x71c] sm:$0xff]
    %v2626 = vld [vmem:[%s8 + $0x724] sm:$0xff]
    %v2627 = vld [vmem:[%s8 + $0x72c] sm:$0xff]
    %v2628 = vld [vmem:[%s8 + $0x734] sm:$0xff]
    %v2629 = vld [vmem:[%s8 + $0x73c] sm:$0xff]
    %v2630 = vld [vmem:[%s8 + $0x744] sm:$0xff]
    %v2631 = vld [vmem:[%s8 + $0x74c] sm:$0xf]
    %v2632 = vld [vmem:[%s8 + $0x750] sm:$0xff]
    %v2633 = vld [vmem:[%s8 + $0x758] sm:$0xff]
    %v2634 = vld [vmem:[%s8 + $0x760] sm:$0xff]
    %v2635 = vld [vmem:[%s8 + $0x768] sm:$0xff]
    %v2636 = vld [vmem:[%s8 + $0x770] sm:$0xff]
    %v2637 = vld [vmem:[%s8 + $0x778] sm:$0xff]
    %v2638 = vld [vmem:[%s8 + $0x780] sm:$0xf]
    %v2639 = vld [vmem:[%s8 + $0x784] sm:$0xff]
    %v2640 = vld [vmem:[%s8 + $0x78c] sm:$0xff]
    %v2641 = vld [vmem:[%s8 + $0x794] sm:$0xff]
    %v2642 = vld [vmem:[%s8 + $0x79c] sm:$0xff]
    %v2643 = vld [vmem:[%s8 + $0x7a4] sm:$0xff]
    %v2644 = vld [vmem:[%s8 + $0x7ac] sm:$0xff]
    %v2645 = vld [vmem:[%s8 + $0x7b4] sm:$0xf]
    %v2646 = vld [vmem:[%s8 + $0x7b8] sm:$0xff]
    %v2647 = vld [vmem:[%s8 + $0x7c0] sm:$0xff]
    %v2648 = vld [vmem:[%s8 + $0x7c8] sm:$0xff]
    %v2649 = vld [vmem:[%s8 + $0x7d0] sm:$0xff]
    %v2650 = vld [vmem:[%s8 + $0x7d8] sm:$0xff]
    %v2651 = vld [vmem:[%s8 + $0x7e0] sm:$0xff]
    %v2652 = vld [vmem:[%s8 + $0x7e8] sm:$0xf]
    %v2653 = vld [vmem:[%s8 + $0x7ec] sm:$0xff]
    %v2654 = vld [vmem:[%s8 + $0x7f4] sm:$0xff]
    %v2655 = vld [vmem:[%s8 + $0x7fc] sm:$0xff]
    %v2656 = vld [vmem:[%s8 + $0x804] sm:$0xff]
    %v2657 = vld [vmem:[%s8 + $0x80c] sm:$0xff]
    %v2658 = vld [vmem:[%s8 + $0x814] sm:$0xff]
    %v2659 = vld [vmem:[%s8 + $0x81c] sm:$0xf]
    %v2660 = vld [vmem:[%s8 + $0x820] sm:$0xff]
    %v2661 = vld [vmem:[%s8 + $0x828] sm:$0xff]
    %v2662 = vld [vmem:[%s8 + $0x830] sm:$0xff]
    %v2663 = vld [vmem:[%s8 + $0x838] sm:$0xff]
    %v2664 = vld [vmem:[%s8 + $0x840] sm:$0xff]
    %v2665 = vld [vmem:[%s8 + $0x848] sm:$0xff]
    %v2666 = vld [vmem:[%s8 + $0x850] sm:$0xf]
    %v2667 = vld [vmem:[%s8 + $0x854] sm:$0xff]
    %v2668 = vld [vmem:[%s8 + $0x85c] sm:$0xff]
    %v2669 = vld [vmem:[%s8 + $0x864] sm:$0xff]
    %v2670 = vld [vmem:[%s8 + $0x86c] sm:$0xff]
    %v2671 = vld [vmem:[%s8 + $0x874] sm:$0xff]
    %v2672 = vld [vmem:[%s8 + $0x87c] sm:$0xff]
    %v2673 = vld [vmem:[%s8 + $0x884] sm:$0xf]
    %v2674 = vld [vmem:[%s8 + $0x888] sm:$0xff]
    %v2675 = vld [vmem:[%s8 + $0x890] sm:$0xff]
    %v2676 = vld [vmem:[%s8 + $0x898] sm:$0xff]
    %v2677 = vld [vmem:[%s8 + $0x8a0] sm:$0xff]
    %v2678 = vld [vmem:[%s8 + $0x8a8] sm:$0xff]
    %v2679 = vld [vmem:[%s8 + $0x8b0] sm:$0xff]
    %v2680 = vld [vmem:[%s8 + $0x8b8] sm:$0xf]
    %v2681 = vld [vmem:[%s8 + $0x8bc] sm:$0xff]
    %v2682 = vld [vmem:[%s8 + $0x8c4] sm:$0xff]
    %v2683 = vld [vmem:[%s8 + $0x8cc] sm:$0xff]
    %v2684 = vld [vmem:[%s8 + $0x8d4] sm:$0xff]
    %v2685 = vld [vmem:[%s8 + $0x8dc] sm:$0xff]
    %v2686 = vld [vmem:[%s8 + $0x8e4] sm:$0xff]
    %v2687 = vld [vmem:[%s8 + $0x8ec] sm:$0xf]
    %v2688 = vld [vmem:[%s8 + $0x8f0] sm:$0xff]
    %v2689 = vld [vmem:[%s8 + $0x8f8] sm:$0xff]
    %v2690 = vld [vmem:[%s8 + $0x900] sm:$0xff]
    %v2691 = vld [vmem:[%s8 + $0x908] sm:$0xff]
    %v2692 = vld [vmem:[%s8 + $0x910] sm:$0xff]
    %v2693 = vld [vmem:[%s8 + $0x918] sm:$0xff]
    %v2694 = vld [vmem:[%s8 + $0x920] sm:$0xf]
    %v2695 = vld [vmem:[%s8 + $0x924] sm:$0xff]
    %v2696 = vld [vmem:[%s8 + $0x92c] sm:$0xff]
    %v2697 = vld [vmem:[%s8 + $0x934] sm:$0xff]
    %v2698 = vld [vmem:[%s8 + $0x93c] sm:$0xff]
    %v2699 = vld [vmem:[%s8 + $0x944] sm:$0xff]
    %v2700 = vld [vmem:[%s8 + $0x94c] sm:$0xff]
    %v2701 = vld [vmem:[%s8 + $0x954] sm:$0xf]
    %v2702 = vld [vmem:[%s8 + $0x958] sm:$0xff]
    %v2703 = vld [vmem:[%s8 + $0x960] sm:$0xff]
    %v2704 = vld [vmem:[%s8 + $0x968] sm:$0xff]
    %v2705 = vld [vmem:[%s8 + $0x970] sm:$0xff]
    %v2706 = vld [vmem:[%s8 + $0x978] sm:$0xff]
    %v2707 = vld [vmem:[%s8 + $0x980] sm:$0xff]
    %v2708 = vld [vmem:[%s8 + $0x988] sm:$0xf]
    %v2709 = vld [vmem:[%s8 + $0x98c] sm:$0xff]
    %v2710 = vld [vmem:[%s8 + $0x994] sm:$0xff]
    %v2711 = vld [vmem:[%s8 + $0x99c] sm:$0xff]
    %v2712 = vld [vmem:[%s8 + $0x9a4] sm:$0xff]
    %v2713 = vld [vmem:[%s8 + $0x9ac] sm:$0xff]
    %v2714 = vld [vmem:[%s8 + $0x9b4] sm:$0xff]
    %v2715 = vld [vmem:[%s8 + $0x9bc] sm:$0xf]
    %v2716 = vld [vmem:[%s8 + $0x9c0] sm:$0xff]
    %v2717 = vld [vmem:[%s8 + $0x9c8] sm:$0xff]
    %v2718 = vld [vmem:[%s8 + $0x9d0] sm:$0xff]
    %v2719 = vld [vmem:[%s8 + $0x9d8] sm:$0xff]
    %v2720 = vld [vmem:[%s8 + $0x9e0] sm:$0xff]
    %v2721 = vld [vmem:[%s8 + $0x9e8] sm:$0xff]
    %v2722 = vld [vmem:[%s8 + $0x9f0] sm:$0xf]
    %v2723 = vld [vmem:[%s8 + $0x9f4] sm:$0xff]
    %v2724 = vld [vmem:[%s8 + $0x9fc] sm:$0xff]
    %v2725 = vld [vmem:[%s8 + $0xa04] sm:$0xff]
    %v2726 = vld [vmem:[%s8 + $0xa0c] sm:$0xff]
    %v2727 = vld [vmem:[%s8 + $0xa14] sm:$0xff]
    %v2728 = vld [vmem:[%s8 + $0xa1c] sm:$0xff]
    %v2729 = vld [vmem:[%s8 + $0xa24] sm:$0xf]
    %v2730 = vld [vmem:[%s8 + $0xa28] sm:$0xff]
    %v2731 = vld [vmem:[%s8 + $0xa30] sm:$0xff]
    %v2732 = vld [vmem:[%s8 + $0xa38] sm:$0xff]
    %v2733 = vld [vmem:[%s8 + $0xa40] sm:$0xff]
    %v2734 = vld [vmem:[%s8 + $0xa48] sm:$0xff]
    %v2735 = vld [vmem:[%s8 + $0xa50] sm:$0xff]
    %v2736 = vld [vmem:[%s8 + $0xa58] sm:$0xf]
    %v2737 = vld [vmem:[%s8 + $0xa5c] sm:$0xff]
    %v2738 = vld [vmem:[%s8 + $0xa64] sm:$0xff]
    %v2739 = vld [vmem:[%s8 + $0xa6c] sm:$0xff]
    %v2740 = vld [vmem:[%s8 + $0xa74] sm:$0xff]
    %v2741 = vld [vmem:[%s8 + $0xa7c] sm:$0xff]
    %v2742 = vld [vmem:[%s8 + $0xa84] sm:$0xff]
    %v2743 = vld [vmem:[%s8 + $0xa8c] sm:$0xf]
    %v2744 = vld [vmem:[%s8 + $0xa90] sm:$0xff]
    %v2745 = vld [vmem:[%s8 + $0xa98] sm:$0xff]
    %v2746 = vld [vmem:[%s8 + $0xaa0] sm:$0xff]
    %v2747 = vld [vmem:[%s8 + $0xaa8] sm:$0xff]
    %v2748 = vld [vmem:[%s8 + $0xab0] sm:$0xff]
    %v2749 = vld [vmem:[%s8 + $0xab8] sm:$0xff]
    %v2750 = vld [vmem:[%s8 + $0xac0] sm:$0xf]
    %v2751 = vld [vmem:[%s8 + $0xac4] sm:$0xff]
    %v2752 = vld [vmem:[%s8 + $0xacc] sm:$0xff]
    %v2753 = vld [vmem:[%s8 + $0xad4] sm:$0xff]
    %v2754 = vld [vmem:[%s8 + $0xadc] sm:$0xff]
    %v2755 = vld [vmem:[%s8 + $0xae4] sm:$0xff]
    %v2756 = vld [vmem:[%s8 + $0xaec] sm:$0xff]
    %v2757 = vld [vmem:[%s8 + $0xaf4] sm:$0xf]
    %v2758 = vld [vmem:[%s8 + $0xaf8] sm:$0xff]
    %v2759 = vld [vmem:[%s8 + $0xb00] sm:$0xff]
    %v2760 = vld [vmem:[%s8 + $0xb08] sm:$0xff]
    %v2761 = vld [vmem:[%s8 + $0xb10] sm:$0xff]
    %v2762 = vld [vmem:[%s8 + $0xb18] sm:$0xff]
    %v2763 = vld [vmem:[%s8 + $0xb20] sm:$0xff]
    %v2764 = vld [vmem:[%s8 + $0xb28] sm:$0xf]
    %v2765 = vld [vmem:[%s8 + $0xb2c] sm:$0xff]
    %v2766 = vld [vmem:[%s8 + $0xb34] sm:$0xff]
    %v2767 = vld [vmem:[%s8 + $0xb3c] sm:$0xff]
    %v2768 = vld [vmem:[%s8 + $0xb44] sm:$0xff]
    %v2769 = vld [vmem:[%s8 + $0xb4c] sm:$0xff]
    %v2770 = vld [vmem:[%s8 + $0xb54] sm:$0xff]
    %v2771 = vld [vmem:[%s8 + $0xb5c] sm:$0xf]
    %v2772 = vld [vmem:[%s8 + $0xb60] sm:$0xff]
    %v2773 = vld [vmem:[%s8 + $0xb68] sm:$0xff]
    %v2774 = vld [vmem:[%s8 + $0xb70] sm:$0xff]
    %v2775 = vld [vmem:[%s8 + $0xb78] sm:$0xff]
    %v2776 = vld [vmem:[%s8 + $0xb80] sm:$0xff]
    %v2777 = vld [vmem:[%s8 + $0xb88] sm:$0xff]
    %v2778 = vld [vmem:[%s8 + $0xb90] sm:$0xf]
    %v2779 = vld [vmem:[%s8 + $0xb94] sm:$0xff]
    %v2780 = vld [vmem:[%s8 + $0xb9c] sm:$0xff]
    %v2781 = vld [vmem:[%s8 + $0xba4] sm:$0xff]
    %v2782 = vld [vmem:[%s8 + $0xbac] sm:$0xff]
    %v2783 = vld [vmem:[%s8 + $0xbb4] sm:$0xff]
    %v2784 = vld [vmem:[%s8 + $0xbbc] sm:$0xff]
    %v2785 = vld [vmem:[%s8 + $0xbc4] sm:$0xf]
    %v2786 = vld [vmem:[%s8 + $0xbc8] sm:$0xff]
    %v2787 = vld [vmem:[%s8 + $0xbd0] sm:$0xff]
    %v2788 = vld [vmem:[%s8 + $0xbd8] sm:$0xff]
    %v2789 = vld [vmem:[%s8 + $0xbe0] sm:$0xff]
    %v2790 = vld [vmem:[%s8 + $0xbe8] sm:$0xff]
    %v2791 = vld [vmem:[%s8 + $0xbf0] sm:$0xff]
    %v2792 = vld [vmem:[%s8 + $0xbf8] sm:$0xf]
    %v2793 = vld [vmem:[%s8 + $0xbfc] sm:$0xff]
    %v2794 = vld [vmem:[%s8 + $0xc04] sm:$0xff]
    %v2795 = vld [vmem:[%s8 + $0xc0c] sm:$0xff]
    %v2796 = vld [vmem:[%s8 + $0xc14] sm:$0xff]
    %v2797 = vld [vmem:[%s8 + $0xc1c] sm:$0xff]
    %v2798 = vld [vmem:[%s8 + $0xc24] sm:$0xff]
    %v2799 = vld [vmem:[%s8 + $0xc2c] sm:$0xf]
    %v2800 = vld [vmem:[%s8 + $0xc30] sm:$0xff]
    %v2801 = vld [vmem:[%s8 + $0xc38] sm:$0xff]
    %v2802 = vld [vmem:[%s8 + $0xc40] sm:$0xff]
    %v2803 = vld [vmem:[%s8 + $0xc48] sm:$0xff]
    %v2804 = vld [vmem:[%s8 + $0xc50] sm:$0xff]
    %v2805 = vld [vmem:[%s8 + $0xc58] sm:$0xff]
    %v2806 = vld [vmem:[%s8 + $0xc60] sm:$0xf]
    %v2807 = vld [vmem:[%s8 + $0xc64] sm:$0xff]
    %v2808 = vld [vmem:[%s8 + $0xc6c] sm:$0xff]
    %v2809 = vld [vmem:[%s8 + $0xc74] sm:$0xff]
    %v2810 = vld [vmem:[%s8 + $0xc7c] sm:$0xff]
    %v2811 = vld [vmem:[%s8 + $0xc84] sm:$0xff]
    %v2812 = vld [vmem:[%s8 + $0xc8c] sm:$0xff]
    %v2813 = vld [vmem:[%s8 + $0xc94] sm:$0xf]
    %v2814 = vld [vmem:[%s8 + $0xc98] sm:$0xff]
    %v2815 = vld [vmem:[%s8 + $0xca0] sm:$0xff]
    %v2816 = vld [vmem:[%s8 + $0xca8] sm:$0xff]
    %v2817 = vld [vmem:[%s8 + $0xcb0] sm:$0xff]
    %v2818 = vld [vmem:[%s8 + $0xcb8] sm:$0xff]
    %v2819 = vld [vmem:[%s8 + $0xcc0] sm:$0xff]
    %v2820 = vld [vmem:[%s8 + $0xcc8] sm:$0xf]
    %v2821 = vld [vmem:[%s8 + $0xccc] sm:$0xff]
    %v2822 = vld [vmem:[%s8 + $0xcd4] sm:$0xff]
    %v2823 = vld [vmem:[%s8 + $0xcdc] sm:$0xff]
    %v2824 = vld [vmem:[%s8 + $0xce4] sm:$0xff]
    %v2825 = vld [vmem:[%s8 + $0xcec] sm:$0xff]
    %v2826 = vld [vmem:[%s8 + $0xcf4] sm:$0xff]
    %v2827 = vld [vmem:[%s8 + $0xcfc] sm:$0xf]
    %v2828 = vld [vmem:[%s9] sm:$0xff]
    %v2829 = vld [vmem:[%s9 + $0x8] sm:$0x1f]
    %v2832 = vlaneseq
    %v2833 = vshrl.u32 %v2832, 7
    %v2834 = vsub.s32 0, %v2833
    %v2835 = vrot.slane %v2828, %v2834
    %v2836 = vlaneseq
    %v2837 = vshrl.u32 %v2836, 7
    %v2838 = vsub.s32 1, %v2837
    %v2839 = vrot.slane %v2828, %v2838
    %v2840 = vlaneseq
    %v2841 = vshrl.u32 %v2840, 7
    %v2842 = vsub.s32 2, %v2841
    %v2843 = vrot.slane %v2828, %v2842
    %v2844 = vlaneseq
    %v2845 = vshrl.u32 %v2844, 7
    %v2846 = vsub.s32 3, %v2845
    %v2847 = vrot.slane %v2828, %v2846
    %v2848 = vlaneseq
    %v2849 = vshrl.u32 %v2848, 7
    %v2850 = vsub.s32 4, %v2849
    %v2851 = vrot.slane %v2828, %v2850
    %v2852 = vlaneseq
    %v2853 = vshrl.u32 %v2852, 7
    %v2854 = vsub.s32 5, %v2853
    %v2855 = vrot.slane %v2828, %v2854
    %v2856 = vlaneseq
    %v2857 = vshrl.u32 %v2856, 7
    %v2858 = vsub.s32 6, %v2857
    %v2859 = vrot.slane %v2828, %v2858
    %v2860 = vlaneseq
    %v2861 = vshrl.u32 %v2860, 7
    %v2862 = vsub.s32 7, %v2861
    %v2863 = vrot.slane %v2828, %v2862
    %v2864 = vlaneseq
    %v2865 = vshrl.u32 %v2864, 7
    %v2866 = vsub.s32 0, %v2865
    %v2867 = vrot.slane %v2829, %v2866
    %v2868 = vlaneseq
    %v2869 = vshrl.u32 %v2868, 7
    %v2870 = vsub.s32 1, %v2869
    %v2871 = vrot.slane %v2829, %v2870
    %v2872 = vlaneseq
    %v2873 = vshrl.u32 %v2872, 7
    %v2874 = vsub.s32 2, %v2873
    %v2875 = vrot.slane %v2829, %v2874
    %v2876 = vlaneseq
    %v2877 = vshrl.u32 %v2876, 7
    %v2878 = vsub.s32 3, %v2877
    %v2879 = vrot.slane %v2829, %v2878
    %v2880 = vlaneseq
    %v2881 = vshrl.u32 %v2880, 7
    %v2882 = vsub.s32 4, %v2881
    %v2883 = vrot.slane %v2829, %v2882
    %v3345 = vunpack.c.l.b16 %v2380
    %v3346 = vunpack.c.h.b16 %v2380
    %v3347 = vunpack.c.l.b16 %v2381
    %v3348 = vunpack.c.h.b16 %v2381
    %v3349 = vunpack.c.l.b16 %v2382
    %v3350 = vunpack.c.h.b16 %v2382
    %v3351 = vunpack.c.l.b16 %v2383
    %v3352 = vunpack.c.h.b16 %v2383
    %v3353 = vunpack.c.l.b16 %v2384
    %v3354 = vunpack.c.h.b16 %v2384
    %v3355 = vunpack.c.l.b16 %v2385
    %v3356 = vunpack.c.h.b16 %v2385
    %v3357 = vunpack.c.l.b16 %v2386
    %v3358 = vunpack.c.l.b16 %v2387
    %v3359 = vunpack.c.h.b16 %v2387
    %v3360 = vunpack.c.l.b16 %v2388
    %v3361 = vunpack.c.h.b16 %v2388
    %v3362 = vunpack.c.l.b16 %v2389
    %v3363 = vunpack.c.h.b16 %v2389
    %v3364 = vunpack.c.l.b16 %v2390
    %v3365 = vunpack.c.h.b16 %v2390
    %v3366 = vunpack.c.l.b16 %v2391
    %v3367 = vunpack.c.h.b16 %v2391
    %v3368 = vunpack.c.l.b16 %v2392
    %v3369 = vunpack.c.h.b16 %v2392
    %v3370 = vunpack.c.l.b16 %v2393
    %v3371 = vunpack.c.l.b16 %v2394
    %v3372 = vunpack.c.h.b16 %v2394
    %v3373 = vunpack.c.l.b16 %v2395
    %v3374 = vunpack.c.h.b16 %v2395
    %v3375 = vunpack.c.l.b16 %v2396
    %v3376 = vunpack.c.h.b16 %v2396
    %v3377 = vunpack.c.l.b16 %v2397
    %v3378 = vunpack.c.h.b16 %v2397
    %v3379 = vunpack.c.l.b16 %v2398
    %v3380 = vunpack.c.h.b16 %v2398
    %v3381 = vunpack.c.l.b16 %v2399
    %v3382 = vunpack.c.h.b16 %v2399
    %v3383 = vunpack.c.l.b16 %v2400
    %v3384 = vunpack.c.l.b16 %v2401
    %v3385 = vunpack.c.h.b16 %v2401
    %v3386 = vunpack.c.l.b16 %v2402
    %v3387 = vunpack.c.h.b16 %v2402
    %v3388 = vunpack.c.l.b16 %v2403
    %v3389 = vunpack.c.h.b16 %v2403
    %v3390 = vunpack.c.l.b16 %v2404
    %v3391 = vunpack.c.h.b16 %v2404
    %v3392 = vunpack.c.l.b16 %v2405
    %v3393 = vunpack.c.h.b16 %v2405
    %v3394 = vunpack.c.l.b16 %v2406
    %v3395 = vunpack.c.h.b16 %v2406
    %v3396 = vunpack.c.l.b16 %v2407
    %v3397 = vunpack.c.l.b16 %v2408
    %v3398 = vunpack.c.h.b16 %v2408
    %v3399 = vunpack.c.l.b16 %v2409
    %v3400 = vunpack.c.h.b16 %v2409
    %v3401 = vunpack.c.l.b16 %v2410
    %v3402 = vunpack.c.h.b16 %v2410
    %v3403 = vunpack.c.l.b16 %v2411
    %v3404 = vunpack.c.h.b16 %v2411
    %v3405 = vunpack.c.l.b16 %v2412
    %v3406 = vunpack.c.h.b16 %v2412
    %v3407 = vunpack.c.l.b16 %v2413
    %v3408 = vunpack.c.h.b16 %v2413
    %v3409 = vunpack.c.l.b16 %v2414
    %v3410 = vunpack.c.l.b16 %v2415
    %v3411 = vunpack.c.h.b16 %v2415
    %v3412 = vunpack.c.l.b16 %v2416
    %v3413 = vunpack.c.h.b16 %v2416
    %v3414 = vunpack.c.l.b16 %v2417
    %v3415 = vunpack.c.h.b16 %v2417
    %v3416 = vunpack.c.l.b16 %v2418
    %v3417 = vunpack.c.h.b16 %v2418
    %v3418 = vunpack.c.l.b16 %v2419
    %v3419 = vunpack.c.h.b16 %v2419
    %v3420 = vunpack.c.l.b16 %v2420
    %v3421 = vunpack.c.h.b16 %v2420
    %v3422 = vunpack.c.l.b16 %v2421
    %v3423 = vunpack.c.l.b16 %v2422
    %v3424 = vunpack.c.h.b16 %v2422
    %v3425 = vunpack.c.l.b16 %v2423
    %v3426 = vunpack.c.h.b16 %v2423
    %v3427 = vunpack.c.l.b16 %v2424
    %v3428 = vunpack.c.h.b16 %v2424
    %v3429 = vunpack.c.l.b16 %v2425
    %v3430 = vunpack.c.h.b16 %v2425
    %v3431 = vunpack.c.l.b16 %v2426
    %v3432 = vunpack.c.h.b16 %v2426
    %v3433 = vunpack.c.l.b16 %v2427
    %v3434 = vunpack.c.h.b16 %v2427
    %v3435 = vunpack.c.l.b16 %v2428
    %v3436 = vunpack.c.l.b16 %v2429
    %v3437 = vunpack.c.h.b16 %v2429
    %v3438 = vunpack.c.l.b16 %v2430
    %v3439 = vunpack.c.h.b16 %v2430
    %v3440 = vunpack.c.l.b16 %v2431
    %v3441 = vunpack.c.h.b16 %v2431
    %v3442 = vunpack.c.l.b16 %v2432
    %v3443 = vunpack.c.h.b16 %v2432
    %v3444 = vunpack.c.l.b16 %v2433
    %v3445 = vunpack.c.h.b16 %v2433
    %v3446 = vunpack.c.l.b16 %v2434
    %v3447 = vunpack.c.h.b16 %v2434
    %v3448 = vunpack.c.l.b16 %v2435
    %v3449 = vunpack.c.l.b16 %v2436
    %v3450 = vunpack.c.h.b16 %v2436
    %v3451 = vunpack.c.l.b16 %v2437
    %v3452 = vunpack.c.h.b16 %v2437
    %v3453 = vunpack.c.l.b16 %v2438
    %v3454 = vunpack.c.h.b16 %v2438
    %v3455 = vunpack.c.l.b16 %v2439
    %v3456 = vunpack.c.h.b16 %v2439
    %v3457 = vunpack.c.l.b16 %v2440
    %v3458 = vunpack.c.h.b16 %v2440
    %v3459 = vunpack.c.l.b16 %v2441
    %v3460 = vunpack.c.h.b16 %v2441
    %v3461 = vunpack.c.l.b16 %v2442
    %v3462 = vunpack.c.l.b16 %v2443
    %v3463 = vunpack.c.h.b16 %v2443
    %v3464 = vunpack.c.l.b16 %v2444
    %v3465 = vunpack.c.h.b16 %v2444
    %v3466 = vunpack.c.l.b16 %v2445
    %v3467 = vunpack.c.h.b16 %v2445
    %v3468 = vunpack.c.l.b16 %v2446
    %v3469 = vunpack.c.h.b16 %v2446
    %v3470 = vunpack.c.l.b16 %v2447
    %v3471 = vunpack.c.h.b16 %v2447
    %v3472 = vunpack.c.l.b16 %v2448
    %v3473 = vunpack.c.h.b16 %v2448
    %v3474 = vunpack.c.l.b16 %v2449
    %v3475 = vunpack.c.l.b16 %v2450
    %v3476 = vunpack.c.h.b16 %v2450
    %v3477 = vunpack.c.l.b16 %v2451
    %v3478 = vunpack.c.h.b16 %v2451
    %v3479 = vunpack.c.l.b16 %v2452
    %v3480 = vunpack.c.h.b16 %v2452
    %v3481 = vunpack.c.l.b16 %v2453
    %v3482 = vunpack.c.h.b16 %v2453
    %v3483 = vunpack.c.l.b16 %v2454
    %v3484 = vunpack.c.h.b16 %v2454
    %v3485 = vunpack.c.l.b16 %v2455
    %v3486 = vunpack.c.h.b16 %v2455
    %v3487 = vunpack.c.l.b16 %v2456
    %v3488 = vunpack.c.l.b16 %v2457
    %v3489 = vunpack.c.h.b16 %v2457
    %v3490 = vunpack.c.l.b16 %v2458
    %v3491 = vunpack.c.h.b16 %v2458
    %v3492 = vunpack.c.l.b16 %v2459
    %v3493 = vunpack.c.h.b16 %v2459
    %v3494 = vunpack.c.l.b16 %v2460
    %v3495 = vunpack.c.h.b16 %v2460
    %v3496 = vunpack.c.l.b16 %v2461
    %v3497 = vunpack.c.h.b16 %v2461
    %v3498 = vunpack.c.l.b16 %v2462
    %v3499 = vunpack.c.h.b16 %v2462
    %v3500 = vunpack.c.l.b16 %v2463
    %v3501 = vunpack.c.l.b16 %v2464
    %v3502 = vunpack.c.h.b16 %v2464
    %v3503 = vunpack.c.l.b16 %v2465
    %v3504 = vunpack.c.h.b16 %v2465
    %v3505 = vunpack.c.l.b16 %v2466
    %v3506 = vunpack.c.h.b16 %v2466
    %v3507 = vunpack.c.l.b16 %v2467
    %v3508 = vunpack.c.h.b16 %v2467
    %v3509 = vunpack.c.l.b16 %v2468
    %v3510 = vunpack.c.h.b16 %v2468
    %v3511 = vunpack.c.l.b16 %v2469
    %v3512 = vunpack.c.h.b16 %v2469
    %v3513 = vunpack.c.l.b16 %v2470
    %v3514 = vunpack.c.l.b16 %v2471
    %v3515 = vunpack.c.h.b16 %v2471
    %v3516 = vunpack.c.l.b16 %v2472
    %v3517 = vunpack.c.h.b16 %v2472
    %v3518 = vunpack.c.l.b16 %v2473
    %v3519 = vunpack.c.h.b16 %v2473
    %v3520 = vunpack.c.l.b16 %v2474
    %v3521 = vunpack.c.h.b16 %v2474
    %v3522 = vunpack.c.l.b16 %v2475
    %v3523 = vunpack.c.h.b16 %v2475
    %v3524 = vunpack.c.l.b16 %v2476
    %v3525 = vunpack.c.h.b16 %v2476
    %v3526 = vunpack.c.l.b16 %v2477
    %v3527 = vunpack.c.l.b16 %v2478
    %v3528 = vunpack.c.h.b16 %v2478
    %v3529 = vunpack.c.l.b16 %v2479
    %v3530 = vunpack.c.h.b16 %v2479
    %v3531 = vunpack.c.l.b16 %v2480
    %v3532 = vunpack.c.h.b16 %v2480
    %v3533 = vunpack.c.l.b16 %v2481
    %v3534 = vunpack.c.h.b16 %v2481
    %v3535 = vunpack.c.l.b16 %v2482
    %v3536 = vunpack.c.h.b16 %v2482
    %v3537 = vunpack.c.l.b16 %v2483
    %v3538 = vunpack.c.h.b16 %v2483
    %v3539 = vunpack.c.l.b16 %v2484
    %v3540 = vunpack.c.l.b16 %v2485
    %v3541 = vunpack.c.h.b16 %v2485
    %v3542 = vunpack.c.l.b16 %v2486
    %v3543 = vunpack.c.h.b16 %v2486
    %v3544 = vunpack.c.l.b16 %v2487
    %v3545 = vunpack.c.h.b16 %v2487
    %v3546 = vunpack.c.l.b16 %v2488
    %v3547 = vunpack.c.h.b16 %v2488
    %v3548 = vunpack.c.l.b16 %v2489
    %v3549 = vunpack.c.h.b16 %v2489
    %v3550 = vunpack.c.l.b16 %v2490
    %v3551 = vunpack.c.h.b16 %v2490
    %v3552 = vunpack.c.l.b16 %v2491
    %v3553 = vunpack.c.l.b16 %v2492
    %v3554 = vunpack.c.h.b16 %v2492
    %v3555 = vunpack.c.l.b16 %v2493
    %v3556 = vunpack.c.h.b16 %v2493
    %v3557 = vunpack.c.l.b16 %v2494
    %v3558 = vunpack.c.h.b16 %v2494
    %v3559 = vunpack.c.l.b16 %v2495
    %v3560 = vunpack.c.h.b16 %v2495
    %v3561 = vunpack.c.l.b16 %v2496
    %v3562 = vunpack.c.h.b16 %v2496
    %v3563 = vunpack.c.l.b16 %v2497
    %v3564 = vunpack.c.h.b16 %v2497
    %v3565 = vunpack.c.l.b16 %v2498
    %v3566 = vunpack.c.l.b16 %v2499
    %v3567 = vunpack.c.h.b16 %v2499
    %v3568 = vunpack.c.l.b16 %v2500
    %v3569 = vunpack.c.h.b16 %v2500
    %v3570 = vunpack.c.l.b16 %v2501
    %v3571 = vunpack.c.h.b16 %v2501
    %v3572 = vunpack.c.l.b16 %v2502
    %v3573 = vunpack.c.h.b16 %v2502
    %v3574 = vunpack.c.l.b16 %v2503
    %v3575 = vunpack.c.h.b16 %v2503
    %v3576 = vunpack.c.l.b16 %v2504
    %v3577 = vunpack.c.h.b16 %v2504
    %v3578 = vunpack.c.l.b16 %v2505
    %v3579 = vunpack.c.l.b16 %v2506
    %v3580 = vunpack.c.h.b16 %v2506
    %v3581 = vunpack.c.l.b16 %v2507
    %v3582 = vunpack.c.h.b16 %v2507
    %v3583 = vunpack.c.l.b16 %v2508
    %v3584 = vunpack.c.h.b16 %v2508
    %v3585 = vunpack.c.l.b16 %v2509
    %v3586 = vunpack.c.h.b16 %v2509
    %v3587 = vunpack.c.l.b16 %v2510
    %v3588 = vunpack.c.h.b16 %v2510
    %v3589 = vunpack.c.l.b16 %v2511
    %v3590 = vunpack.c.h.b16 %v2511
    %v3591 = vunpack.c.l.b16 %v2512
    %v3592 = vunpack.c.l.b16 %v2513
    %v3593 = vunpack.c.h.b16 %v2513
    %v3594 = vunpack.c.l.b16 %v2514
    %v3595 = vunpack.c.h.b16 %v2514
    %v3596 = vunpack.c.l.b16 %v2515
    %v3597 = vunpack.c.h.b16 %v2515
    %v3598 = vunpack.c.l.b16 %v2516
    %v3599 = vunpack.c.h.b16 %v2516
    %v3600 = vunpack.c.l.b16 %v2517
    %v3601 = vunpack.c.h.b16 %v2517
    %v3602 = vunpack.c.l.b16 %v2518
    %v3603 = vunpack.c.h.b16 %v2518
    %v3604 = vunpack.c.l.b16 %v2519
    %v3605 = vunpack.c.l.b16 %v2520
    %v3606 = vunpack.c.h.b16 %v2520
    %v3607 = vunpack.c.l.b16 %v2521
    %v3608 = vunpack.c.h.b16 %v2521
    %v3609 = vunpack.c.l.b16 %v2522
    %v3610 = vunpack.c.h.b16 %v2522
    %v3611 = vunpack.c.l.b16 %v2523
    %v3612 = vunpack.c.h.b16 %v2523
    %v3613 = vunpack.c.l.b16 %v2524
    %v3614 = vunpack.c.h.b16 %v2524
    %v3615 = vunpack.c.l.b16 %v2525
    %v3616 = vunpack.c.h.b16 %v2525
    %v3617 = vunpack.c.l.b16 %v2526
    %v3618 = vunpack.c.l.b16 %v2527
    %v3619 = vunpack.c.h.b16 %v2527
    %v3620 = vunpack.c.l.b16 %v2528
    %v3621 = vunpack.c.h.b16 %v2528
    %v3622 = vunpack.c.l.b16 %v2529
    %v3623 = vunpack.c.h.b16 %v2529
    %v3624 = vunpack.c.l.b16 %v2530
    %v3625 = vunpack.c.h.b16 %v2530
    %v3626 = vunpack.c.l.b16 %v2531
    %v3627 = vunpack.c.h.b16 %v2531
    %v3628 = vunpack.c.l.b16 %v2532
    %v3629 = vunpack.c.h.b16 %v2532
    %v3630 = vunpack.c.l.b16 %v2533
    %v3631 = vunpack.c.l.b16 %v2534
    %v3632 = vunpack.c.h.b16 %v2534
    %v3633 = vunpack.c.l.b16 %v2535
    %v3634 = vunpack.c.h.b16 %v2535
    %v3635 = vunpack.c.l.b16 %v2536
    %v3636 = vunpack.c.h.b16 %v2536
    %v3637 = vunpack.c.l.b16 %v2537
    %v3638 = vunpack.c.h.b16 %v2537
    %v3639 = vunpack.c.l.b16 %v2538
    %v3640 = vunpack.c.h.b16 %v2538
    %v3641 = vunpack.c.l.b16 %v2539
    %v3642 = vunpack.c.h.b16 %v2539
    %v3643 = vunpack.c.l.b16 %v2540
    %v3644 = vunpack.c.l.b16 %v2541
    %v3645 = vunpack.c.h.b16 %v2541
    %v3646 = vunpack.c.l.b16 %v2542
    %v3647 = vunpack.c.h.b16 %v2542
    %v3648 = vunpack.c.l.b16 %v2543
    %v3649 = vunpack.c.h.b16 %v2543
    %v3650 = vunpack.c.l.b16 %v2544
    %v3651 = vunpack.c.h.b16 %v2544
    %v3652 = vunpack.c.l.b16 %v2545
    %v3653 = vunpack.c.h.b16 %v2545
    %v3654 = vunpack.c.l.b16 %v2546
    %v3655 = vunpack.c.h.b16 %v2546
    %v3656 = vunpack.c.l.b16 %v2547
    %v3657 = vunpack.c.l.b16 %v2548
    %v3658 = vunpack.c.h.b16 %v2548
    %v3659 = vunpack.c.l.b16 %v2549
    %v3660 = vunpack.c.h.b16 %v2549
    %v3661 = vunpack.c.l.b16 %v2550
    %v3662 = vunpack.c.h.b16 %v2550
    %v3663 = vunpack.c.l.b16 %v2551
    %v3664 = vunpack.c.h.b16 %v2551
    %v3665 = vunpack.c.l.b16 %v2552
    %v3666 = vunpack.c.h.b16 %v2552
    %v3667 = vunpack.c.l.b16 %v2553
    %v3668 = vunpack.c.h.b16 %v2553
    %v3669 = vunpack.c.l.b16 %v2554
    %v3670 = vunpack.c.l.b16 %v2555
    %v3671 = vunpack.c.h.b16 %v2555
    %v3672 = vunpack.c.l.b16 %v2556
    %v3673 = vunpack.c.h.b16 %v2556
    %v3674 = vunpack.c.l.b16 %v2557
    %v3675 = vunpack.c.h.b16 %v2557
    %v3676 = vunpack.c.l.b16 %v2558
    %v3677 = vunpack.c.h.b16 %v2558
    %v3678 = vunpack.c.l.b16 %v2559
    %v3679 = vunpack.c.h.b16 %v2559
    %v3680 = vunpack.c.l.b16 %v2560
    %v3681 = vunpack.c.h.b16 %v2560
    %v3682 = vunpack.c.l.b16 %v2561
    %v3683 = vunpack.c.l.b16 %v2562
    %v3684 = vunpack.c.h.b16 %v2562
    %v3685 = vunpack.c.l.b16 %v2563
    %v3686 = vunpack.c.h.b16 %v2563
    %v3687 = vunpack.c.l.b16 %v2564
    %v3688 = vunpack.c.h.b16 %v2564
    %v3689 = vunpack.c.l.b16 %v2565
    %v3690 = vunpack.c.h.b16 %v2565
    %v3691 = vunpack.c.l.b16 %v2566
    %v3692 = vunpack.c.h.b16 %v2566
    %v3693 = vunpack.c.l.b16 %v2567
    %v3694 = vunpack.c.h.b16 %v2567
    %v3695 = vunpack.c.l.b16 %v2568
    %v3696 = vunpack.c.l.b16 %v2569
    %v3697 = vunpack.c.h.b16 %v2569
    %v3698 = vunpack.c.l.b16 %v2570
    %v3699 = vunpack.c.h.b16 %v2570
    %v3700 = vunpack.c.l.b16 %v2571
    %v3701 = vunpack.c.h.b16 %v2571
    %v3702 = vunpack.c.l.b16 %v2572
    %v3703 = vunpack.c.h.b16 %v2572
    %v3704 = vunpack.c.l.b16 %v2573
    %v3705 = vunpack.c.h.b16 %v2573
    %v3706 = vunpack.c.l.b16 %v2574
    %v3707 = vunpack.c.h.b16 %v2574
    %v3708 = vunpack.c.l.b16 %v2575
    %v3709 = vunpack.c.l.b16 %v2576
    %v3710 = vunpack.c.h.b16 %v2576
    %v3711 = vunpack.c.l.b16 %v2577
    %v3712 = vunpack.c.h.b16 %v2577
    %v3713 = vunpack.c.l.b16 %v2578
    %v3714 = vunpack.c.h.b16 %v2578
    %v3715 = vunpack.c.l.b16 %v2579
    %v3716 = vunpack.c.h.b16 %v2579
    %v3717 = vunpack.c.l.b16 %v2580
    %v3718 = vunpack.c.h.b16 %v2580
    %v3719 = vunpack.c.l.b16 %v2581
    %v3720 = vunpack.c.h.b16 %v2581
    %v3721 = vunpack.c.l.b16 %v2582
    %v3722 = vunpack.c.l.b16 %v2583
    %v3723 = vunpack.c.h.b16 %v2583
    %v3724 = vunpack.c.l.b16 %v2584
    %v3725 = vunpack.c.h.b16 %v2584
    %v3726 = vunpack.c.l.b16 %v2585
    %v3727 = vunpack.c.h.b16 %v2585
    %v3728 = vunpack.c.l.b16 %v2586
    %v3729 = vunpack.c.h.b16 %v2586
    %v3730 = vunpack.c.l.b16 %v2587
    %v3731 = vunpack.c.h.b16 %v2587
    %v3732 = vunpack.c.l.b16 %v2588
    %v3733 = vunpack.c.h.b16 %v2588
    %v3734 = vunpack.c.l.b16 %v2589
    %v3735 = vunpack.c.l.b16 %v2590
    %v3736 = vunpack.c.h.b16 %v2590
    %v3737 = vunpack.c.l.b16 %v2591
    %v3738 = vunpack.c.h.b16 %v2591
    %v3739 = vunpack.c.l.b16 %v2592
    %v3740 = vunpack.c.h.b16 %v2592
    %v3741 = vunpack.c.l.b16 %v2593
    %v3742 = vunpack.c.h.b16 %v2593
    %v3743 = vunpack.c.l.b16 %v2594
    %v3744 = vunpack.c.h.b16 %v2594
    %v3745 = vunpack.c.l.b16 %v2595
    %v3746 = vunpack.c.h.b16 %v2595
    %v3747 = vunpack.c.l.b16 %v2596
    %v3748 = vunpack.c.l.b16 %v2597
    %v3749 = vunpack.c.h.b16 %v2597
    %v3750 = vunpack.c.l.b16 %v2598
    %v3751 = vunpack.c.h.b16 %v2598
    %v3752 = vunpack.c.l.b16 %v2599
    %v3753 = vunpack.c.h.b16 %v2599
    %v3754 = vunpack.c.l.b16 %v2600
    %v3755 = vunpack.c.h.b16 %v2600
    %v3756 = vunpack.c.l.b16 %v2601
    %v3757 = vunpack.c.h.b16 %v2601
    %v3758 = vunpack.c.l.b16 %v2602
    %v3759 = vunpack.c.h.b16 %v2602
    %v3760 = vunpack.c.l.b16 %v2603
    %v3761 = vunpack.c.l.b16 %v2604
    %v3762 = vunpack.c.h.b16 %v2604
    %v3763 = vunpack.c.l.b16 %v2605
    %v3764 = vunpack.c.h.b16 %v2605
    %v3765 = vunpack.c.l.b16 %v2606
    %v3766 = vunpack.c.h.b16 %v2606
    %v3767 = vunpack.c.l.b16 %v2607
    %v3768 = vunpack.c.h.b16 %v2607
    %v3769 = vunpack.c.l.b16 %v2608
    %v3770 = vunpack.c.h.b16 %v2608
    %v3771 = vunpack.c.l.b16 %v2609
    %v3772 = vunpack.c.h.b16 %v2609
    %v3773 = vunpack.c.l.b16 %v2610
    %v3774 = vunpack.c.l.b16 %v2611
    %v3775 = vunpack.c.h.b16 %v2611
    %v3776 = vunpack.c.l.b16 %v2612
    %v3777 = vunpack.c.h.b16 %v2612
    %v3778 = vunpack.c.l.b16 %v2613
    %v3779 = vunpack.c.h.b16 %v2613
    %v3780 = vunpack.c.l.b16 %v2614
    %v3781 = vunpack.c.h.b16 %v2614
    %v3782 = vunpack.c.l.b16 %v2615
    %v3783 = vunpack.c.h.b16 %v2615
    %v3784 = vunpack.c.l.b16 %v2616
    %v3785 = vunpack.c.h.b16 %v2616
    %v3786 = vunpack.c.l.b16 %v2617
    %v3787 = vunpack.c.l.b16 %v2618
    %v3788 = vunpack.c.h.b16 %v2618
    %v3789 = vunpack.c.l.b16 %v2619
    %v3790 = vunpack.c.h.b16 %v2619
    %v3791 = vunpack.c.l.b16 %v2620
    %v3792 = vunpack.c.h.b16 %v2620
    %v3793 = vunpack.c.l.b16 %v2621
    %v3794 = vunpack.c.h.b16 %v2621
    %v3795 = vunpack.c.l.b16 %v2622
    %v3796 = vunpack.c.h.b16 %v2622
    %v3797 = vunpack.c.l.b16 %v2623
    %v3798 = vunpack.c.h.b16 %v2623
    %v3799 = vunpack.c.l.b16 %v2624
    %v3800 = vunpack.c.l.b16 %v2625
    %v3801 = vunpack.c.h.b16 %v2625
    %v3802 = vunpack.c.l.b16 %v2626
    %v3803 = vunpack.c.h.b16 %v2626
    %v3804 = vunpack.c.l.b16 %v2627
    %v3805 = vunpack.c.h.b16 %v2627
    %v3806 = vunpack.c.l.b16 %v2628
    %v3807 = vunpack.c.h.b16 %v2628
    %v3808 = vunpack.c.l.b16 %v2629
    %v3809 = vunpack.c.h.b16 %v2629
    %v3810 = vunpack.c.l.b16 %v2630
    %v3811 = vunpack.c.h.b16 %v2630
    %v3812 = vunpack.c.l.b16 %v2631
    %v3813 = vunpack.c.l.b16 %v2632
    %v3814 = vunpack.c.h.b16 %v2632
    %v3815 = vunpack.c.l.b16 %v2633
    %v3816 = vunpack.c.h.b16 %v2633
    %v3817 = vunpack.c.l.b16 %v2634
    %v3818 = vunpack.c.h.b16 %v2634
    %v3819 = vunpack.c.l.b16 %v2635
    %v3820 = vunpack.c.h.b16 %v2635
    %v3821 = vunpack.c.l.b16 %v2636
    %v3822 = vunpack.c.h.b16 %v2636
    %v3823 = vunpack.c.l.b16 %v2637
    %v3824 = vunpack.c.h.b16 %v2637
    %v3825 = vunpack.c.l.b16 %v2638
    %v3826 = vunpack.c.l.b16 %v2639
    %v3827 = vunpack.c.h.b16 %v2639
    %v3828 = vunpack.c.l.b16 %v2640
    %v3829 = vunpack.c.h.b16 %v2640
    %v3830 = vunpack.c.l.b16 %v2641
    %v3831 = vunpack.c.h.b16 %v2641
    %v3832 = vunpack.c.l.b16 %v2642
    %v3833 = vunpack.c.h.b16 %v2642
    %v3834 = vunpack.c.l.b16 %v2643
    %v3835 = vunpack.c.h.b16 %v2643
    %v3836 = vunpack.c.l.b16 %v2644
    %v3837 = vunpack.c.h.b16 %v2644
    %v3838 = vunpack.c.l.b16 %v2645
    %v3839 = vunpack.c.l.b16 %v2646
    %v3840 = vunpack.c.h.b16 %v2646
    %v3841 = vunpack.c.l.b16 %v2647
    %v3842 = vunpack.c.h.b16 %v2647
    %v3843 = vunpack.c.l.b16 %v2648
    %v3844 = vunpack.c.h.b16 %v2648
    %v3845 = vunpack.c.l.b16 %v2649
    %v3846 = vunpack.c.h.b16 %v2649
    %v3847 = vunpack.c.l.b16 %v2650
    %v3848 = vunpack.c.h.b16 %v2650
    %v3849 = vunpack.c.l.b16 %v2651
    %v3850 = vunpack.c.h.b16 %v2651
    %v3851 = vunpack.c.l.b16 %v2652
    %v3852 = vunpack.c.l.b16 %v2653
    %v3853 = vunpack.c.h.b16 %v2653
    %v3854 = vunpack.c.l.b16 %v2654
    %v3855 = vunpack.c.h.b16 %v2654
    %v3856 = vunpack.c.l.b16 %v2655
    %v3857 = vunpack.c.h.b16 %v2655
    %v3858 = vunpack.c.l.b16 %v2656
    %v3859 = vunpack.c.h.b16 %v2656
    %v3860 = vunpack.c.l.b16 %v2657
    %v3861 = vunpack.c.h.b16 %v2657
    %v3862 = vunpack.c.l.b16 %v2658
    %v3863 = vunpack.c.h.b16 %v2658
    %v3864 = vunpack.c.l.b16 %v2659
    %v3865 = vunpack.c.l.b16 %v2660
    %v3866 = vunpack.c.h.b16 %v2660
    %v3867 = vunpack.c.l.b16 %v2661
    %v3868 = vunpack.c.h.b16 %v2661
    %v3869 = vunpack.c.l.b16 %v2662
    %v3870 = vunpack.c.h.b16 %v2662
    %v3871 = vunpack.c.l.b16 %v2663
    %v3872 = vunpack.c.h.b16 %v2663
    %v3873 = vunpack.c.l.b16 %v2664
    %v3874 = vunpack.c.h.b16 %v2664
    %v3875 = vunpack.c.l.b16 %v2665
    %v3876 = vunpack.c.h.b16 %v2665
    %v3877 = vunpack.c.l.b16 %v2666
    %v3878 = vunpack.c.l.b16 %v2667
    %v3879 = vunpack.c.h.b16 %v2667
    %v3880 = vunpack.c.l.b16 %v2668
    %v3881 = vunpack.c.h.b16 %v2668
    %v3882 = vunpack.c.l.b16 %v2669
    %v3883 = vunpack.c.h.b16 %v2669
    %v3884 = vunpack.c.l.b16 %v2670
    %v3885 = vunpack.c.h.b16 %v2670
    %v3886 = vunpack.c.l.b16 %v2671
    %v3887 = vunpack.c.h.b16 %v2671
    %v3888 = vunpack.c.l.b16 %v2672
    %v3889 = vunpack.c.h.b16 %v2672
    %v3890 = vunpack.c.l.b16 %v2673
    %v3891 = vunpack.c.l.b16 %v2674
    %v3892 = vunpack.c.h.b16 %v2674
    %v3893 = vunpack.c.l.b16 %v2675
    %v3894 = vunpack.c.h.b16 %v2675
    %v3895 = vunpack.c.l.b16 %v2676
    %v3896 = vunpack.c.h.b16 %v2676
    %v3897 = vunpack.c.l.b16 %v2677
    %v3898 = vunpack.c.h.b16 %v2677
    %v3899 = vunpack.c.l.b16 %v2678
    %v3900 = vunpack.c.h.b16 %v2678
    %v3901 = vunpack.c.l.b16 %v2679
    %v3902 = vunpack.c.h.b16 %v2679
    %v3903 = vunpack.c.l.b16 %v2680
    %v3904 = vunpack.c.l.b16 %v2681
    %v3905 = vunpack.c.h.b16 %v2681
    %v3906 = vunpack.c.l.b16 %v2682
    %v3907 = vunpack.c.h.b16 %v2682
    %v3908 = vunpack.c.l.b16 %v2683
    %v3909 = vunpack.c.h.b16 %v2683
    %v3910 = vunpack.c.l.b16 %v2684
    %v3911 = vunpack.c.h.b16 %v2684
    %v3912 = vunpack.c.l.b16 %v2685
    %v3913 = vunpack.c.h.b16 %v2685
    %v3914 = vunpack.c.l.b16 %v2686
    %v3915 = vunpack.c.h.b16 %v2686
    %v3916 = vunpack.c.l.b16 %v2687
    %v3917 = vunpack.c.l.b16 %v2688
    %v3918 = vunpack.c.h.b16 %v2688
    %v3919 = vunpack.c.l.b16 %v2689
    %v3920 = vunpack.c.h.b16 %v2689
    %v3921 = vunpack.c.l.b16 %v2690
    %v3922 = vunpack.c.h.b16 %v2690
    %v3923 = vunpack.c.l.b16 %v2691
    %v3924 = vunpack.c.h.b16 %v2691
    %v3925 = vunpack.c.l.b16 %v2692
    %v3926 = vunpack.c.h.b16 %v2692
    %v3927 = vunpack.c.l.b16 %v2693
    %v3928 = vunpack.c.h.b16 %v2693
    %v3929 = vunpack.c.l.b16 %v2694
    %v3930 = vunpack.c.l.b16 %v2695
    %v3931 = vunpack.c.h.b16 %v2695
    %v3932 = vunpack.c.l.b16 %v2696
    %v3933 = vunpack.c.h.b16 %v2696
    %v3934 = vunpack.c.l.b16 %v2697
    %v3935 = vunpack.c.h.b16 %v2697
    %v3936 = vunpack.c.l.b16 %v2698
    %v3937 = vunpack.c.h.b16 %v2698
    %v3938 = vunpack.c.l.b16 %v2699
    %v3939 = vunpack.c.h.b16 %v2699
    %v3940 = vunpack.c.l.b16 %v2700
    %v3941 = vunpack.c.h.b16 %v2700
    %v3942 = vunpack.c.l.b16 %v2701
    %v3943 = vunpack.c.l.b16 %v2702
    %v3944 = vunpack.c.h.b16 %v2702
    %v3945 = vunpack.c.l.b16 %v2703
    %v3946 = vunpack.c.h.b16 %v2703
    %v3947 = vunpack.c.l.b16 %v2704
    %v3948 = vunpack.c.h.b16 %v2704
    %v3949 = vunpack.c.l.b16 %v2705
    %v3950 = vunpack.c.h.b16 %v2705
    %v3951 = vunpack.c.l.b16 %v2706
    %v3952 = vunpack.c.h.b16 %v2706
    %v3953 = vunpack.c.l.b16 %v2707
    %v3954 = vunpack.c.h.b16 %v2707
    %v3955 = vunpack.c.l.b16 %v2708
    %v3956 = vunpack.c.l.b16 %v2709
    %v3957 = vunpack.c.h.b16 %v2709
    %v3958 = vunpack.c.l.b16 %v2710
    %v3959 = vunpack.c.h.b16 %v2710
    %v3960 = vunpack.c.l.b16 %v2711
    %v3961 = vunpack.c.h.b16 %v2711
    %v3962 = vunpack.c.l.b16 %v2712
    %v3963 = vunpack.c.h.b16 %v2712
    %v3964 = vunpack.c.l.b16 %v2713
    %v3965 = vunpack.c.h.b16 %v2713
    %v3966 = vunpack.c.l.b16 %v2714
    %v3967 = vunpack.c.h.b16 %v2714
    %v3968 = vunpack.c.l.b16 %v2715
    %v3969 = vunpack.c.l.b16 %v2716
    %v3970 = vunpack.c.h.b16 %v2716
    %v3971 = vunpack.c.l.b16 %v2717
    %v3972 = vunpack.c.h.b16 %v2717
    %v3973 = vunpack.c.l.b16 %v2718
    %v3974 = vunpack.c.h.b16 %v2718
    %v3975 = vunpack.c.l.b16 %v2719
    %v3976 = vunpack.c.h.b16 %v2719
    %v3977 = vunpack.c.l.b16 %v2720
    %v3978 = vunpack.c.h.b16 %v2720
    %v3979 = vunpack.c.l.b16 %v2721
    %v3980 = vunpack.c.h.b16 %v2721
    %v3981 = vunpack.c.l.b16 %v2722
    %v3982 = vunpack.c.l.b16 %v2723
    %v3983 = vunpack.c.h.b16 %v2723
    %v3984 = vunpack.c.l.b16 %v2724
    %v3985 = vunpack.c.h.b16 %v2724
    %v3986 = vunpack.c.l.b16 %v2725
    %v3987 = vunpack.c.h.b16 %v2725
    %v3988 = vunpack.c.l.b16 %v2726
    %v3989 = vunpack.c.h.b16 %v2726
    %v3990 = vunpack.c.l.b16 %v2727
    %v3991 = vunpack.c.h.b16 %v2727
    %v3992 = vunpack.c.l.b16 %v2728
    %v3993 = vunpack.c.h.b16 %v2728
    %v3994 = vunpack.c.l.b16 %v2729
    %v3995 = vunpack.c.l.b16 %v2730
    %v3996 = vunpack.c.h.b16 %v2730
    %v3997 = vunpack.c.l.b16 %v2731
    %v3998 = vunpack.c.h.b16 %v2731
    %v3999 = vunpack.c.l.b16 %v2732
    %v4000 = vunpack.c.h.b16 %v2732
    %v4001 = vunpack.c.l.b16 %v2733
    %v4002 = vunpack.c.h.b16 %v2733
    %v4003 = vunpack.c.l.b16 %v2734
    %v4004 = vunpack.c.h.b16 %v2734
    %v4005 = vunpack.c.l.b16 %v2735
    %v4006 = vunpack.c.h.b16 %v2735
    %v4007 = vunpack.c.l.b16 %v2736
    %v4008 = vunpack.c.l.b16 %v2737
    %v4009 = vunpack.c.h.b16 %v2737
    %v4010 = vunpack.c.l.b16 %v2738
    %v4011 = vunpack.c.h.b16 %v2738
    %v4012 = vunpack.c.l.b16 %v2739
    %v4013 = vunpack.c.h.b16 %v2739
    %v4014 = vunpack.c.l.b16 %v2740
    %v4015 = vunpack.c.h.b16 %v2740
    %v4016 = vunpack.c.l.b16 %v2741
    %v4017 = vunpack.c.h.b16 %v2741
    %v4018 = vunpack.c.l.b16 %v2742
    %v4019 = vunpack.c.h.b16 %v2742
    %v4020 = vunpack.c.l.b16 %v2743
    %v4021 = vunpack.c.l.b16 %v2744
    %v4022 = vunpack.c.h.b16 %v2744
    %v4023 = vunpack.c.l.b16 %v2745
    %v4024 = vunpack.c.h.b16 %v2745
    %v4025 = vunpack.c.l.b16 %v2746
    %v4026 = vunpack.c.h.b16 %v2746
    %v4027 = vunpack.c.l.b16 %v2747
    %v4028 = vunpack.c.h.b16 %v2747
    %v4029 = vunpack.c.l.b16 %v2748
    %v4030 = vunpack.c.h.b16 %v2748
    %v4031 = vunpack.c.l.b16 %v2749
    %v4032 = vunpack.c.h.b16 %v2749
    %v4033 = vunpack.c.l.b16 %v2750
    %v4034 = vunpack.c.l.b16 %v2751
    %v4035 = vunpack.c.h.b16 %v2751
    %v4036 = vunpack.c.l.b16 %v2752
    %v4037 = vunpack.c.h.b16 %v2752
    %v4038 = vunpack.c.l.b16 %v2753
    %v4039 = vunpack.c.h.b16 %v2753
    %v4040 = vunpack.c.l.b16 %v2754
    %v4041 = vunpack.c.h.b16 %v2754
    %v4042 = vunpack.c.l.b16 %v2755
    %v4043 = vunpack.c.h.b16 %v2755
    %v4044 = vunpack.c.l.b16 %v2756
    %v4045 = vunpack.c.h.b16 %v2756
    %v4046 = vunpack.c.l.b16 %v2757
    %v4047 = vunpack.c.l.b16 %v2758
    %v4048 = vunpack.c.h.b16 %v2758
    %v4049 = vunpack.c.l.b16 %v2759
    %v4050 = vunpack.c.h.b16 %v2759
    %v4051 = vunpack.c.l.b16 %v2760
    %v4052 = vunpack.c.h.b16 %v2760
    %v4053 = vunpack.c.l.b16 %v2761
    %v4054 = vunpack.c.h.b16 %v2761
    %v4055 = vunpack.c.l.b16 %v2762
    %v4056 = vunpack.c.h.b16 %v2762
    %v4057 = vunpack.c.l.b16 %v2763
    %v4058 = vunpack.c.h.b16 %v2763
    %v4059 = vunpack.c.l.b16 %v2764
    %v4060 = vunpack.c.l.b16 %v2765
    %v4061 = vunpack.c.h.b16 %v2765
    %v4062 = vunpack.c.l.b16 %v2766
    %v4063 = vunpack.c.h.b16 %v2766
    %v4064 = vunpack.c.l.b16 %v2767
    %v4065 = vunpack.c.h.b16 %v2767
    %v4066 = vunpack.c.l.b16 %v2768
    %v4067 = vunpack.c.h.b16 %v2768
    %v4068 = vunpack.c.l.b16 %v2769
    %v4069 = vunpack.c.h.b16 %v2769
    %v4070 = vunpack.c.l.b16 %v2770
    %v4071 = vunpack.c.h.b16 %v2770
    %v4072 = vunpack.c.l.b16 %v2771
    %v4073 = vunpack.c.l.b16 %v2772
    %v4074 = vunpack.c.h.b16 %v2772
    %v4075 = vunpack.c.l.b16 %v2773
    %v4076 = vunpack.c.h.b16 %v2773
    %v4077 = vunpack.c.l.b16 %v2774
    %v4078 = vunpack.c.h.b16 %v2774
    %v4079 = vunpack.c.l.b16 %v2775
    %v4080 = vunpack.c.h.b16 %v2775
    %v4081 = vunpack.c.l.b16 %v2776
    %v4082 = vunpack.c.h.b16 %v2776
    %v4083 = vunpack.c.l.b16 %v2777
    %v4084 = vunpack.c.h.b16 %v2777
    %v4085 = vunpack.c.l.b16 %v2778
    %v4086 = vunpack.c.l.b16 %v2779
    %v4087 = vunpack.c.h.b16 %v2779
    %v4088 = vunpack.c.l.b16 %v2780
    %v4089 = vunpack.c.h.b16 %v2780
    %v4090 = vunpack.c.l.b16 %v2781
    %v4091 = vunpack.c.h.b16 %v2781
    %v4092 = vunpack.c.l.b16 %v2782
    %v4093 = vunpack.c.h.b16 %v2782
    %v4094 = vunpack.c.l.b16 %v2783
    %v4095 = vunpack.c.h.b16 %v2783
    %v4096 = vunpack.c.l.b16 %v2784
    %v4097 = vunpack.c.h.b16 %v2784
    %v4098 = vunpack.c.l.b16 %v2785
    %v4099 = vunpack.c.l.b16 %v2786
    %v4100 = vunpack.c.h.b16 %v2786
    %v4101 = vunpack.c.l.b16 %v2787
    %v4102 = vunpack.c.h.b16 %v2787
    %v4103 = vunpack.c.l.b16 %v2788
    %v4104 = vunpack.c.h.b16 %v2788
    %v4105 = vunpack.c.l.b16 %v2789
    %v4106 = vunpack.c.h.b16 %v2789
    %v4107 = vunpack.c.l.b16 %v2790
    %v4108 = vunpack.c.h.b16 %v2790
    %v4109 = vunpack.c.l.b16 %v2791
    %v4110 = vunpack.c.h.b16 %v2791
    %v4111 = vunpack.c.l.b16 %v2792
    %v4112 = vunpack.c.l.b16 %v2793
    %v4113 = vunpack.c.h.b16 %v2793
    %v4114 = vunpack.c.l.b16 %v2794
    %v4115 = vunpack.c.h.b16 %v2794
    %v4116 = vunpack.c.l.b16 %v2795
    %v4117 = vunpack.c.h.b16 %v2795
    %v4118 = vunpack.c.l.b16 %v2796
    %v4119 = vunpack.c.h.b16 %v2796
    %v4120 = vunpack.c.l.b16 %v2797
    %v4121 = vunpack.c.h.b16 %v2797
    %v4122 = vunpack.c.l.b16 %v2798
    %v4123 = vunpack.c.h.b16 %v2798
    %v4124 = vunpack.c.l.b16 %v2799
    %v4125 = vunpack.c.l.b16 %v2800
    %v4126 = vunpack.c.h.b16 %v2800
    %v4127 = vunpack.c.l.b16 %v2801
    %v4128 = vunpack.c.h.b16 %v2801
    %v4129 = vunpack.c.l.b16 %v2802
    %v4130 = vunpack.c.h.b16 %v2802
    %v4131 = vunpack.c.l.b16 %v2803
    %v4132 = vunpack.c.h.b16 %v2803
    %v4133 = vunpack.c.l.b16 %v2804
    %v4134 = vunpack.c.h.b16 %v2804
    %v4135 = vunpack.c.l.b16 %v2805
    %v4136 = vunpack.c.h.b16 %v2805
    %v4137 = vunpack.c.l.b16 %v2806
    %v4138 = vunpack.c.l.b16 %v2807
    %v4139 = vunpack.c.h.b16 %v2807
    %v4140 = vunpack.c.l.b16 %v2808
    %v4141 = vunpack.c.h.b16 %v2808
    %v4142 = vunpack.c.l.b16 %v2809
    %v4143 = vunpack.c.h.b16 %v2809
    %v4144 = vunpack.c.l.b16 %v2810
    %v4145 = vunpack.c.h.b16 %v2810
    %v4146 = vunpack.c.l.b16 %v2811
    %v4147 = vunpack.c.h.b16 %v2811
    %v4148 = vunpack.c.l.b16 %v2812
    %v4149 = vunpack.c.h.b16 %v2812
    %v4150 = vunpack.c.l.b16 %v2813
    %v4151 = vunpack.c.l.b16 %v2814
    %v4152 = vunpack.c.h.b16 %v2814
    %v4153 = vunpack.c.l.b16 %v2815
    %v4154 = vunpack.c.h.b16 %v2815
    %v4155 = vunpack.c.l.b16 %v2816
    %v4156 = vunpack.c.h.b16 %v2816
    %v4157 = vunpack.c.l.b16 %v2817
    %v4158 = vunpack.c.h.b16 %v2817
    %v4159 = vunpack.c.l.b16 %v2818
    %v4160 = vunpack.c.h.b16 %v2818
    %v4161 = vunpack.c.l.b16 %v2819
    %v4162 = vunpack.c.h.b16 %v2819
    %v4163 = vunpack.c.l.b16 %v2820
    %v4164 = vunpack.c.l.b16 %v2821
    %v4165 = vunpack.c.h.b16 %v2821
    %v4166 = vunpack.c.l.b16 %v2822
    %v4167 = vunpack.c.h.b16 %v2822
    %v4168 = vunpack.c.l.b16 %v2823
    %v4169 = vunpack.c.h.b16 %v2823
    %v4170 = vunpack.c.l.b16 %v2824
    %v4171 = vunpack.c.h.b16 %v2824
    %v4172 = vunpack.c.l.b16 %v2825
    %v4173 = vunpack.c.h.b16 %v2825
    %v4174 = vunpack.c.l.b16 %v2826
    %v4175 = vunpack.c.h.b16 %v2826
    %v4176 = vunpack.c.l.b16 %v2827
    %v4177 = vpack.c.b16 %v3358, %v3345
    %v4178 = vpack.c.b16 %v3359, %v3346
    %v4179 = vpack.c.b16 %v3360, %v3347
    %v4180 = vpack.c.b16 %v3361, %v3348
    %v4181 = vpack.c.b16 %v3362, %v3349
    %v4182 = vpack.c.b16 %v3363, %v3350
    %v4183 = vpack.c.b16 %v3364, %v3351
    %v4184 = vpack.c.b16 %v3365, %v3352
    %v4185 = vpack.c.b16 %v3366, %v3353
    %v4186 = vpack.c.b16 %v3367, %v3354
    %v4187 = vpack.c.b16 %v3368, %v3355
    %v4188 = vpack.c.b16 %v3369, %v3356
    %v4189 = vpack.c.b16 %v3370, %v3357
    %v4190 = vpack.c.b16 %v3384, %v3371
    %v4191 = vpack.c.b16 %v3385, %v3372
    %v4192 = vpack.c.b16 %v3386, %v3373
    %v4193 = vpack.c.b16 %v3387, %v3374
    %v4194 = vpack.c.b16 %v3388, %v3375
    %v4195 = vpack.c.b16 %v3389, %v3376
    %v4196 = vpack.c.b16 %v3390, %v3377
    %v4197 = vpack.c.b16 %v3391, %v3378
    %v4198 = vpack.c.b16 %v3392, %v3379
    %v4199 = vpack.c.b16 %v3393, %v3380
    %v4200 = vpack.c.b16 %v3394, %v3381
    %v4201 = vpack.c.b16 %v3395, %v3382
    %v4202 = vpack.c.b16 %v3396, %v3383
    %v4203 = vpack.c.b16 %v3410, %v3397
    %v4204 = vpack.c.b16 %v3411, %v3398
    %v4205 = vpack.c.b16 %v3412, %v3399
    %v4206 = vpack.c.b16 %v3413, %v3400
    %v4207 = vpack.c.b16 %v3414, %v3401
    %v4208 = vpack.c.b16 %v3415, %v3402
    %v4209 = vpack.c.b16 %v3416, %v3403
    %v4210 = vpack.c.b16 %v3417, %v3404
    %v4211 = vpack.c.b16 %v3418, %v3405
    %v4212 = vpack.c.b16 %v3419, %v3406
    %v4213 = vpack.c.b16 %v3420, %v3407
    %v4214 = vpack.c.b16 %v3421, %v3408
    %v4215 = vpack.c.b16 %v3422, %v3409
    %v4216 = vpack.c.b16 %v3436, %v3423
    %v4217 = vpack.c.b16 %v3437, %v3424
    %v4218 = vpack.c.b16 %v3438, %v3425
    %v4219 = vpack.c.b16 %v3439, %v3426
    %v4220 = vpack.c.b16 %v3440, %v3427
    %v4221 = vpack.c.b16 %v3441, %v3428
    %v4222 = vpack.c.b16 %v3442, %v3429
    %v4223 = vpack.c.b16 %v3443, %v3430
    %v4224 = vpack.c.b16 %v3444, %v3431
    %v4225 = vpack.c.b16 %v3445, %v3432
    %v4226 = vpack.c.b16 %v3446, %v3433
    %v4227 = vpack.c.b16 %v3447, %v3434
    %v4228 = vpack.c.b16 %v3448, %v3435
    %v4229 = vpack.c.b16 %v3462, %v3449
    %v4230 = vpack.c.b16 %v3463, %v3450
    %v4231 = vpack.c.b16 %v3464, %v3451
    %v4232 = vpack.c.b16 %v3465, %v3452
    %v4233 = vpack.c.b16 %v3466, %v3453
    %v4234 = vpack.c.b16 %v3467, %v3454
    %v4235 = vpack.c.b16 %v3468, %v3455
    %v4236 = vpack.c.b16 %v3469, %v3456
    %v4237 = vpack.c.b16 %v3470, %v3457
    %v4238 = vpack.c.b16 %v3471, %v3458
    %v4239 = vpack.c.b16 %v3472, %v3459
    %v4240 = vpack.c.b16 %v3473, %v3460
    %v4241 = vpack.c.b16 %v3474, %v3461
    %v4242 = vpack.c.b16 %v3488, %v3475
    %v4243 = vpack.c.b16 %v3489, %v3476
    %v4244 = vpack.c.b16 %v3490, %v3477
    %v4245 = vpack.c.b16 %v3491, %v3478
    %v4246 = vpack.c.b16 %v3492, %v3479
    %v4247 = vpack.c.b16 %v3493, %v3480
    %v4248 = vpack.c.b16 %v3494, %v3481
    %v4249 = vpack.c.b16 %v3495, %v3482
    %v4250 = vpack.c.b16 %v3496, %v3483
    %v4251 = vpack.c.b16 %v3497, %v3484
    %v4252 = vpack.c.b16 %v3498, %v3485
    %v4253 = vpack.c.b16 %v3499, %v3486
    %v4254 = vpack.c.b16 %v3500, %v3487
    %v4255 = vpack.c.b16 %v3514, %v3501
    %v4256 = vpack.c.b16 %v3515, %v3502
    %v4257 = vpack.c.b16 %v3516, %v3503
    %v4258 = vpack.c.b16 %v3517, %v3504
    %v4259 = vpack.c.b16 %v3518, %v3505
    %v4260 = vpack.c.b16 %v3519, %v3506
    %v4261 = vpack.c.b16 %v3520, %v3507
    %v4262 = vpack.c.b16 %v3521, %v3508
    %v4263 = vpack.c.b16 %v3522, %v3509
    %v4264 = vpack.c.b16 %v3523, %v3510
    %v4265 = vpack.c.b16 %v3524, %v3511
    %v4266 = vpack.c.b16 %v3525, %v3512
    %v4267 = vpack.c.b16 %v3526, %v3513
    %v4268 = vpack.c.b16 %v3540, %v3527
    %v4269 = vpack.c.b16 %v3541, %v3528
    %v4270 = vpack.c.b16 %v3542, %v3529
    %v4271 = vpack.c.b16 %v3543, %v3530
    %v4272 = vpack.c.b16 %v3544, %v3531
    %v4273 = vpack.c.b16 %v3545, %v3532
    %v4274 = vpack.c.b16 %v3546, %v3533
    %v4275 = vpack.c.b16 %v3547, %v3534
    %v4276 = vpack.c.b16 %v3548, %v3535
    %v4277 = vpack.c.b16 %v3549, %v3536
    %v4278 = vpack.c.b16 %v3550, %v3537
    %v4279 = vpack.c.b16 %v3551, %v3538
    %v4280 = vpack.c.b16 %v3552, %v3539
    %v4281 = vpack.c.b16 %v3566, %v3553
    %v4282 = vpack.c.b16 %v3567, %v3554
    %v4283 = vpack.c.b16 %v3568, %v3555
    %v4284 = vpack.c.b16 %v3569, %v3556
    %v4285 = vpack.c.b16 %v3570, %v3557
    %v4286 = vpack.c.b16 %v3571, %v3558
    %v4287 = vpack.c.b16 %v3572, %v3559
    %v4288 = vpack.c.b16 %v3573, %v3560
    %v4289 = vpack.c.b16 %v3574, %v3561
    %v4290 = vpack.c.b16 %v3575, %v3562
    %v4291 = vpack.c.b16 %v3576, %v3563
    %v4292 = vpack.c.b16 %v3577, %v3564
    %v4293 = vpack.c.b16 %v3578, %v3565
    %v4294 = vpack.c.b16 %v3592, %v3579
    %v4295 = vpack.c.b16 %v3593, %v3580
    %v4296 = vpack.c.b16 %v3594, %v3581
    %v4297 = vpack.c.b16 %v3595, %v3582
    %v4298 = vpack.c.b16 %v3596, %v3583
    %v4299 = vpack.c.b16 %v3597, %v3584
    %v4300 = vpack.c.b16 %v3598, %v3585
    %v4301 = vpack.c.b16 %v3599, %v3586
    %v4302 = vpack.c.b16 %v3600, %v3587
    %v4303 = vpack.c.b16 %v3601, %v3588
    %v4304 = vpack.c.b16 %v3602, %v3589
    %v4305 = vpack.c.b16 %v3603, %v3590
    %v4306 = vpack.c.b16 %v3604, %v3591
    %v4307 = vpack.c.b16 %v3618, %v3605
    %v4308 = vpack.c.b16 %v3619, %v3606
    %v4309 = vpack.c.b16 %v3620, %v3607
    %v4310 = vpack.c.b16 %v3621, %v3608
    %v4311 = vpack.c.b16 %v3622, %v3609
    %v4312 = vpack.c.b16 %v3623, %v3610
    %v4313 = vpack.c.b16 %v3624, %v3611
    %v4314 = vpack.c.b16 %v3625, %v3612
    %v4315 = vpack.c.b16 %v3626, %v3613
    %v4316 = vpack.c.b16 %v3627, %v3614
    %v4317 = vpack.c.b16 %v3628, %v3615
    %v4318 = vpack.c.b16 %v3629, %v3616
    %v4319 = vpack.c.b16 %v3630, %v3617
    %v4320 = vpack.c.b16 %v3644, %v3631
    %v4321 = vpack.c.b16 %v3645, %v3632
    %v4322 = vpack.c.b16 %v3646, %v3633
    %v4323 = vpack.c.b16 %v3647, %v3634
    %v4324 = vpack.c.b16 %v3648, %v3635
    %v4325 = vpack.c.b16 %v3649, %v3636
    %v4326 = vpack.c.b16 %v3650, %v3637
    %v4327 = vpack.c.b16 %v3651, %v3638
    %v4328 = vpack.c.b16 %v3652, %v3639
    %v4329 = vpack.c.b16 %v3653, %v3640
    %v4330 = vpack.c.b16 %v3654, %v3641
    %v4331 = vpack.c.b16 %v3655, %v3642
    %v4332 = vpack.c.b16 %v3656, %v3643
    %v4333 = vpack.c.b16 %v3670, %v3657
    %v4334 = vpack.c.b16 %v3671, %v3658
    %v4335 = vpack.c.b16 %v3672, %v3659
    %v4336 = vpack.c.b16 %v3673, %v3660
    %v4337 = vpack.c.b16 %v3674, %v3661
    %v4338 = vpack.c.b16 %v3675, %v3662
    %v4339 = vpack.c.b16 %v3676, %v3663
    %v4340 = vpack.c.b16 %v3677, %v3664
    %v4341 = vpack.c.b16 %v3678, %v3665
    %v4342 = vpack.c.b16 %v3679, %v3666
    %v4343 = vpack.c.b16 %v3680, %v3667
    %v4344 = vpack.c.b16 %v3681, %v3668
    %v4345 = vpack.c.b16 %v3682, %v3669
    %v4346 = vpack.c.b16 %v3696, %v3683
    %v4347 = vpack.c.b16 %v3697, %v3684
    %v4348 = vpack.c.b16 %v3698, %v3685
    %v4349 = vpack.c.b16 %v3699, %v3686
    %v4350 = vpack.c.b16 %v3700, %v3687
    %v4351 = vpack.c.b16 %v3701, %v3688
    %v4352 = vpack.c.b16 %v3702, %v3689
    %v4353 = vpack.c.b16 %v3703, %v3690
    %v4354 = vpack.c.b16 %v3704, %v3691
    %v4355 = vpack.c.b16 %v3705, %v3692
    %v4356 = vpack.c.b16 %v3706, %v3693
    %v4357 = vpack.c.b16 %v3707, %v3694
    %v4358 = vpack.c.b16 %v3708, %v3695
    %v4359 = vpack.c.b16 %v3722, %v3709
    %v4360 = vpack.c.b16 %v3723, %v3710
    %v4361 = vpack.c.b16 %v3724, %v3711
    %v4362 = vpack.c.b16 %v3725, %v3712
    %v4363 = vpack.c.b16 %v3726, %v3713
    %v4364 = vpack.c.b16 %v3727, %v3714
    %v4365 = vpack.c.b16 %v3728, %v3715
    %v4366 = vpack.c.b16 %v3729, %v3716
    %v4367 = vpack.c.b16 %v3730, %v3717
    %v4368 = vpack.c.b16 %v3731, %v3718
    %v4369 = vpack.c.b16 %v3732, %v3719
    %v4370 = vpack.c.b16 %v3733, %v3720
    %v4371 = vpack.c.b16 %v3734, %v3721
    %v4372 = vpack.c.b16 %v3748, %v3735
    %v4373 = vpack.c.b16 %v3749, %v3736
    %v4374 = vpack.c.b16 %v3750, %v3737
    %v4375 = vpack.c.b16 %v3751, %v3738
    %v4376 = vpack.c.b16 %v3752, %v3739
    %v4377 = vpack.c.b16 %v3753, %v3740
    %v4378 = vpack.c.b16 %v3754, %v3741
    %v4379 = vpack.c.b16 %v3755, %v3742
    %v4380 = vpack.c.b16 %v3756, %v3743
    %v4381 = vpack.c.b16 %v3757, %v3744
    %v4382 = vpack.c.b16 %v3758, %v3745
    %v4383 = vpack.c.b16 %v3759, %v3746
    %v4384 = vpack.c.b16 %v3760, %v3747
    %v4385 = vpack.c.b16 %v3774, %v3761
    %v4386 = vpack.c.b16 %v3775, %v3762
    %v4387 = vpack.c.b16 %v3776, %v3763
    %v4388 = vpack.c.b16 %v3777, %v3764
    %v4389 = vpack.c.b16 %v3778, %v3765
    %v4390 = vpack.c.b16 %v3779, %v3766
    %v4391 = vpack.c.b16 %v3780, %v3767
    %v4392 = vpack.c.b16 %v3781, %v3768
    %v4393 = vpack.c.b16 %v3782, %v3769
    %v4394 = vpack.c.b16 %v3783, %v3770
    %v4395 = vpack.c.b16 %v3784, %v3771
    %v4396 = vpack.c.b16 %v3785, %v3772
    %v4397 = vpack.c.b16 %v3786, %v3773
    %v4398 = vpack.c.b16 %v3800, %v3787
    %v4399 = vpack.c.b16 %v3801, %v3788
    %v4400 = vpack.c.b16 %v3802, %v3789
    %v4401 = vpack.c.b16 %v3803, %v3790
    %v4402 = vpack.c.b16 %v3804, %v3791
    %v4403 = vpack.c.b16 %v3805, %v3792
    %v4404 = vpack.c.b16 %v3806, %v3793
    %v4405 = vpack.c.b16 %v3807, %v3794
    %v4406 = vpack.c.b16 %v3808, %v3795
    %v4407 = vpack.c.b16 %v3809, %v3796
    %v4408 = vpack.c.b16 %v3810, %v3797
    %v4409 = vpack.c.b16 %v3811, %v3798
    %v4410 = vpack.c.b16 %v3812, %v3799
    %v4411 = vpack.c.b16 %v3826, %v3813
    %v4412 = vpack.c.b16 %v3827, %v3814
    %v4413 = vpack.c.b16 %v3828, %v3815
    %v4414 = vpack.c.b16 %v3829, %v3816
    %v4415 = vpack.c.b16 %v3830, %v3817
    %v4416 = vpack.c.b16 %v3831, %v3818
    %v4417 = vpack.c.b16 %v3832, %v3819
    %v4418 = vpack.c.b16 %v3833, %v3820
    %v4419 = vpack.c.b16 %v3834, %v3821
    %v4420 = vpack.c.b16 %v3835, %v3822
    %v4421 = vpack.c.b16 %v3836, %v3823
    %v4422 = vpack.c.b16 %v3837, %v3824
    %v4423 = vpack.c.b16 %v3838, %v3825
    %v4424 = vpack.c.b16 %v3852, %v3839
    %v4425 = vpack.c.b16 %v3853, %v3840
    %v4426 = vpack.c.b16 %v3854, %v3841
    %v4427 = vpack.c.b16 %v3855, %v3842
    %v4428 = vpack.c.b16 %v3856, %v3843
    %v4429 = vpack.c.b16 %v3857, %v3844
    %v4430 = vpack.c.b16 %v3858, %v3845
    %v4431 = vpack.c.b16 %v3859, %v3846
    %v4432 = vpack.c.b16 %v3860, %v3847
    %v4433 = vpack.c.b16 %v3861, %v3848
    %v4434 = vpack.c.b16 %v3862, %v3849
    %v4435 = vpack.c.b16 %v3863, %v3850
    %v4436 = vpack.c.b16 %v3864, %v3851
    %v4437 = vpack.c.b16 %v3878, %v3865
    %v4438 = vpack.c.b16 %v3879, %v3866
    %v4439 = vpack.c.b16 %v3880, %v3867
    %v4440 = vpack.c.b16 %v3881, %v3868
    %v4441 = vpack.c.b16 %v3882, %v3869
    %v4442 = vpack.c.b16 %v3883, %v3870
    %v4443 = vpack.c.b16 %v3884, %v3871
    %v4444 = vpack.c.b16 %v3885, %v3872
    %v4445 = vpack.c.b16 %v3886, %v3873
    %v4446 = vpack.c.b16 %v3887, %v3874
    %v4447 = vpack.c.b16 %v3888, %v3875
    %v4448 = vpack.c.b16 %v3889, %v3876
    %v4449 = vpack.c.b16 %v3890, %v3877
    %v4450 = vpack.c.b16 %v3904, %v3891
    %v4451 = vpack.c.b16 %v3905, %v3892
    %v4452 = vpack.c.b16 %v3906, %v3893
    %v4453 = vpack.c.b16 %v3907, %v3894
    %v4454 = vpack.c.b16 %v3908, %v3895
    %v4455 = vpack.c.b16 %v3909, %v3896
    %v4456 = vpack.c.b16 %v3910, %v3897
    %v4457 = vpack.c.b16 %v3911, %v3898
    %v4458 = vpack.c.b16 %v3912, %v3899
    %v4459 = vpack.c.b16 %v3913, %v3900
    %v4460 = vpack.c.b16 %v3914, %v3901
    %v4461 = vpack.c.b16 %v3915, %v3902
    %v4462 = vpack.c.b16 %v3916, %v3903
    %v4463 = vpack.c.b16 %v3930, %v3917
    %v4464 = vpack.c.b16 %v3931, %v3918
    %v4465 = vpack.c.b16 %v3932, %v3919
    %v4466 = vpack.c.b16 %v3933, %v3920
    %v4467 = vpack.c.b16 %v3934, %v3921
    %v4468 = vpack.c.b16 %v3935, %v3922
    %v4469 = vpack.c.b16 %v3936, %v3923
    %v4470 = vpack.c.b16 %v3937, %v3924
    %v4471 = vpack.c.b16 %v3938, %v3925
    %v4472 = vpack.c.b16 %v3939, %v3926
    %v4473 = vpack.c.b16 %v3940, %v3927
    %v4474 = vpack.c.b16 %v3941, %v3928
    %v4475 = vpack.c.b16 %v3942, %v3929
    %v4476 = vpack.c.b16 %v3956, %v3943
    %v4477 = vpack.c.b16 %v3957, %v3944
    %v4478 = vpack.c.b16 %v3958, %v3945
    %v4479 = vpack.c.b16 %v3959, %v3946
    %v4480 = vpack.c.b16 %v3960, %v3947
    %v4481 = vpack.c.b16 %v3961, %v3948
    %v4482 = vpack.c.b16 %v3962, %v3949
    %v4483 = vpack.c.b16 %v3963, %v3950
    %v4484 = vpack.c.b16 %v3964, %v3951
    %v4485 = vpack.c.b16 %v3965, %v3952
    %v4486 = vpack.c.b16 %v3966, %v3953
    %v4487 = vpack.c.b16 %v3967, %v3954
    %v4488 = vpack.c.b16 %v3968, %v3955
    %v4489 = vpack.c.b16 %v3982, %v3969
    %v4490 = vpack.c.b16 %v3983, %v3970
    %v4491 = vpack.c.b16 %v3984, %v3971
    %v4492 = vpack.c.b16 %v3985, %v3972
    %v4493 = vpack.c.b16 %v3986, %v3973
    %v4494 = vpack.c.b16 %v3987, %v3974
    %v4495 = vpack.c.b16 %v3988, %v3975
    %v4496 = vpack.c.b16 %v3989, %v3976
    %v4497 = vpack.c.b16 %v3990, %v3977
    %v4498 = vpack.c.b16 %v3991, %v3978
    %v4499 = vpack.c.b16 %v3992, %v3979
    %v4500 = vpack.c.b16 %v3993, %v3980
    %v4501 = vpack.c.b16 %v3994, %v3981
    %v4502 = vpack.c.b16 %v4008, %v3995
    %v4503 = vpack.c.b16 %v4009, %v3996
    %v4504 = vpack.c.b16 %v4010, %v3997
    %v4505 = vpack.c.b16 %v4011, %v3998
    %v4506 = vpack.c.b16 %v4012, %v3999
    %v4507 = vpack.c.b16 %v4013, %v4000
    %v4508 = vpack.c.b16 %v4014, %v4001
    %v4509 = vpack.c.b16 %v4015, %v4002
    %v4510 = vpack.c.b16 %v4016, %v4003
    %v4511 = vpack.c.b16 %v4017, %v4004
    %v4512 = vpack.c.b16 %v4018, %v4005
    %v4513 = vpack.c.b16 %v4019, %v4006
    %v4514 = vpack.c.b16 %v4020, %v4007
    %v4515 = vpack.c.b16 %v4034, %v4021
    %v4516 = vpack.c.b16 %v4035, %v4022
    %v4517 = vpack.c.b16 %v4036, %v4023
    %v4518 = vpack.c.b16 %v4037, %v4024
    %v4519 = vpack.c.b16 %v4038, %v4025
    %v4520 = vpack.c.b16 %v4039, %v4026
    %v4521 = vpack.c.b16 %v4040, %v4027
    %v4522 = vpack.c.b16 %v4041, %v4028
    %v4523 = vpack.c.b16 %v4042, %v4029
    %v4524 = vpack.c.b16 %v4043, %v4030
    %v4525 = vpack.c.b16 %v4044, %v4031
    %v4526 = vpack.c.b16 %v4045, %v4032
    %v4527 = vpack.c.b16 %v4046, %v4033
    %v4528 = vpack.c.b16 %v4060, %v4047
    %v4529 = vpack.c.b16 %v4061, %v4048
    %v4530 = vpack.c.b16 %v4062, %v4049
    %v4531 = vpack.c.b16 %v4063, %v4050
    %v4532 = vpack.c.b16 %v4064, %v4051
    %v4533 = vpack.c.b16 %v4065, %v4052
    %v4534 = vpack.c.b16 %v4066, %v4053
    %v4535 = vpack.c.b16 %v4067, %v4054
    %v4536 = vpack.c.b16 %v4068, %v4055
    %v4537 = vpack.c.b16 %v4069, %v4056
    %v4538 = vpack.c.b16 %v4070, %v4057
    %v4539 = vpack.c.b16 %v4071, %v4058
    %v4540 = vpack.c.b16 %v4072, %v4059
    %v4541 = vpack.c.b16 %v4086, %v4073
    %v4542 = vpack.c.b16 %v4087, %v4074
    %v4543 = vpack.c.b16 %v4088, %v4075
    %v4544 = vpack.c.b16 %v4089, %v4076
    %v4545 = vpack.c.b16 %v4090, %v4077
    %v4546 = vpack.c.b16 %v4091, %v4078
    %v4547 = vpack.c.b16 %v4092, %v4079
    %v4548 = vpack.c.b16 %v4093, %v4080
    %v4549 = vpack.c.b16 %v4094, %v4081
    %v4550 = vpack.c.b16 %v4095, %v4082
    %v4551 = vpack.c.b16 %v4096, %v4083
    %v4552 = vpack.c.b16 %v4097, %v4084
    %v4553 = vpack.c.b16 %v4098, %v4085
    %v4554 = vpack.c.b16 %v4112, %v4099
    %v4555 = vpack.c.b16 %v4113, %v4100
    %v4556 = vpack.c.b16 %v4114, %v4101
    %v4557 = vpack.c.b16 %v4115, %v4102
    %v4558 = vpack.c.b16 %v4116, %v4103
    %v4559 = vpack.c.b16 %v4117, %v4104
    %v4560 = vpack.c.b16 %v4118, %v4105
    %v4561 = vpack.c.b16 %v4119, %v4106
    %v4562 = vpack.c.b16 %v4120, %v4107
    %v4563 = vpack.c.b16 %v4121, %v4108
    %v4564 = vpack.c.b16 %v4122, %v4109
    %v4565 = vpack.c.b16 %v4123, %v4110
    %v4566 = vpack.c.b16 %v4124, %v4111
    %v4567 = vpack.c.b16 %v4138, %v4125
    %v4568 = vpack.c.b16 %v4139, %v4126
    %v4569 = vpack.c.b16 %v4140, %v4127
    %v4570 = vpack.c.b16 %v4141, %v4128
    %v4571 = vpack.c.b16 %v4142, %v4129
    %v4572 = vpack.c.b16 %v4143, %v4130
    %v4573 = vpack.c.b16 %v4144, %v4131
    %v4574 = vpack.c.b16 %v4145, %v4132
    %v4575 = vpack.c.b16 %v4146, %v4133
    %v4576 = vpack.c.b16 %v4147, %v4134
    %v4577 = vpack.c.b16 %v4148, %v4135
    %v4578 = vpack.c.b16 %v4149, %v4136
    %v4579 = vpack.c.b16 %v4150, %v4137
    %v4580 = vpack.c.b16 %v4164, %v4151
    %v4581 = vpack.c.b16 %v4165, %v4152
    %v4582 = vpack.c.b16 %v4166, %v4153
    %v4583 = vpack.c.b16 %v4167, %v4154
    %v4584 = vpack.c.b16 %v4168, %v4155
    %v4585 = vpack.c.b16 %v4169, %v4156
    %v4586 = vpack.c.b16 %v4170, %v4157
    %v4587 = vpack.c.b16 %v4171, %v4158
    %v4588 = vpack.c.b16 %v4172, %v4159
    %v4589 = vpack.c.b16 %v4173, %v4160
    %v4590 = vpack.c.b16 %v4174, %v4161
    %v4591 = vpack.c.b16 %v4175, %v4162
    %v4592 = vpack.c.b16 %v4176, %v4163
    %5009 = vmatprep.subr.bf16.mxu0 %v4269
    %5010 = vmatpush1.bf16.msra.mxu0 %v4268
    %5011 = vmatprep.subr.bf16.mxu0 %v4256
    %5012 = vmatpush1.bf16.msra.mxu0 %v4255
    %5013 = vmatprep.subr.bf16.mxu0 %v4243
    %5014 = vmatpush1.bf16.msra.mxu0 %v4242
    %5015 = vmatprep.subr.bf16.mxu0 %v4230
    %5016 = vmatpush1.bf16.msra.mxu0 %v4229
    %5017 = vmatprep.subr.bf16.mxu0 %v4217
    %5018 = vmatpush1.bf16.msra.mxu0 %v4216
    %5019 = vmatprep.subr.bf16.mxu0 %v4204
    %5020 = vmatpush1.bf16.msra.mxu0 %v4203
    %5021 = vmatprep.subr.bf16.mxu0 %v4191
    %5022 = vmatpush1.bf16.msra.mxu0 %v4190
    %5023 = vmatprep.subr.bf16.mxu0 %v4178
    %5024 = vmatpush1.bf16.msra.mxu0 %v4177
    %5025 = vmatprep.subr.bf16.mxu0 %v4373
    %5026 = vmatpush2.bf16.msra.mxu0 %v4372
    %5027 = vmatprep.subr.bf16.mxu0 %v4360
    %5028 = vmatpush2.bf16.msra.mxu0 %v4359
    %5029 = vmatprep.subr.bf16.mxu0 %v4347
    %5030 = vmatpush2.bf16.msra.mxu0 %v4346
    %5031 = vmatprep.subr.bf16.mxu0 %v4334
    %5032 = vmatpush2.bf16.msra.mxu0 %v4333
    %5033 = vmatprep.subr.bf16.mxu0 %v4321
    %5034 = vmatpush2.bf16.msra.mxu0 %v4320
    %5035 = vmatprep.subr.bf16.mxu0 %v4308
    %5036 = vmatpush2.bf16.msra.mxu0 %v4307
    %5037 = vmatprep.subr.bf16.mxu0 %v4295
    %5038 = vmatpush2.bf16.msra.mxu0 %v4294
    %5039 = vmatprep.subr.bf16.mxu0 %v4282
    %5040 = vmatpush2.bf16.msra.mxu0 %v4281
    %5041 = vmatprep.mubr.bf16.mxu0 %v2377
    %5042 = vmatmul.mubr.bf16.gmra.mxu0 %v2376
    %v5043 = vpop.f32.mrf.mxu0
    %v5044 = vadd.f32 %v2835, %v5043
    %v5045 = vpop.f32.mrf.mxu0
    %v5046 = vadd.f32 %v2839, %v5045
    %v5047 = vpop.f32.mrf.mxu0
    %v5048 = vpop.f32.mrf.mxu0
    %5049 = vdwg.mxu0
    %5050 = vmatprep.subr.bf16.mxu0 %v4477
    %5051 = vmatpush1.bf16.msra.mxu0 %v4476
    %5052 = vmatprep.subr.bf16.mxu0 %v4464
    %5053 = vmatpush1.bf16.msra.mxu0 %v4463
    %5054 = vmatprep.subr.bf16.mxu0 %v4451
    %5055 = vmatpush1.bf16.msra.mxu0 %v4450
    %5056 = vmatprep.subr.bf16.mxu0 %v4438
    %5057 = vmatpush1.bf16.msra.mxu0 %v4437
    %5058 = vmatprep.subr.bf16.mxu0 %v4425
    %5059 = vmatpush1.bf16.msra.mxu0 %v4424
    %5060 = vmatprep.subr.bf16.mxu0 %v4412
    %5061 = vmatpush1.bf16.msra.mxu0 %v4411
    %5062 = vmatprep.subr.bf16.mxu0 %v4399
    %5063 = vmatpush1.bf16.msra.mxu0 %v4398
    %5064 = vmatprep.subr.bf16.mxu0 %v4386
    %5065 = vmatpush1.bf16.msra.mxu0 %v4385
    %5066 = vmatprep.subr.bf16.mxu0 %v4581
    %5067 = vmatpush2.bf16.msra.mxu0 %v4580
    %5068 = vmatprep.subr.bf16.mxu0 %v4568
    %5069 = vmatpush2.bf16.msra.mxu0 %v4567
    %5070 = vmatprep.subr.bf16.mxu0 %v4555
    %5071 = vmatpush2.bf16.msra.mxu0 %v4554
    %5072 = vmatprep.subr.bf16.mxu0 %v4542
    %5073 = vmatpush2.bf16.msra.mxu0 %v4541
    %5074 = vmatprep.subr.bf16.mxu0 %v4529
    %5075 = vmatpush2.bf16.msra.mxu0 %v4528
    %5076 = vmatprep.subr.bf16.mxu0 %v4516
    %5077 = vmatpush2.bf16.msra.mxu0 %v4515
    %5078 = vmatprep.subr.bf16.mxu0 %v4503
    %5079 = vmatpush2.bf16.msra.mxu0 %v4502
    %5080 = vmatprep.subr.bf16.mxu0 %v4490
    %5081 = vmatpush2.bf16.msra.mxu0 %v4489
    %5082 = vmatprep.mubr.bf16.mxu0 %v2379
    %5083 = vmatmul.mubr.bf16.gmra.mxu0 %v2378
    %v5084 = vpop.f32.mrf.mxu0
    %v5085 = vadd.f32 %v5044, %v5084
    %v5086 = vpop.f32.mrf.mxu0
    %v5087 = vadd.f32 %v5046, %v5086
    %v5088 = vpop.f32.mrf.mxu0
    %v5089 = vpop.f32.mrf.mxu0
    %5090 = vdwg.mxu0
    %5091 = vmatprep.subr.bf16.mxu0 %v4271
    %5092 = vmatpush1.bf16.msra.mxu0 %v4270
    %5093 = vmatprep.subr.bf16.mxu0 %v4258
    %5094 = vmatpush1.bf16.msra.mxu0 %v4257
    %5095 = vmatprep.subr.bf16.mxu0 %v4245
    %5096 = vmatpush1.bf16.msra.mxu0 %v4244
    %5097 = vmatprep.subr.bf16.mxu0 %v4232
    %5098 = vmatpush1.bf16.msra.mxu0 %v4231
    %5099 = vmatprep.subr.bf16.mxu0 %v4219
    %5100 = vmatpush1.bf16.msra.mxu0 %v4218
    %5101 = vmatprep.subr.bf16.mxu0 %v4206
    %5102 = vmatpush1.bf16.msra.mxu0 %v4205
    %5103 = vmatprep.subr.bf16.mxu0 %v4193
    %5104 = vmatpush1.bf16.msra.mxu0 %v4192
    %5105 = vmatprep.subr.bf16.mxu0 %v4180
    %5106 = vmatpush1.bf16.msra.mxu0 %v4179
    %5107 = vmatprep.subr.bf16.mxu0 %v4375
    %5108 = vmatpush2.bf16.msra.mxu0 %v4374
    %5109 = vmatprep.subr.bf16.mxu0 %v4362
    %5110 = vmatpush2.bf16.msra.mxu0 %v4361
    %5111 = vmatprep.subr.bf16.mxu0 %v4349
    %5112 = vmatpush2.bf16.msra.mxu0 %v4348
    %5113 = vmatprep.subr.bf16.mxu0 %v4336
    %5114 = vmatpush2.bf16.msra.mxu0 %v4335
    %5115 = vmatprep.subr.bf16.mxu0 %v4323
    %5116 = vmatpush2.bf16.msra.mxu0 %v4322
    %5117 = vmatprep.subr.bf16.mxu0 %v4310
    %5118 = vmatpush2.bf16.msra.mxu0 %v4309
    %5119 = vmatprep.subr.bf16.mxu0 %v4297
    %5120 = vmatpush2.bf16.msra.mxu0 %v4296
    %5121 = vmatprep.subr.bf16.mxu0 %v4284
    %5122 = vmatpush2.bf16.msra.mxu0 %v4283
    %5123 = vmatprep.mubr.bf16.mxu0 %v2377
    %5124 = vmatmul.mubr.bf16.gmra.mxu0 %v2376
    %v5125 = vpop.f32.mrf.mxu0
    %v5126 = vadd.f32 %v2843, %v5125
    %v5127 = vpop.f32.mrf.mxu0
    %v5128 = vadd.f32 %v2847, %v5127
    %v5129 = vpop.f32.mrf.mxu0
    %v5130 = vpop.f32.mrf.mxu0
    %5131 = vdwg.mxu0
    %5132 = vmatprep.subr.bf16.mxu0 %v4479
    %5133 = vmatpush1.bf16.msra.mxu0 %v4478
    %5134 = vmatprep.subr.bf16.mxu0 %v4466
    %5135 = vmatpush1.bf16.msra.mxu0 %v4465
    %5136 = vmatprep.subr.bf16.mxu0 %v4453
    %5137 = vmatpush1.bf16.msra.mxu0 %v4452
    %5138 = vmatprep.subr.bf16.mxu0 %v4440
    %5139 = vmatpush1.bf16.msra.mxu0 %v4439
    %5140 = vmatprep.subr.bf16.mxu0 %v4427
    %5141 = vmatpush1.bf16.msra.mxu0 %v4426
    %5142 = vmatprep.subr.bf16.mxu0 %v4414
    %5143 = vmatpush1.bf16.msra.mxu0 %v4413
    %5144 = vmatprep.subr.bf16.mxu0 %v4401
    %5145 = vmatpush1.bf16.msra.mxu0 %v4400
    %5146 = vmatprep.subr.bf16.mxu0 %v4388
    %5147 = vmatpush1.bf16.msra.mxu0 %v4387
    %5148 = vmatprep.subr.bf16.mxu0 %v4583
    %5149 = vmatpush2.bf16.msra.mxu0 %v4582
    %5150 = vmatprep.subr.bf16.mxu0 %v4570
    %5151 = vmatpush2.bf16.msra.mxu0 %v4569
    %5152 = vmatprep.subr.bf16.mxu0 %v4557
    %5153 = vmatpush2.bf16.msra.mxu0 %v4556
    %5154 = vmatprep.subr.bf16.mxu0 %v4544
    %5155 = vmatpush2.bf16.msra.mxu0 %v4543
    %5156 = vmatprep.subr.bf16.mxu0 %v4531
    %5157 = vmatpush2.bf16.msra.mxu0 %v4530
    %5158 = vmatprep.subr.bf16.mxu0 %v4518
    %5159 = vmatpush2.bf16.msra.mxu0 %v4517
    %5160 = vmatprep.subr.bf16.mxu0 %v4505
    %5161 = vmatpush2.bf16.msra.mxu0 %v4504
    %5162 = vmatprep.subr.bf16.mxu0 %v4492
    %5163 = vmatpush2.bf16.msra.mxu0 %v4491
    %5164 = vmatprep.mubr.bf16.mxu0 %v2379
    %5165 = vmatmul.mubr.bf16.gmra.mxu0 %v2378
    %v5166 = vpop.f32.mrf.mxu0
    %v5167 = vadd.f32 %v5126, %v5166
    %v5168 = vpop.f32.mrf.mxu0
    %v5169 = vadd.f32 %v5128, %v5168
    %v5170 = vpop.f32.mrf.mxu0
    %v5171 = vpop.f32.mrf.mxu0
    %5172 = vdwg.mxu0
    %5173 = vmatprep.subr.bf16.mxu0 %v4273
    %5174 = vmatpush1.bf16.msra.mxu0 %v4272
    %5175 = vmatprep.subr.bf16.mxu0 %v4260
    %5176 = vmatpush1.bf16.msra.mxu0 %v4259
    %5177 = vmatprep.subr.bf16.mxu0 %v4247
    %5178 = vmatpush1.bf16.msra.mxu0 %v4246
    %5179 = vmatprep.subr.bf16.mxu0 %v4234
    %5180 = vmatpush1.bf16.msra.mxu0 %v4233
    %5181 = vmatprep.subr.bf16.mxu0 %v4221
    %5182 = vmatpush1.bf16.msra.mxu0 %v4220
    %5183 = vmatprep.subr.bf16.mxu0 %v4208
    %5184 = vmatpush1.bf16.msra.mxu0 %v4207
    %5185 = vmatprep.subr.bf16.mxu0 %v4195
    %5186 = vmatpush1.bf16.msra.mxu0 %v4194
    %5187 = vmatprep.subr.bf16.mxu0 %v4182
    %5188 = vmatpush1.bf16.msra.mxu0 %v4181
    %5189 = vmatprep.subr.bf16.mxu0 %v4377
    %5190 = vmatpush2.bf16.msra.mxu0 %v4376
    %5191 = vmatprep.subr.bf16.mxu0 %v4364
    %5192 = vmatpush2.bf16.msra.mxu0 %v4363
    %5193 = vmatprep.subr.bf16.mxu0 %v4351
    %5194 = vmatpush2.bf16.msra.mxu0 %v4350
    %5195 = vmatprep.subr.bf16.mxu0 %v4338
    %5196 = vmatpush2.bf16.msra.mxu0 %v4337
    %5197 = vmatprep.subr.bf16.mxu0 %v4325
    %5198 = vmatpush2.bf16.msra.mxu0 %v4324
    %5199 = vmatprep.subr.bf16.mxu0 %v4312
    %5200 = vmatpush2.bf16.msra.mxu0 %v4311
    %5201 = vmatprep.subr.bf16.mxu0 %v4299
    %5202 = vmatpush2.bf16.msra.mxu0 %v4298
    %5203 = vmatprep.subr.bf16.mxu0 %v4286
    %5204 = vmatpush2.bf16.msra.mxu0 %v4285
    %5205 = vmatprep.mubr.bf16.mxu0 %v2377
    %5206 = vmatmul.mubr.bf16.gmra.mxu0 %v2376
    %v5207 = vpop.f32.mrf.mxu0
    %v5208 = vadd.f32 %v2851, %v5207
    %v5209 = vpop.f32.mrf.mxu0
    %v5210 = vadd.f32 %v2855, %v5209
    %v5211 = vpop.f32.mrf.mxu0
    %v5212 = vpop.f32.mrf.mxu0
    %5213 = vdwg.mxu0
    %5214 = vmatprep.subr.bf16.mxu0 %v4481
    %5215 = vmatpush1.bf16.msra.mxu0 %v4480
    %5216 = vmatprep.subr.bf16.mxu0 %v4468
    %5217 = vmatpush1.bf16.msra.mxu0 %v4467
    %5218 = vmatprep.subr.bf16.mxu0 %v4455
    %5219 = vmatpush1.bf16.msra.mxu0 %v4454
    %5220 = vmatprep.subr.bf16.mxu0 %v4442
    %5221 = vmatpush1.bf16.msra.mxu0 %v4441
    %5222 = vmatprep.subr.bf16.mxu0 %v4429
    %5223 = vmatpush1.bf16.msra.mxu0 %v4428
    %5224 = vmatprep.subr.bf16.mxu0 %v4416
    %5225 = vmatpush1.bf16.msra.mxu0 %v4415
    %5226 = vmatprep.subr.bf16.mxu0 %v4403
    %5227 = vmatpush1.bf16.msra.mxu0 %v4402
    %5228 = vmatprep.subr.bf16.mxu0 %v4390
    %5229 = vmatpush1.bf16.msra.mxu0 %v4389
    %5230 = vmatprep.subr.bf16.mxu0 %v4585
    %5231 = vmatpush2.bf16.msra.mxu0 %v4584
    %5232 = vmatprep.subr.bf16.mxu0 %v4572
    %5233 = vmatpush2.bf16.msra.mxu0 %v4571
    %5234 = vmatprep.subr.bf16.mxu0 %v4559
    %5235 = vmatpush2.bf16.msra.mxu0 %v4558
    %5236 = vmatprep.subr.bf16.mxu0 %v4546
    %5237 = vmatpush2.bf16.msra.mxu0 %v4545
    %5238 = vmatprep.subr.bf16.mxu0 %v4533
    %5239 = vmatpush2.bf16.msra.mxu0 %v4532
    %5240 = vmatprep.subr.bf16.mxu0 %v4520
    %5241 = vmatpush2.bf16.msra.mxu0 %v4519
    %5242 = vmatprep.subr.bf16.mxu0 %v4507
    %5243 = vmatpush2.bf16.msra.mxu0 %v4506
    %5244 = vmatprep.subr.bf16.mxu0 %v4494
    %5245 = vmatpush2.bf16.msra.mxu0 %v4493
    %5246 = vmatprep.mubr.bf16.mxu0 %v2379
    %5247 = vmatmul.mubr.bf16.gmra.mxu0 %v2378
    %v5248 = vpop.f32.mrf.mxu0
    %v5249 = vadd.f32 %v5208, %v5248
    %v5250 = vpop.f32.mrf.mxu0
    %v5251 = vadd.f32 %v5210, %v5250
    %v5252 = vpop.f32.mrf.mxu0
    %v5253 = vpop.f32.mrf.mxu0
    %5254 = vdwg.mxu0
    %5255 = vmatprep.subr.bf16.mxu0 %v4275
    %5256 = vmatpush1.bf16.msra.mxu0 %v4274
    %5257 = vmatprep.subr.bf16.mxu0 %v4262
    %5258 = vmatpush1.bf16.msra.mxu0 %v4261
    %5259 = vmatprep.subr.bf16.mxu0 %v4249
    %5260 = vmatpush1.bf16.msra.mxu0 %v4248
    %5261 = vmatprep.subr.bf16.mxu0 %v4236
    %5262 = vmatpush1.bf16.msra.mxu0 %v4235
    %5263 = vmatprep.subr.bf16.mxu0 %v4223
    %5264 = vmatpush1.bf16.msra.mxu0 %v4222
    %5265 = vmatprep.subr.bf16.mxu0 %v4210
    %5266 = vmatpush1.bf16.msra.mxu0 %v4209
    %5267 = vmatprep.subr.bf16.mxu0 %v4197
    %5268 = vmatpush1.bf16.msra.mxu0 %v4196
    %5269 = vmatprep.subr.bf16.mxu0 %v4184
    %5270 = vmatpush1.bf16.msra.mxu0 %v4183
    %5271 = vmatprep.subr.bf16.mxu0 %v4379
    %5272 = vmatpush2.bf16.msra.mxu0 %v4378
    %5273 = vmatprep.subr.bf16.mxu0 %v4366
    %5274 = vmatpush2.bf16.msra.mxu0 %v4365
    %5275 = vmatprep.subr.bf16.mxu0 %v4353
    %5276 = vmatpush2.bf16.msra.mxu0 %v4352
    %5277 = vmatprep.subr.bf16.mxu0 %v4340
    %5278 = vmatpush2.bf16.msra.mxu0 %v4339
    %5279 = vmatprep.subr.bf16.mxu0 %v4327
    %5280 = vmatpush2.bf16.msra.mxu0 %v4326
    %5281 = vmatprep.subr.bf16.mxu0 %v4314
    %5282 = vmatpush2.bf16.msra.mxu0 %v4313
    %5283 = vmatprep.subr.bf16.mxu0 %v4301
    %5284 = vmatpush2.bf16.msra.mxu0 %v4300
    %5285 = vmatprep.subr.bf16.mxu0 %v4288
    %5286 = vmatpush2.bf16.msra.mxu0 %v4287
    %5287 = vmatprep.mubr.bf16.mxu0 %v2377
    %5288 = vmatmul.mubr.bf16.gmra.mxu0 %v2376
    %v5289 = vpop.f32.mrf.mxu0
    %v5290 = vadd.f32 %v2859, %v5289
    %v5291 = vpop.f32.mrf.mxu0
    %v5292 = vadd.f32 %v2863, %v5291
    %v5293 = vpop.f32.mrf.mxu0
    %v5294 = vpop.f32.mrf.mxu0
    %5295 = vdwg.mxu0
    %5296 = vmatprep.subr.bf16.mxu0 %v4483
    %5297 = vmatpush1.bf16.msra.mxu0 %v4482
    %5298 = vmatprep.subr.bf16.mxu0 %v4470
    %5299 = vmatpush1.bf16.msra.mxu0 %v4469
    %5300 = vmatprep.subr.bf16.mxu0 %v4457
    %5301 = vmatpush1.bf16.msra.mxu0 %v4456
    %5302 = vmatprep.subr.bf16.mxu0 %v4444
    %5303 = vmatpush1.bf16.msra.mxu0 %v4443
    %5304 = vmatprep.subr.bf16.mxu0 %v4431
    %5305 = vmatpush1.bf16.msra.mxu0 %v4430
    %5306 = vmatprep.subr.bf16.mxu0 %v4418
    %5307 = vmatpush1.bf16.msra.mxu0 %v4417
    %5308 = vmatprep.subr.bf16.mxu0 %v4405
    %5309 = vmatpush1.bf16.msra.mxu0 %v4404
    %5310 = vmatprep.subr.bf16.mxu0 %v4392
    %5311 = vmatpush1.bf16.msra.mxu0 %v4391
    %5312 = vmatprep.subr.bf16.mxu0 %v4587
    %5313 = vmatpush2.bf16.msra.mxu0 %v4586
    %5314 = vmatprep.subr.bf16.mxu0 %v4574
    %5315 = vmatpush2.bf16.msra.mxu0 %v4573
    %5316 = vmatprep.subr.bf16.mxu0 %v4561
    %5317 = vmatpush2.bf16.msra.mxu0 %v4560
    %5318 = vmatprep.subr.bf16.mxu0 %v4548
    %5319 = vmatpush2.bf16.msra.mxu0 %v4547
    %5320 = vmatprep.subr.bf16.mxu0 %v4535
    %5321 = vmatpush2.bf16.msra.mxu0 %v4534
    %5322 = vmatprep.subr.bf16.mxu0 %v4522
    %5323 = vmatpush2.bf16.msra.mxu0 %v4521
    %5324 = vmatprep.subr.bf16.mxu0 %v4509
    %5325 = vmatpush2.bf16.msra.mxu0 %v4508
    %5326 = vmatprep.subr.bf16.mxu0 %v4496
    %5327 = vmatpush2.bf16.msra.mxu0 %v4495
    %5328 = vmatprep.mubr.bf16.mxu0 %v2379
    %5329 = vmatmul.mubr.bf16.gmra.mxu0 %v2378
    %v5330 = vpop.f32.mrf.mxu0
    %v5331 = vadd.f32 %v5290, %v5330
    %v5332 = vpop.f32.mrf.mxu0
    %v5333 = vadd.f32 %v5292, %v5332
    %v5334 = vpop.f32.mrf.mxu0
    %v5335 = vpop.f32.mrf.mxu0
    %5336 = vdwg.mxu0
    %5337 = vmatprep.subr.bf16.mxu0 %v4277
    %5338 = vmatpush1.bf16.msra.mxu0 %v4276
    %5339 = vmatprep.subr.bf16.mxu0 %v4264
    %5340 = vmatpush1.bf16.msra.mxu0 %v4263
    %5341 = vmatprep.subr.bf16.mxu0 %v4251
    %5342 = vmatpush1.bf16.msra.mxu0 %v4250
    %5343 = vmatprep.subr.bf16.mxu0 %v4238
    %5344 = vmatpush1.bf16.msra.mxu0 %v4237
    %5345 = vmatprep.subr.bf16.mxu0 %v4225
    %5346 = vmatpush1.bf16.msra.mxu0 %v4224
    %5347 = vmatprep.subr.bf16.mxu0 %v4212
    %5348 = vmatpush1.bf16.msra.mxu0 %v4211
    %5349 = vmatprep.subr.bf16.mxu0 %v4199
    %5350 = vmatpush1.bf16.msra.mxu0 %v4198
    %5351 = vmatprep.subr.bf16.mxu0 %v4186
    %5352 = vmatpush1.bf16.msra.mxu0 %v4185
    %5353 = vmatprep.subr.bf16.mxu0 %v4381
    %5354 = vmatpush2.bf16.msra.mxu0 %v4380
    %5355 = vmatprep.subr.bf16.mxu0 %v4368
    %5356 = vmatpush2.bf16.msra.mxu0 %v4367
    %5357 = vmatprep.subr.bf16.mxu0 %v4355
    %5358 = vmatpush2.bf16.msra.mxu0 %v4354
    %5359 = vmatprep.subr.bf16.mxu0 %v4342
    %5360 = vmatpush2.bf16.msra.mxu0 %v4341
    %5361 = vmatprep.subr.bf16.mxu0 %v4329
    %5362 = vmatpush2.bf16.msra.mxu0 %v4328
    %5363 = vmatprep.subr.bf16.mxu0 %v4316
    %5364 = vmatpush2.bf16.msra.mxu0 %v4315
    %5365 = vmatprep.subr.bf16.mxu0 %v4303
    %5366 = vmatpush2.bf16.msra.mxu0 %v4302
    %5367 = vmatprep.subr.bf16.mxu0 %v4290
    %5368 = vmatpush2.bf16.msra.mxu0 %v4289
    %5369 = vmatprep.mubr.bf16.mxu0 %v2377
    %5370 = vmatmul.mubr.bf16.gmra.mxu0 %v2376
    %v5371 = vpop.f32.mrf.mxu0
    %v5372 = vadd.f32 %v2867, %v5371
    %v5373 = vpop.f32.mrf.mxu0
    %v5374 = vadd.f32 %v2871, %v5373
    %v5375 = vpop.f32.mrf.mxu0
    %v5376 = vpop.f32.mrf.mxu0
    %5377 = vdwg.mxu0
    %5378 = vmatprep.subr.bf16.mxu0 %v4485
    %5379 = vmatpush1.bf16.msra.mxu0 %v4484
    %5380 = vmatprep.subr.bf16.mxu0 %v4472
    %5381 = vmatpush1.bf16.msra.mxu0 %v4471
    %5382 = vmatprep.subr.bf16.mxu0 %v4459
    %5383 = vmatpush1.bf16.msra.mxu0 %v4458
    %5384 = vmatprep.subr.bf16.mxu0 %v4446
    %5385 = vmatpush1.bf16.msra.mxu0 %v4445
    %5386 = vmatprep.subr.bf16.mxu0 %v4433
    %5387 = vmatpush1.bf16.msra.mxu0 %v4432
    %5388 = vmatprep.subr.bf16.mxu0 %v4420
    %5389 = vmatpush1.bf16.msra.mxu0 %v4419
    %5390 = vmatprep.subr.bf16.mxu0 %v4407
    %5391 = vmatpush1.bf16.msra.mxu0 %v4406
    %5392 = vmatprep.subr.bf16.mxu0 %v4394
    %5393 = vmatpush1.bf16.msra.mxu0 %v4393
    %5394 = vmatprep.subr.bf16.mxu0 %v4589
    %5395 = vmatpush2.bf16.msra.mxu0 %v4588
    %5396 = vmatprep.subr.bf16.mxu0 %v4576
    %5397 = vmatpush2.bf16.msra.mxu0 %v4575
    %5398 = vmatprep.subr.bf16.mxu0 %v4563
    %5399 = vmatpush2.bf16.msra.mxu0 %v4562
    %5400 = vmatprep.subr.bf16.mxu0 %v4550
    %5401 = vmatpush2.bf16.msra.mxu0 %v4549
    %5402 = vmatprep.subr.bf16.mxu0 %v4537
    %5403 = vmatpush2.bf16.msra.mxu0 %v4536
    %5404 = vmatprep.subr.bf16.mxu0 %v4524
    %5405 = vmatpush2.bf16.msra.mxu0 %v4523
    %5406 = vmatprep.subr.bf16.mxu0 %v4511
    %5407 = vmatpush2.bf16.msra.mxu0 %v4510
    %5408 = vmatprep.subr.bf16.mxu0 %v4498
    %5409 = vmatpush2.bf16.msra.mxu0 %v4497
    %5410 = vmatprep.mubr.bf16.mxu0 %v2379
    %5411 = vmatmul.mubr.bf16.gmra.mxu0 %v2378
    %v5412 = vpop.f32.mrf.mxu0
    %v5413 = vadd.f32 %v5372, %v5412
    %v5414 = vpop.f32.mrf.mxu0
    %v5415 = vadd.f32 %v5374, %v5414
    %v5416 = vpop.f32.mrf.mxu0
    %v5417 = vpop.f32.mrf.mxu0
    %5418 = vdwg.mxu0
    %5419 = vmatprep.subr.bf16.mxu0 %v4279
    %5420 = vmatpush1.bf16.msra.mxu0 %v4278
    %5421 = vmatprep.subr.bf16.mxu0 %v4266
    %5422 = vmatpush1.bf16.msra.mxu0 %v4265
    %5423 = vmatprep.subr.bf16.mxu0 %v4253
    %5424 = vmatpush1.bf16.msra.mxu0 %v4252
    %5425 = vmatprep.subr.bf16.mxu0 %v4240
    %5426 = vmatpush1.bf16.msra.mxu0 %v4239
    %5427 = vmatprep.subr.bf16.mxu0 %v4227
    %5428 = vmatpush1.bf16.msra.mxu0 %v4226
    %5429 = vmatprep.subr.bf16.mxu0 %v4214
    %5430 = vmatpush1.bf16.msra.mxu0 %v4213
    %5431 = vmatprep.subr.bf16.mxu0 %v4201
    %5432 = vmatpush1.bf16.msra.mxu0 %v4200
    %5433 = vmatprep.subr.bf16.mxu0 %v4188
    %5434 = vmatpush1.bf16.msra.mxu0 %v4187
    %5435 = vmatprep.subr.bf16.mxu0 %v4383
    %5436 = vmatpush2.bf16.msra.mxu0 %v4382
    %5437 = vmatprep.subr.bf16.mxu0 %v4370
    %5438 = vmatpush2.bf16.msra.mxu0 %v4369
    %5439 = vmatprep.subr.bf16.mxu0 %v4357
    %5440 = vmatpush2.bf16.msra.mxu0 %v4356
    %5441 = vmatprep.subr.bf16.mxu0 %v4344
    %5442 = vmatpush2.bf16.msra.mxu0 %v4343
    %5443 = vmatprep.subr.bf16.mxu0 %v4331
    %5444 = vmatpush2.bf16.msra.mxu0 %v4330
    %5445 = vmatprep.subr.bf16.mxu0 %v4318
    %5446 = vmatpush2.bf16.msra.mxu0 %v4317
    %5447 = vmatprep.subr.bf16.mxu0 %v4305
    %5448 = vmatpush2.bf16.msra.mxu0 %v4304
    %5449 = vmatprep.subr.bf16.mxu0 %v4292
    %5450 = vmatpush2.bf16.msra.mxu0 %v4291
    %5451 = vmatprep.mubr.bf16.mxu0 %v2377
    %5452 = vmatmul.mubr.bf16.gmra.mxu0 %v2376
    %v5453 = vpop.f32.mrf.mxu0
    %v5454 = vadd.f32 %v2875, %v5453
    %v5455 = vpop.f32.mrf.mxu0
    %v5456 = vadd.f32 %v2879, %v5455
    %v5457 = vpop.f32.mrf.mxu0
    %v5458 = vpop.f32.mrf.mxu0
    %5459 = vdwg.mxu0
    %5460 = vmatprep.subr.bf16.mxu0 %v4487
    %5461 = vmatpush1.bf16.msra.mxu0 %v4486
    %5462 = vmatprep.subr.bf16.mxu0 %v4474
    %5463 = vmatpush1.bf16.msra.mxu0 %v4473
    %5464 = vmatprep.subr.bf16.mxu0 %v4461
    %5465 = vmatpush1.bf16.msra.mxu0 %v4460
    %5466 = vmatprep.subr.bf16.mxu0 %v4448
    %5467 = vmatpush1.bf16.msra.mxu0 %v4447
    %5468 = vmatprep.subr.bf16.mxu0 %v4435
    %5469 = vmatpush1.bf16.msra.mxu0 %v4434
    %5470 = vmatprep.subr.bf16.mxu0 %v4422
    %5471 = vmatpush1.bf16.msra.mxu0 %v4421
    %5472 = vmatprep.subr.bf16.mxu0 %v4409
    %5473 = vmatpush1.bf16.msra.mxu0 %v4408
    %5474 = vmatprep.subr.bf16.mxu0 %v4396
    %5475 = vmatpush1.bf16.msra.mxu0 %v4395
    %5476 = vmatprep.subr.bf16.mxu0 %v4591
    %5477 = vmatpush2.bf16.msra.mxu0 %v4590
    %5478 = vmatprep.subr.bf16.mxu0 %v4578
    %5479 = vmatpush2.bf16.msra.mxu0 %v4577
    %5480 = vmatprep.subr.bf16.mxu0 %v4565
    %5481 = vmatpush2.bf16.msra.mxu0 %v4564
    %5482 = vmatprep.subr.bf16.mxu0 %v4552
    %5483 = vmatpush2.bf16.msra.mxu0 %v4551
    %5484 = vmatprep.subr.bf16.mxu0 %v4539
    %5485 = vmatpush2.bf16.msra.mxu0 %v4538
    %5486 = vmatprep.subr.bf16.mxu0 %v4526
    %5487 = vmatpush2.bf16.msra.mxu0 %v4525
    %5488 = vmatprep.subr.bf16.mxu0 %v4513
    %5489 = vmatpush2.bf16.msra.mxu0 %v4512
    %5490 = vmatprep.subr.bf16.mxu0 %v4500
    %5491 = vmatpush2.bf16.msra.mxu0 %v4499
    %5492 = vmatprep.mubr.bf16.mxu0 %v2379
    %5493 = vmatmul.mubr.bf16.gmra.mxu0 %v2378
    %v5494 = vpop.f32.mrf.mxu0
    %v5495 = vadd.f32 %v5454, %v5494
    %v5496 = vpop.f32.mrf.mxu0
    %v5497 = vadd.f32 %v5456, %v5496
    %v5498 = vpop.f32.mrf.mxu0
    %v5499 = vpop.f32.mrf.mxu0
    %5500 = vdwg.mxu0
    %5501 = vmatprep.subr.bf16.mxu0 0
    %5502 = vmatpush1.bf16.msra.mxu0 %v4280
    %5503 = vmatprep.subr.bf16.mxu0 0
    %5504 = vmatpush1.bf16.msra.mxu0 %v4267
    %5505 = vmatprep.subr.bf16.mxu0 0
    %5506 = vmatpush1.bf16.msra.mxu0 %v4254
    %5507 = vmatprep.subr.bf16.mxu0 0
    %5508 = vmatpush1.bf16.msra.mxu0 %v4241
    %5509 = vmatprep.subr.bf16.mxu0 0
    %5510 = vmatpush1.bf16.msra.mxu0 %v4228
    %5511 = vmatprep.subr.bf16.mxu0 0
    %5512 = vmatpush1.bf16.msra.mxu0 %v4215
    %5513 = vmatprep.subr.bf16.mxu0 0
    %5514 = vmatpush1.bf16.msra.mxu0 %v4202
    %5515 = vmatprep.subr.bf16.mxu0 0
    %5516 = vmatpush1.bf16.msra.mxu0 %v4189
    %5517 = vmatprep.subr.bf16.mxu0 0
    %5518 = vmatpush2.bf16.msra.mxu0 %v4384
    %5519 = vmatprep.subr.bf16.mxu0 0
    %5520 = vmatpush2.bf16.msra.mxu0 %v4371
    %5521 = vmatprep.subr.bf16.mxu0 0
    %5522 = vmatpush2.bf16.msra.mxu0 %v4358
    %5523 = vmatprep.subr.bf16.mxu0 0
    %5524 = vmatpush2.bf16.msra.mxu0 %v4345
    %5525 = vmatprep.subr.bf16.mxu0 0
    %5526 = vmatpush2.bf16.msra.mxu0 %v4332
    %5527 = vmatprep.subr.bf16.mxu0 0
    %5528 = vmatpush2.bf16.msra.mxu0 %v4319
    %5529 = vmatprep.subr.bf16.mxu0 0
    %5530 = vmatpush2.bf16.msra.mxu0 %v4306
    %5531 = vmatprep.subr.bf16.mxu0 0
    %5532 = vmatpush2.bf16.msra.mxu0 %v4293
    %5533 = vmatprep.mubr.bf16.mxu0 %v2377
    %5534 = vmatmul.mubr.bf16.gmra.mxu0 %v2376
    %v5535 = vpop.f32.mrf.mxu0
    %v5536 = vadd.f32 %v2883, %v5535
    %v5537 = vpop.f32.mrf.mxu0
    %v5538 = vpop.f32.mrf.mxu0
    %v5539 = vpop.f32.mrf.mxu0
    %5540 = vdwg.mxu0
    %5541 = vmatprep.subr.bf16.mxu0 0
    %5542 = vmatpush1.bf16.msra.mxu0 %v4488
    %5543 = vmatprep.subr.bf16.mxu0 0
    %5544 = vmatpush1.bf16.msra.mxu0 %v4475
    %5545 = vmatprep.subr.bf16.mxu0 0
    %5546 = vmatpush1.bf16.msra.mxu0 %v4462
    %5547 = vmatprep.subr.bf16.mxu0 0
    %5548 = vmatpush1.bf16.msra.mxu0 %v4449
    %5549 = vmatprep.subr.bf16.mxu0 0
    %5550 = vmatpush1.bf16.msra.mxu0 %v4436
    %5551 = vmatprep.subr.bf16.mxu0 0
    %5552 = vmatpush1.bf16.msra.mxu0 %v4423
    %5553 = vmatprep.subr.bf16.mxu0 0
    %5554 = vmatpush1.bf16.msra.mxu0 %v4410
    %5555 = vmatprep.subr.bf16.mxu0 0
    %5556 = vmatpush1.bf16.msra.mxu0 %v4397
    %5557 = vmatprep.subr.bf16.mxu0 0
    %5558 = vmatpush2.bf16.msra.mxu0 %v4592
    %5559 = vmatprep.subr.bf16.mxu0 0
    %5560 = vmatpush2.bf16.msra.mxu0 %v4579
    %5561 = vmatprep.subr.bf16.mxu0 0
    %5562 = vmatpush2.bf16.msra.mxu0 %v4566
    %5563 = vmatprep.subr.bf16.mxu0 0
    %5564 = vmatpush2.bf16.msra.mxu0 %v4553
    %5565 = vmatprep.subr.bf16.mxu0 0
    %5566 = vmatpush2.bf16.msra.mxu0 %v4540
    %5567 = vmatprep.subr.bf16.mxu0 0
    %5568 = vmatpush2.bf16.msra.mxu0 %v4527
    %5569 = vmatprep.subr.bf16.mxu0 0
    %5570 = vmatpush2.bf16.msra.mxu0 %v4514
    %5571 = vmatprep.subr.bf16.mxu0 0
    %5572 = vmatpush2.bf16.msra.mxu0 %v4501
    %5573 = vmatprep.mubr.bf16.mxu0 %v2379
    %5574 = vmatmul.mubr.bf16.gmra.mxu0 %v2378
    %v5575 = vpop.f32.mrf.mxu0
    %v5576 = vadd.f32 %v5536, %v5575
    %v5577 = vpop.f32.mrf.mxu0
    %v5578 = vpop.f32.mrf.mxu0
    %v5579 = vpop.f32.mrf.mxu0
    %5580 = vdwg.mxu0
    %v5581 = vsub.f32 0.0, %v5085
    %v5582 = vsub.f32 0.0, %v5087
    %v5583 = vsub.f32 0.0, %v5167
    %v5584 = vsub.f32 0.0, %v5169
    %v5585 = vsub.f32 0.0, %v5249
    %v5586 = vsub.f32 0.0, %v5251
    %v5587 = vsub.f32 0.0, %v5331
    %v5588 = vsub.f32 0.0, %v5333
    %v5589 = vsub.f32 0.0, %v5413
    %v5590 = vsub.f32 0.0, %v5415
    %v5591 = vsub.f32 0.0, %v5495
    %v5592 = vsub.f32 0.0, %v5497
    %v5593 = vsub.f32 0.0, %v5576
    %v5594 = vmul.f32 %v5581, 1.442695
    %v5595 = vpow.pop %v5594
    %v5596 = vmul.f32 %v5582, 1.442695
    %v5597 = vpow.pop %v5596
    %v5598 = vmul.f32 %v5583, 1.442695
    %v5599 = vpow.pop %v5598
    %v5600 = vmul.f32 %v5584, 1.442695
    %v5601 = vpow.pop %v5600
    %v5602 = vmul.f32 %v5585, 1.442695
    %v5603 = vpow.pop %v5602
    %v5604 = vmul.f32 %v5586, 1.442695
    %v5605 = vpow.pop %v5604
    %v5606 = vmul.f32 %v5587, 1.442695
    %v5607 = vpow.pop %v5606
    %v5608 = vmul.f32 %v5588, 1.442695
    %v5609 = vpow.pop %v5608
    %v5610 = vmul.f32 %v5589, 1.442695
    %v5611 = vpow.pop %v5610
    %v5612 = vmul.f32 %v5590, 1.442695
    %v5613 = vpow.pop %v5612
    %v5614 = vmul.f32 %v5591, 1.442695
    %v5615 = vpow.pop %v5614
    %v5616 = vmul.f32 %v5592, 1.442695
    %v5617 = vpow.pop %v5616
    %v5618 = vmul.f32 %v5593, 1.442695
    %v5619 = vpow.pop %v5618
    %v5620 = vadd.f32 %v5595, 1.0
    %v5621 = vadd.f32 %v5597, 1.0
    %v5622 = vadd.f32 %v5599, 1.0
    %v5623 = vadd.f32 %v5601, 1.0
    %v5624 = vadd.f32 %v5603, 1.0
    %v5625 = vadd.f32 %v5605, 1.0
    %v5626 = vadd.f32 %v5607, 1.0
    %v5627 = vadd.f32 %v5609, 1.0
    %v5628 = vadd.f32 %v5611, 1.0
    %v5629 = vadd.f32 %v5613, 1.0
    %v5630 = vadd.f32 %v5615, 1.0
    %v5631 = vadd.f32 %v5617, 1.0
    %v5632 = vadd.f32 %v5619, 1.0
    %v5633 = vrcp.pop %v5620
    %v5634 = vrcp.pop %v5621
    %v5635 = vrcp.pop %v5622
    %v5636 = vrcp.pop %v5623
    %v5637 = vrcp.pop %v5624
    %v5638 = vrcp.pop %v5625
    %v5639 = vrcp.pop %v5626
    %v5640 = vrcp.pop %v5627
    %v5641 = vrcp.pop %v5628
    %v5642 = vrcp.pop %v5629
    %v5643 = vrcp.pop %v5630
    %v5644 = vrcp.pop %v5631
    %v5645 = vrcp.pop %v5632
    %5646 = vst [vmem:[#allocation2] sm:$0xff] %v5633
    %5647 = vst [vmem:[#allocation2 + $0x8] sm:$0xff] %v5634
    %5648 = vst [vmem:[#allocation2 + $0x10] sm:$0xff] %v5635
    %5649 = vst [vmem:[#allocation2 + $0x18] sm:$0xff] %v5636
    %5650 = vst [vmem:[#allocation2 + $0x20] sm:$0xff] %v5637
    %5651 = vst [vmem:[#allocation2 + $0x28] sm:$0xff] %v5638
    %5652 = vst [vmem:[#allocation2 + $0x30] sm:$0xff] %v5639
    %5653 = vst [vmem:[#allocation2 + $0x38] sm:$0xff] %v5640
    %5654 = vst [vmem:[#allocation2 + $0x40] sm:$0xff] %v5641
    %5655 = vst [vmem:[#allocation2 + $0x48] sm:$0xff] %v5642
    %5656 = vst [vmem:[#allocation2 + $0x50] sm:$0xff] %v5643
    %5657 = vst [vmem:[#allocation2 + $0x58] sm:$0xff] %v5644
    %vm5658 = vcmask 261120
    %5659 = vst.msk [vmem:[#allocation2 + $0x60] sm:$0xff] %vm5658, %v5645
    %5660 = vst [vmem:[%s11] sm:$0xff] %v2063
    %5661 = vst [vmem:[%s11 + $0x8] sm:$0xff] %v2065
    // Predicated region
    $region42: #{rvae_forward.1} parent=1 // pred_check
      _
    $region43: #{rvae_forward.1} parent=1 // pred_check_branch
      %5663 = sbr.rel (0) target = $region45
    $region44: #{rvae_forward.1} parent=1 // pred_region
      %s5665 = ssub.s32 1664, 1664
      %5666 = vsyncadd [#allocation3], %s5665
      %s5668 = sshll.u32 [#allocation2], 4
      %s5669 = int_to_ptr.vmem [resolvable:$true] %s5668
      %5671 = dma.vmem_to_hbm [thread:$0]  %s5669, 1664, %s10, [#allocation3]
    $region45: #{rvae_forward.1} parent=1 // pred_fallthru
      _
    // Predicated region
    $region46: #{rvae_forward.1} parent=1 // pred_check
      _
    $region47: #{rvae_forward.1} parent=1 // pred_check_branch
      %5673 = sbr.rel (0) target = $region49
    $region48: #{rvae_forward.1} parent=1 // pred_region
      _
    $region49: #{rvae_forward.1} parent=1 // pred_fallthru
      _
    // Predicated region
    $region50: #{rvae_forward.1} parent=1 // pred_check
      _
    $region51: #{rvae_forward.1} parent=1 // pred_check_branch
      %5675 = sbr.rel (0) target = $region53
    $region52: #{rvae_forward.1} parent=1 // pred_region
      %5676 = dma.done [#allocation3], 1664
    $region53: #{rvae_forward.1} parent=1 // pred_fallthru
      _
    // Predicated region
    $region54: #{rvae_forward.1} parent=1 // pred_check
      _
    $region55: #{rvae_forward.1} parent=1 // pred_check_branch
      %5678 = sbr.rel (0) target = $region57
    $region56: #{rvae_forward.1} parent=1 // pred_region
      _
    $region57: #{rvae_forward.1} parent=1 // pred_fallthru
      _
    %5679 = vsyncpa [#allocation3], 1

</llo_original>
